<compile_context>
chip_gen: v5e
topology: v5e:2x2
jax: 0.10.0
libtpu: 0.0.40
codegen_flags: <defaults>
</compile_context>

<pallas_src>
import functools
import math

import jax
import jax.numpy as jnp
from jax import lax
from jax.experimental import pallas as pl
from jax.experimental.pallas import tpu as pltpu

LN_EPS = 1e-5               # PyTorch nn.LayerNorm default.
MASK_NEG = -1e30            # finite "-inf" for the causal mask (avoids inf-inf NaNs).
MATMUL_DTYPE = jnp.bfloat16  # MXU operand dtype; accumulation stays f32.

_LAYER_PARAMS = ("wq", "bq", "wk", "bk", "wv", "bv", "wp", "bp",
                 "ln1_g", "ln1_b", "w1", "bf1", "w2", "bf2", "ln2_g", "ln2_b")


# ----------------------------- in-kernel helpers ----------------------------

def _mm(a, b):
    return jnp.dot(a.astype(MATMUL_DTYPE), b.astype(MATMUL_DTYPE),
                   preferred_element_type=jnp.float32)


def _layer_norm(x, g, b):
    mu = jnp.mean(x, axis=-1, keepdims=True)
    var = jnp.mean(jnp.square(x - mu), axis=-1, keepdims=True)
    return (x - mu) * lax.rsqrt(var + LN_EPS) * g + b


def _gelu(x):
    # TODO(synk): PyTorch nn.GELU() defaults to exact erf GELU; the tanh
    # approximation is used for robust Mosaic lowering (difference ~1e-3).
    c = math.sqrt(2.0 / math.pi)
    return 0.5 * x * (1.0 + jnp.tanh(c * (x + 0.044715 * x * x * x)))


# -------------------------- fused embedding kernel ---------------------------

def _embed_kernel(rtg_ref, st_ref, ac_ref, te_ref,
                  wr_ref, br_ref, ws_ref, bs_ref, wa_ref, ba_ref,
                  g_ref, b_ref, o_ref):
    te = te_ref[0]                                  # (T, h) f32
    g, b = g_ref[...], b_ref[...]
    # rtg embedding has in_features == 1 -> VPU broadcast multiply, no matmul.
    rtg_e = rtg_ref[0] * wr_ref[...] + br_ref[...] + te
    st_e = _mm(st_ref[0], ws_ref[...]) + bs_ref[...] + te
    # NOTE: the reference PyTorch forward adds time_emb to act_emb a SECOND
    # time ("act_emb = act_emb + time_emb"); reproduced faithfully here.
    ac_e = _mm(ac_ref[0], wa_ref[...]) + ba_ref[...] + te + te
    # embed_ln is per-token, so it commutes with the token ordering.
    # Type-major output planes: 0 = rtg tokens, 1 = state tokens, 2 = act.
    o_ref[0, 0] = _layer_norm(rtg_e, g, b)
    o_ref[0, 1] = _layer_norm(st_e, g, b)
    o_ref[0, 2] = _layer_norm(ac_e, g, b)


def fused_embed(rtg, state, act, time_emb, params):
    """rtg/state/act/time_emb: (B, T, *). Returns (B, 3, T, h) type-major."""
    B, T, h_dim = time_emb.shape
    ws = (params["embed_rtg_w"], params["embed_rtg_b"],
          params["embed_state_w"], params["embed_state_b"],
          params["embed_act_w"], params["embed_act_b"],
          params["embed_ln_g"], params["embed_ln_b"])

    def tok_spec(k):
        return pl.BlockSpec((1, T, k), lambda b: (b, 0, 0))

    def const_spec(p):
        return pl.BlockSpec(p.shape, lambda b, _nd=p.ndim: (0,) * _nd)

    return pl.pallas_call(
        _embed_kernel,
        out_shape=jax.ShapeDtypeStruct((B, 3, T, h_dim), jnp.float32),
        grid=(B,),
        in_specs=[tok_spec(rtg.shape[-1]), tok_spec(state.shape[-1]),
                  tok_spec(act.shape[-1]), tok_spec(h_dim)]
                 + [const_spec(p) for p in ws],
        out_specs=pl.BlockSpec((1, 3, T, h_dim), lambda b: (b, 0, 0, 0)),
        compiler_params=pltpu.CompilerParams(dimension_semantics=("parallel",)),
    )(rtg, state, act, time_emb, *ws)


# ----------------------- fused multi-layer transformer -----------------------

def _transformer_kernel(x_ref, bias_ref,
                        wq_ref, bq_ref, wk_ref, bk_ref, wv_ref, bv_ref,
                        wp_ref, bp_ref, g1_ref, be1_ref,
                        w1_ref, bf1_ref, w2_ref, bf2_ref, g2_ref, be2_ref,
                        o_ref, *, n_heads, batch, seq):
    # The hidden state lives in the VMEM-resident output block across the whole
    # layer axis (axis 1 of the grid); initialize it from the embeddings at
    # layer 0 of each batch tile.
    @pl.when(pl.program_id(1) == 0)
    def _():
        o_ref[...] = x_ref[...]

    x2 = o_ref[...]                               # (batch*seq, C) residual, f32
    BS, C = x2.shape
    D = C // n_heads
    scale = 1.0 / math.sqrt(D)

    wq, wk, wv, wp = wq_ref[0], wk_ref[0], wv_ref[0], wp_ref[0]
    bq, bk, bv, bp = bq_ref[0], bk_ref[0], bv_ref[0], bp_ref[0]

    # QKV projections over all rows of the batch tile at once (one MXU matmul
    # each, bf16 operands, f32 accumulation).
    q = _mm(x2, wq) + bq
    k = _mm(x2, wk) + bk
    v = _mm(x2, wv) + bv

    q3 = q.reshape(batch, seq, C)
    k3 = k.reshape(batch, seq, C)
    v3 = v.reshape(batch, seq, C)
    bias = bias_ref[...]                          # (S, S) additive causal mask

    # Per-head attention, batched over the batch dim with one 3-D einsum per
    # head (single batch dim -> clean Mosaic dot_general lowering).
    # TODO(synk): fold heads into a single 'bqhd,bkhd->bhqk' einsum once Mosaic
    # lowers dot_general with two batch dims / 4-D transposes; the static
    # Python unroll over the small head count is the safe formulation today.
    heads = []
    for h in range(n_heads):
        sl = slice(h * D, (h + 1) * D)
        qh, kh, vh = q3[..., sl], k3[..., sl], v3[..., sl]       # (B, S, D)
        s = jnp.einsum("bqd,bkd->bqk",
                       qh.astype(MATMUL_DTYPE), kh.astype(MATMUL_DTYPE),
                       preferred_element_type=jnp.float32) * scale + bias
        s = s - jnp.max(s, axis=-1, keepdims=True)               # f32 softmax
        p = jnp.exp(s)
        p = p * pl.reciprocal(jnp.sum(p, axis=-1, keepdims=True), approx=True)
        ah = jnp.einsum("bqk,bkd->bqd",
                        p.astype(MATMUL_DTYPE), vh.astype(MATMUL_DTYPE),
                        preferred_element_type=jnp.float32)      # (B, S, D)
        heads.append(ah.reshape(BS, D))
    # Concatenate heads and run ONE (rows, C) @ (C, C) output projection.
    attn = _mm(jnp.concatenate(heads, axis=-1), wp) + bp

    # Post-norm residual structure, exactly as in AttentionBlock.forward.
    x1 = _layer_norm(x2 + attn, g1_ref[0], be1_ref[0])
    hid = _gelu(_mm(x1, w1_ref[0]) + bf1_ref[0])
    ffn = _mm(hid, w2_ref[0]) + bf2_ref[0]
    o_ref[...] = _layer_norm(x1 + ffn, g2_ref[0], be2_ref[0])


def transformer(h, bias, layers, *, n_heads, batch, seq):
    """h: (B*S, C); bias: (S, S); layers: per-layer params stacked on axis 0."""
    BS, C = h.shape
    L = layers["wq"].shape[0]
    ws = [layers[name] for name in _LAYER_PARAMS]

    # Batch-parallel leading grid axis: engages v7x's second TensorCore (and is
    # a plain sequential loop on single-core v5e/v6e). Each batch tile carries
    # its own VMEM-resident residual across the (inner, 'arbitrary') layer axis.
    n_btiles = 1
    if batch % 2 == 0 and ((batch // 2) * seq) % 8 == 0:
        n_btiles = 2
    bpt = batch // n_btiles
    rows = bpt * seq

    def layer_spec(p):
        return pl.BlockSpec((1,) + p.shape[1:],
                            lambda b, l, _n=p.ndim - 1: (l,) + (0,) * _n)

    # Advisory cost estimate (helps XLA scheduling around the custom call).
    mm_flops = 2 * BS * C * C * 4 + 2 * BS * C * (4 * C) * 2      # qkv+proj, ffn
    attn_flops = 4 * batch * seq * seq * C                         # scores + PV
    flops = L * (mm_flops + attn_flops)
    transc = L * (batch * n_heads * seq * seq + BS * 4 * C
                  + batch * n_heads * seq)
    bytes_accessed = (n_btiles * sum(int(p.size) * p.dtype.itemsize for p in ws)
                      + 2 * BS * C * 4 + L * seq * seq * 4)

    # VMEM budgeting: stacked bf16 layer weights are streamed per layer
    # (double-buffered) while the residual block stays resident. Raise the
    # scoped VMEM limit only when the estimate exceeds the 32 MiB default.
    per_layer_bytes = sum(int(p.size) * p.dtype.itemsize for p in ws) // max(L, 1)
    block_bytes = rows * C * 4
    vmem_need = (2 * per_layer_bytes               # double-buffered layer weights
                 + 3 * block_bytes                 # x (2 bufs) + resident output
                 + 2 * seq * seq * 4               # causal bias
                 + 8 * block_bytes                 # q/k/v/ffn-hidden temporaries
                 + bpt * n_heads * seq * seq * 4)  # score tiles
    cp_kwargs = dict(dimension_semantics=("parallel", "arbitrary"))
    if vmem_need > (32 << 20):
        # TODO(synk): on v7x (64 MiB physical VMEM) additionally tile w1/w2
        # over the 4C hidden dim (or pipeline_mode=pl.Buffered(1) for them) if
        # the estimate exceeds ~56 MiB at very large h_dim.
        cp_kwargs["vmem_limit_bytes"] = min(int(vmem_need * 1.25), 96 << 20)

    return pl.pallas_call(
        functools.partial(_transformer_kernel, n_heads=n_heads,
                          batch=bpt, seq=seq),
        out_shape=jax.ShapeDtypeStruct((BS, C), jnp.float32),
        grid=(n_btiles, L),
        in_specs=[pl.BlockSpec((rows, C), lambda b, l: (b, 0)),
                  pl.BlockSpec((seq, seq), lambda b, l: (0, 0))]
                 + [layer_spec(p) for p in ws],
        out_specs=pl.BlockSpec((rows, C), lambda b, l: (b, 0)),
        compiler_params=pltpu.CompilerParams(**cp_kwargs),
        cost_estimate=pl.CostEstimate(flops=flops, transcendentals=transc,
                                      bytes_accessed=bytes_accessed),
    )(h, bias, *ws)


# --------------------------- fused prediction heads --------------------------

def _heads_kernel(ha_ref, hs_ref, wrs_ref, brs_ref, wa_ref, ba_ref,
                  rs_ref, act_ref):
    # pred_rtg and pred_state share the action-token input; their weights are
    # concatenated along out-features and zero-padded to a 128-lane-dense
    # output so the stores are unmasked vst.
    rs_ref[0] = _mm(ha_ref[0, 0], wrs_ref[...]) + brs_ref[...]
    act_ref[0] = jnp.tanh(_mm(hs_ref[0, 0], wa_ref[...]) + ba_ref[...])


def fused_heads(h4, params):
    """h4: (B, 3, T, C) residual; token planes are selected by the index_map."""
    B, _, T, C = h4.shape
    wrs, brs = params["pred_rs_w"], params["pred_rs_b"]       # (C, P), (1, P)
    wa, ba = params["pred_act_wp"], params["pred_act_bp"]     # (C, P), (1, P)
    P = wrs.shape[1]

    def tok_plane_spec(tok):
        return pl.BlockSpec((1, 1, T, C), lambda b, _t=tok: (b, _t, 0, 0))

    def const_spec(p):
        return pl.BlockSpec(p.shape, lambda b, _nd=p.ndim: (0,) * _nd)

    return pl.pallas_call(
        _heads_kernel,
        out_shape=(jax.ShapeDtypeStruct((B, T, P), jnp.float32),
                   jax.ShapeDtypeStruct((B, T, P), jnp.float32)),
        grid=(B,),
        in_specs=[tok_plane_spec(2), tok_plane_spec(1),       # act / state tokens
                  const_spec(wrs), const_spec(brs),
                  const_spec(wa), const_spec(ba)],
        out_specs=(pl.BlockSpec((1, T, P), lambda b: (b, 0, 0)),
                   pl.BlockSpec((1, T, P), lambda b: (b, 0, 0))),
        compiler_params=pltpu.CompilerParams(dimension_semantics=("parallel",)),
    )(h4, h4, wrs, brs, wa, ba)


# ------------------------------ parameter init -------------------------------

def init_params(key, state_dim, act_dim, n_block, h_dim, max_timestep):
    def lin(k, fan_in, fan_out, w_dtype=MATMUL_DTYPE):
        k1, k2 = jax.random.split(k)
        w = (jax.random.normal(k1, (fan_in, fan_out), jnp.float32) * 0.02)
        b = jax.random.normal(k2, (1, fan_out), jnp.float32) * 0.02
        return w.astype(w_dtype), b

    keys = jax.random.split(key, 8 + n_block)
    p = {}
    p["embed_timestep"] = jax.random.normal(
        keys[0], (max_timestep, h_dim), jnp.float32) * 0.02
    # rtg embedding (in_features == 1) stays f32: it's a VPU broadcast multiply.
    p["embed_rtg_w"], p["embed_rtg_b"] = lin(keys[1], 1, h_dim, jnp.float32)
    p["embed_state_w"], p["embed_state_b"] = lin(keys[2], state_dim, h_dim)
    p["embed_act_w"], p["embed_act_b"] = lin(keys[3], act_dim, h_dim)
    p["embed_ln_g"] = jnp.ones((1, h_dim), jnp.float32)
    p["embed_ln_b"] = jnp.zeros((1, h_dim), jnp.float32)

    # Prediction heads: pred_rtg/pred_state concatenated along out-features and
    # zero-padded to a 128-lane-dense width; done ONCE here (hoisted out of the
    # jitted forward).
    w_rtg, b_rtg = lin(keys[4], h_dim, 1, jnp.float32)
    w_st, b_st = lin(keys[5], h_dim, state_dim, jnp.float32)
    w_act, b_act = lin(keys[6], h_dim, act_dim, jnp.float32)
    n_rs = 1 + state_dim
    head_pad = max(128, ((max(n_rs, act_dim) + 127) // 128) * 128)
    wrs = jnp.zeros((h_dim, head_pad), jnp.float32)
    wrs = wrs.at[:, :1].set(w_rtg).at[:, 1:n_rs].set(w_st)
    brs = jnp.zeros((1, head_pad), jnp.float32)
    brs = brs.at[:, :1].set(b_rtg).at[:, 1:n_rs].set(b_st)
    wap = jnp.zeros((h_dim, head_pad), jnp.float32).at[:, :act_dim].set(w_act)
    bap = jnp.zeros((1, head_pad), jnp.float32).at[:, :act_dim].set(b_act)
    p["pred_rs_w"] = wrs.astype(MATMUL_DTYPE)
    p["pred_rs_b"] = brs
    p["pred_act_wp"] = wap.astype(MATMUL_DTYPE)
    p["pred_act_bp"] = bap

    layers = []
    for i in range(n_block):
        bk = jax.random.split(keys[7 + i], 6)
        blk = {}
        blk["wq"], blk["bq"] = lin(bk[0], h_dim, h_dim)
        blk["wk"], blk["bk"] = lin(bk[1], h_dim, h_dim)
        blk["wv"], blk["bv"] = lin(bk[2], h_dim, h_dim)
        blk["wp"], blk["bp"] = lin(bk[3], h_dim, h_dim)
        blk["ln1_g"] = jnp.ones((1, h_dim), jnp.float32)
        blk["ln1_b"] = jnp.zeros((1, h_dim), jnp.float32)
        blk["w1"], blk["bf1"] = lin(bk[4], h_dim, 4 * h_dim)
        blk["w2"], blk["bf2"] = lin(bk[5], 4 * h_dim, h_dim)
        blk["ln2_g"] = jnp.ones((1, h_dim), jnp.float32)
        blk["ln2_b"] = jnp.zeros((1, h_dim), jnp.float32)
        layers.append(blk)
    # Stack per-layer params on a leading layer axis so the transformer kernel
    # can index them with its grid axis over layers.
    p["layers"] = {name: jnp.stack([blk[name] for blk in layers], axis=0)
                   for name in _LAYER_PARAMS}
    return p


# -------------------------------- forward pass -------------------------------

def decision_transformer_forward(params, state, rtg, timestep, actions,
                                 *, n_heads, h_dim):
    B, T, state_dim = state.shape
    act_dim = actions.shape[-1]
    S = 3 * T

    # Embedding-table gather stays in plain JAX (data-dependent row gather).
    time_emb = params["embed_timestep"][timestep]            # (B, T, h)

    # Fused embeddings + timestep add + embed_ln -> (B, 3, T, h), already in the
    # type-major token order used by the transformer (no interleave round trip).
    emb = fused_embed(rtg, state, actions, time_emb, params)

    # Causal mask, permuted into the type-major order. Position p = tok*T + t
    # corresponds to reference position 3*t + tok; query p may attend key q iff
    # orig(q) <= orig(p). Tiny (S, S) constant, folded by XLA under jit.
    pos = jnp.arange(S)
    orig = 3 * (pos % T) + pos // T
    bias = jnp.where(orig[None, :] <= orig[:, None], 0.0, MASK_NEG
                     ).astype(jnp.float32)

    # All attention blocks in a single pallas_call (grid over batch tiles x layers).
    h = transformer(emb.reshape(B * S, h_dim), bias, params["layers"],
                    n_heads=n_heads, batch=B, seq=S)

    # Token-type planes are contiguous in type-major order; the heads kernel
    # selects them via its BlockSpec index_map (no XLA gathers).
    h4 = h.reshape(B, 3, T, h_dim)
    rs_p, act_p = fused_heads(h4, params)

    return_preds = rs_p[..., 0:1]                    # (B, T, 1)
    state_preds = rs_p[..., 1:1 + state_dim]         # (B, T, state_dim)
    act_preds = act_p[..., :act_dim]                 # (B, T, act_dim)
    return return_preds, state_preds, act_preds


# ------------------------------------ main ------------------------------------

if __name__ == "__main__":
    state_dim, act_dim = 6, 3
    n_block, h_dim, context_len, n_heads = 2, 32, 8, 2
    max_timestep = 128
    B, T = 2, 8   # T == context_len -> sequence length inside transformer = 24

    key = jax.random.PRNGKey(0)
    kp, ks, kr, kt, ka = jax.random.split(key, 5)

    params = init_params(kp, state_dim, act_dim, n_block, h_dim, max_timestep)

    state = jax.random.normal(ks, (B, T, state_dim), jnp.float32)
    rtg = jax.random.normal(kr, (B, T, 1), jnp.float32)
    timestep = jax.random.randint(kt, (B, T), 0, max_timestep)
    actions = jax.random.normal(ka, (B, T, act_dim), jnp.float32)

    fwd = jax.jit(functools.partial(decision_transformer_forward,
                                    n_heads=n_heads, h_dim=h_dim))
    return_preds, state_preds, act_preds = fwd(params, state, rtg,
                                               timestep, actions)
    jax.block_until_ready((return_preds, state_preds, act_preds))

    assert return_preds.shape == (B, T, 1)
    assert state_preds.shape == (B, T, state_dim)
    assert act_preds.shape == (B, T, act_dim)
    assert bool(jnp.all(jnp.isfinite(return_preds)))
    assert bool(jnp.all(jnp.isfinite(state_preds)))
    assert bool(jnp.all(jnp.isfinite(act_preds)))
    print("KERNEL_OK")
</pallas_src>

<mosaic_0001>
module attributes {stable_mosaic.version = 11 : i64} {
  func.func @_embed_kernel(%arg0: i32, %arg1: memref<1x8x1xf32, #tpu.memory_space<vmem>>, %arg2: memref<1x8x6xf32, #tpu.memory_space<vmem>>, %arg3: memref<1x8x3xf32, #tpu.memory_space<vmem>>, %arg4: memref<1x8x32xf32, #tpu.memory_space<vmem>>, %arg5: memref<1x32xf32, #tpu.memory_space<vmem>>, %arg6: memref<1x32xf32, #tpu.memory_space<vmem>>, %arg7: memref<6x32xbf16, #tpu.memory_space<vmem>>, %arg8: memref<1x32xf32, #tpu.memory_space<vmem>>, %arg9: memref<3x32xbf16, #tpu.memory_space<vmem>>, %arg10: memref<1x32xf32, #tpu.memory_space<vmem>>, %arg11: memref<1x32xf32, #tpu.memory_space<vmem>>, %arg12: memref<1x32xf32, #tpu.memory_space<vmem>>, %arg13: memref<1x3x8x32xf32, #tpu.memory_space<vmem>>) attributes {dimension_semantics = [#tpu.dimension_semantics<parallel>], iteration_bounds = array<i64: 2>, scalar_prefetch = 0 : i64, scratch_operands = 0 : i64, tpu.core_type = #tpu.core_type<tc>, window_params = [{transform_indices = @transform_0, window_bounds = array<i64: 1, 8, 1>}, {transform_indices = @transform_1, window_bounds = array<i64: 1, 8, 6>}, {transform_indices = @transform_2, window_bounds = array<i64: 1, 8, 3>}, {transform_indices = @transform_3, window_bounds = array<i64: 1, 8, 32>}, {pipeline_mode = #tpu.pipeline_mode<synchronous>, transform_indices = @transform_4, window_bounds = array<i64: 1, 32>}, {pipeline_mode = #tpu.pipeline_mode<synchronous>, transform_indices = @transform_5, window_bounds = array<i64: 1, 32>}, {pipeline_mode = #tpu.pipeline_mode<synchronous>, transform_indices = @transform_6, window_bounds = array<i64: 6, 32>}, {pipeline_mode = #tpu.pipeline_mode<synchronous>, transform_indices = @transform_7, window_bounds = array<i64: 1, 32>}, {pipeline_mode = #tpu.pipeline_mode<synchronous>, transform_indices = @transform_8, window_bounds = array<i64: 3, 32>}, {pipeline_mode = #tpu.pipeline_mode<synchronous>, transform_indices = @transform_9, window_bounds = array<i64: 1, 32>}, {pipeline_mode = #tpu.pipeline_mode<synchronous>, transform_indices = @transform_10, window_bounds = array<i64: 1, 32>}, {pipeline_mode = #tpu.pipeline_mode<synchronous>, transform_indices = @transform_11, window_bounds = array<i64: 1, 32>}, {transform_indices = @transform_12, window_bounds = array<i64: 1, 3, 8, 32>}]} {
    %c0 = arith.constant 0 : index
    %c0_0 = arith.constant 0 : index
    %c0_1 = arith.constant 0 : index
    %0 = vector.load %arg4[%c0, %c0_0, %c0_1] : memref<1x8x32xf32, #tpu.memory_space<vmem>>, vector<1x8x32xf32>
    %1 = vector.shape_cast %0 : vector<1x8x32xf32> to vector<8x32xf32>
    %c0_2 = arith.constant 0 : index
    %c0_3 = arith.constant 0 : index
    %2 = vector.load %arg11[%c0_2, %c0_3] : memref<1x32xf32, #tpu.memory_space<vmem>>, vector<1x32xf32>
    %c0_4 = arith.constant 0 : index
    %c0_5 = arith.constant 0 : index
    %3 = vector.load %arg12[%c0_4, %c0_5] : memref<1x32xf32, #tpu.memory_space<vmem>>, vector<1x32xf32>
    %c0_6 = arith.constant 0 : index
    %c0_7 = arith.constant 0 : index
    %c0_8 = arith.constant 0 : index
    %4 = vector.load %arg1[%c0_6, %c0_7, %c0_8] : memref<1x8x1xf32, #tpu.memory_space<vmem>>, vector<1x8x1xf32>
    %5 = vector.shape_cast %4 : vector<1x8x1xf32> to vector<8x1xf32>
    %c0_9 = arith.constant 0 : index
    %c0_10 = arith.constant 0 : index
    %6 = vector.load %arg5[%c0_9, %c0_10] : memref<1x32xf32, #tpu.memory_space<vmem>>, vector<1x32xf32>
    %7 = vector.broadcast %5 : vector<8x1xf32> to vector<8x32xf32>
    %8 = vector.broadcast %6 : vector<1x32xf32> to vector<8x32xf32>
    %9 = arith.mulf %7, %8 : vector<8x32xf32>
    %c0_11 = arith.constant 0 : index
    %c0_12 = arith.constant 0 : index
    %10 = vector.load %arg6[%c0_11, %c0_12] : memref<1x32xf32, #tpu.memory_space<vmem>>, vector<1x32xf32>
    %11 = vector.broadcast %10 : vector<1x32xf32> to vector<8x32xf32>
    %12 = arith.addf %9, %11 : vector<8x32xf32>
    %13 = arith.addf %12, %1 : vector<8x32xf32>
    %c0_13 = arith.constant 0 : index
    %c0_14 = arith.constant 0 : index
    %c0_15 = arith.constant 0 : index
    %14 = vector.load %arg2[%c0_13, %c0_14, %c0_15] : memref<1x8x6xf32, #tpu.memory_space<vmem>>, vector<1x8x6xf32>
    %15 = vector.shape_cast %14 : vector<1x8x6xf32> to vector<8x6xf32>
    %c0_16 = arith.constant 0 : index
    %c0_17 = arith.constant 0 : index
    %16 = vector.load %arg7[%c0_16, %c0_17] : memref<6x32xbf16, #tpu.memory_space<vmem>>, vector<6x32xbf16>
    %17 = arith.truncf %15 : vector<8x6xf32> to vector<8x6xbf16>
    %cst = arith.constant dense<0.000000e+00> : vector<8x32xf32>
    %18 = tpu.matmul %17, %16, %cst {dimension_numbers = #tpu.dot_dimension_numbers<[1], [0], [0], [1], [0, 0, 1, 1], [], []>} : vector<8x6xbf16>, vector<6x32xbf16>, vector<8x32xf32> -> vector<8x32xf32>
    %c0_18 = arith.constant 0 : index
    %c0_19 = arith.constant 0 : index
    %19 = vector.load %arg8[%c0_18, %c0_19] : memref<1x32xf32, #tpu.memory_space<vmem>>, vector<1x32xf32>
    %20 = vector.broadcast %19 : vector<1x32xf32> to vector<8x32xf32>
    %21 = arith.addf %18, %20 : vector<8x32xf32>
    %22 = arith.addf %21, %1 : vector<8x32xf32>
    %c0_20 = arith.constant 0 : index
    %c0_21 = arith.constant 0 : index
    %c0_22 = arith.constant 0 : index
    %23 = vector.load %arg3[%c0_20, %c0_21, %c0_22] : memref<1x8x3xf32, #tpu.memory_space<vmem>>, vector<1x8x3xf32>
    %24 = vector.shape_cast %23 : vector<1x8x3xf32> to vector<8x3xf32>
    %c0_23 = arith.constant 0 : index
    %c0_24 = arith.constant 0 : index
    %25 = vector.load %arg9[%c0_23, %c0_24] : memref<3x32xbf16, #tpu.memory_space<vmem>>, vector<3x32xbf16>
    %26 = arith.truncf %24 : vector<8x3xf32> to vector<8x3xbf16>
    %cst_25 = arith.constant dense<0.000000e+00> : vector<8x32xf32>
    %27 = tpu.matmul %26, %25, %cst_25 {dimension_numbers = #tpu.dot_dimension_numbers<[1], [0], [0], [1], [0, 0, 1, 1], [], []>} : vector<8x3xbf16>, vector<3x32xbf16>, vector<8x32xf32> -> vector<8x32xf32>
    %c0_26 = arith.constant 0 : index
    %c0_27 = arith.constant 0 : index
    %28 = vector.load %arg10[%c0_26, %c0_27] : memref<1x32xf32, #tpu.memory_space<vmem>>, vector<1x32xf32>
    %29 = vector.broadcast %28 : vector<1x32xf32> to vector<8x32xf32>
    %30 = arith.addf %27, %29 : vector<8x32xf32>
    %31 = arith.addf %30, %1 : vector<8x32xf32>
    %32 = arith.addf %31, %1 : vector<8x32xf32>
    %cst_28 = arith.constant dense<0.000000e+00> : vector<8xf32>
    %33 = vector.multi_reduction <add>, %13, %cst_28 [1] : vector<8x32xf32> to vector<8xf32>
    %34 = vector.shape_cast %33 : vector<8xf32> to vector<8x1xf32>
    %cst_29 = arith.constant 3.200000e+01 : f32
    %35 = vector.broadcast %cst_29 : f32 to vector<8x1xf32>
    %36 = arith.divf %34, %35 : vector<8x1xf32>
    %37 = vector.broadcast %36 : vector<8x1xf32> to vector<8x32xf32>
    %38 = arith.subf %13, %37 : vector<8x32xf32>
    %39 = arith.mulf %38, %38 : vector<8x32xf32>
    %cst_30 = arith.constant dense<0.000000e+00> : vector<8xf32>
    %40 = vector.multi_reduction <add>, %39, %cst_30 [1] : vector<8x32xf32> to vector<8xf32>
    %41 = vector.shape_cast %40 : vector<8xf32> to vector<8x1xf32>
    %cst_31 = arith.constant 3.200000e+01 : f32
    %42 = vector.broadcast %cst_31 : f32 to vector<8x1xf32>
    %43 = arith.divf %41, %42 : vector<8x1xf32>
    %44 = vector.broadcast %36 : vector<8x1xf32> to vector<8x32xf32>
    %45 = arith.subf %13, %44 : vector<8x32xf32>
    %cst_32 = arith.constant 9.99999974E-6 : f32
    %46 = vector.broadcast %cst_32 : f32 to vector<8x1xf32>
    %47 = arith.addf %43, %46 : vector<8x1xf32>
    %48 = math.rsqrt %47 : vector<8x1xf32>
    %49 = vector.broadcast %48 : vector<8x1xf32> to vector<8x32xf32>
    %50 = arith.mulf %45, %49 : vector<8x32xf32>
    %51 = vector.broadcast %2 : vector<1x32xf32> to vector<8x32xf32>
    %52 = arith.mulf %50, %51 : vector<8x32xf32>
    %53 = vector.broadcast %3 : vector<1x32xf32> to vector<8x32xf32>
    %54 = arith.addf %52, %53 : vector<8x32xf32>
    %c0_33 = arith.constant 0 : index
    %c0_34 = arith.constant 0 : index
    %c0_35 = arith.constant 0 : index
    %c0_36 = arith.constant 0 : index
    %55 = vector.load %arg13[%c0_33, %c0_34, %c0_35, %c0_36] : memref<1x3x8x32xf32, #tpu.memory_space<vmem>>, vector<1x1x8x32xf32>
    %56 = vector.shape_cast %55 : vector<1x1x8x32xf32> to vector<8x32xf32>
    %57 = vector.shape_cast %54 : vector<8x32xf32> to vector<1x1x8x32xf32>
    tpu.vector_store %arg13[%c0_33, %c0_34, %c0_35, %c0_36], %57 {strides = array<i32>} : memref<1x3x8x32xf32, #tpu.memory_space<vmem>>, vector<1x1x8x32xf32>,
    %cst_37 = arith.constant dense<0.000000e+00> : vector<8xf32>
    %58 = vector.multi_reduction <add>, %22, %cst_37 [1] : vector<8x32xf32> to vector<8xf32>
    %59 = vector.shape_cast %58 : vector<8xf32> to vector<8x1xf32>
    %cst_38 = arith.constant 3.200000e+01 : f32
    %60 = vector.broadcast %cst_38 : f32 to vector<8x1xf32>
    %61 = arith.divf %59, %60 : vector<8x1xf32>
    %62 = vector.broadcast %61 : vector<8x1xf32> to vector<8x32xf32>
    %63 = arith.subf %22, %62 : vector<8x32xf32>
    %64 = arith.mulf %63, %63 : vector<8x32xf32>
    %cst_39 = arith.constant dense<0.000000e+00> : vector<8xf32>
    %65 = vector.multi_reduction <add>, %64, %cst_39 [1] : vector<8x32xf32> to vector<8xf32>
    %66 = vector.shape_cast %65 : vector<8xf32> to vector<8x1xf32>
    %cst_40 = arith.constant 3.200000e+01 : f32
    %67 = vector.broadcast %cst_40 : f32 to vector<8x1xf32>
    %68 = arith.divf %66, %67 : vector<8x1xf32>
    %69 = vector.broadcast %61 : vector<8x1xf32> to vector<8x32xf32>
    %70 = arith.subf %22, %69 : vector<8x32xf32>
    %cst_41 = arith.constant 9.99999974E-6 : f32
    %71 = vector.broadcast %cst_41 : f32 to vector<8x1xf32>
    %72 = arith.addf %68, %71 : vector<8x1xf32>
    %73 = math.rsqrt %72 : vector<8x1xf32>
    %74 = vector.broadcast %73 : vector<8x1xf32> to vector<8x32xf32>
    %75 = arith.mulf %70, %74 : vector<8x32xf32>
    %76 = vector.broadcast %2 : vector<1x32xf32> to vector<8x32xf32>
    %77 = arith.mulf %75, %76 : vector<8x32xf32>
    %78 = vector.broadcast %3 : vector<1x32xf32> to vector<8x32xf32>
    %79 = arith.addf %77, %78 : vector<8x32xf32>
    %c0_42 = arith.constant 0 : index
    %c1 = arith.constant 1 : index
    %c0_43 = arith.constant 0 : index
    %c0_44 = arith.constant 0 : index
    %80 = vector.load %arg13[%c0_42, %c1, %c0_43, %c0_44] : memref<1x3x8x32xf32, #tpu.memory_space<vmem>>, vector<1x1x8x32xf32>
    %81 = vector.shape_cast %80 : vector<1x1x8x32xf32> to vector<8x32xf32>
    %82 = vector.shape_cast %79 : vector<8x32xf32> to vector<1x1x8x32xf32>
    tpu.vector_store %arg13[%c0_42, %c1, %c0_43, %c0_44], %82 {strides = array<i32>} : memref<1x3x8x32xf32, #tpu.memory_space<vmem>>, vector<1x1x8x32xf32>,
    %cst_45 = arith.constant dense<0.000000e+00> : vector<8xf32>
    %83 = vector.multi_reduction <add>, %32, %cst_45 [1] : vector<8x32xf32> to vector<8xf32>
    %84 = vector.shape_cast %83 : vector<8xf32> to vector<8x1xf32>
    %cst_46 = arith.constant 3.200000e+01 : f32
    %85 = vector.broadcast %cst_46 : f32 to vector<8x1xf32>
    %86 = arith.divf %84, %85 : vector<8x1xf32>
    %87 = vector.broadcast %86 : vector<8x1xf32> to vector<8x32xf32>
    %88 = arith.subf %32, %87 : vector<8x32xf32>
    %89 = arith.mulf %88, %88 : vector<8x32xf32>
    %cst_47 = arith.constant dense<0.000000e+00> : vector<8xf32>
    %90 = vector.multi_reduction <add>, %89, %cst_47 [1] : vector<8x32xf32> to vector<8xf32>
    %91 = vector.shape_cast %90 : vector<8xf32> to vector<8x1xf32>
    %cst_48 = arith.constant 3.200000e+01 : f32
    %92 = vector.broadcast %cst_48 : f32 to vector<8x1xf32>
    %93 = arith.divf %91, %92 : vector<8x1xf32>
    %94 = vector.broadcast %86 : vector<8x1xf32> to vector<8x32xf32>
    %95 = arith.subf %32, %94 : vector<8x32xf32>
    %cst_49 = arith.constant 9.99999974E-6 : f32
    %96 = vector.broadcast %cst_49 : f32 to vector<8x1xf32>
    %97 = arith.addf %93, %96 : vector<8x1xf32>
    %98 = math.rsqrt %97 : vector<8x1xf32>
    %99 = vector.broadcast %98 : vector<8x1xf32> to vector<8x32xf32>
    %100 = arith.mulf %95, %99 : vector<8x32xf32>
    %101 = vector.broadcast %2 : vector<1x32xf32> to vector<8x32xf32>
    %102 = arith.mulf %100, %101 : vector<8x32xf32>
    %103 = vector.broadcast %3 : vector<1x32xf32> to vector<8x32xf32>
    %104 = arith.addf %102, %103 : vector<8x32xf32>
    %c0_50 = arith.constant 0 : index
    %c2 = arith.constant 2 : index
    %c0_51 = arith.constant 0 : index
    %c0_52 = arith.constant 0 : index
    %105 = vector.load %arg13[%c0_50, %c2, %c0_51, %c0_52] : memref<1x3x8x32xf32, #tpu.memory_space<vmem>>, vector<1x1x8x32xf32>
    %106 = vector.shape_cast %105 : vector<1x1x8x32xf32> to vector<8x32xf32>
    %107 = vector.shape_cast %104 : vector<8x32xf32> to vector<1x1x8x32xf32>
    tpu.vector_store %arg13[%c0_50, %c2, %c0_51, %c0_52], %107 {strides = array<i32>} : memref<1x3x8x32xf32, #tpu.memory_space<vmem>>, vector<1x1x8x32xf32>,
    return
  }
  func.func @transform_0(%arg0: i32) -> (i32, i32, i32) {
    %c0_i32 = arith.constant 0 : i32
    %c0_i32_0 = arith.constant 0 : i32
    %c0_i32_1 = arith.constant 0 : i32
    return %arg0, %c0_i32, %c0_i32_0 : i32, i32, i32
  }
  func.func @transform_1(%arg0: i32) -> (i32, i32, i32) {
    %c0_i32 = arith.constant 0 : i32
    %c0_i32_0 = arith.constant 0 : i32
    %c0_i32_1 = arith.constant 0 : i32
    return %arg0, %c0_i32, %c0_i32_0 : i32, i32, i32
  }
  func.func @transform_2(%arg0: i32) -> (i32, i32, i32) {
    %c0_i32 = arith.constant 0 : i32
    %c0_i32_0 = arith.constant 0 : i32
    %c0_i32_1 = arith.constant 0 : i32
    return %arg0, %c0_i32, %c0_i32_0 : i32, i32, i32
  }
  func.func @transform_3(%arg0: i32) -> (i32, i32, i32) {
    %c0_i32 = arith.constant 0 : i32
    %c0_i32_0 = arith.constant 0 : i32
    %c0_i32_1 = arith.constant 0 : i32
    return %arg0, %c0_i32, %c0_i32_0 : i32, i32, i32
  }
  func.func @transform_4(%arg0: i32) -> (i32, i32) {
    %c0_i32 = arith.constant 0 : i32
    %c0_i32_0 = arith.constant 0 : i32
    %c0_i32_1 = arith.constant 0 : i32
    return %c0_i32, %c0_i32_0 : i32, i32
  }
  func.func @transform_5(%arg0: i32) -> (i32, i32) {
    %c0_i32 = arith.constant 0 : i32
    %c0_i32_0 = arith.constant 0 : i32
    %c0_i32_1 = arith.constant 0 : i32
    return %c0_i32, %c0_i32_0 : i32, i32
  }
  func.func @transform_6(%arg0: i32) -> (i32, i32) {
    %c0_i32 = arith.constant 0 : i32
    %c0_i32_0 = arith.constant 0 : i32
    %c0_i32_1 = arith.constant 0 : i32
    return %c0_i32, %c0_i32_0 : i32, i32
  }
  func.func @transform_7(%arg0: i32) -> (i32, i32) {
    %c0_i32 = arith.constant 0 : i32
    %c0_i32_0 = arith.constant 0 : i32
    %c0_i32_1 = arith.constant 0 : i32
    return %c0_i32, %c0_i32_0 : i32, i32
  }
  func.func @transform_8(%arg0: i32) -> (i32, i32) {
    %c0_i32 = arith.constant 0 : i32
    %c0_i32_0 = arith.constant 0 : i32
    %c0_i32_1 = arith.constant 0 : i32
    return %c0_i32, %c0_i32_0 : i32, i32
  }
  func.func @transform_9(%arg0: i32) -> (i32, i32) {
    %c0_i32 = arith.constant 0 : i32
    %c0_i32_0 = arith.constant 0 : i32
    %c0_i32_1 = arith.constant 0 : i32
    return %c0_i32, %c0_i32_0 : i32, i32
  }
  func.func @transform_10(%arg0: i32) -> (i32, i32) {
    %c0_i32 = arith.constant 0 : i32
    %c0_i32_0 = arith.constant 0 : i32
    %c0_i32_1 = arith.constant 0 : i32
    return %c0_i32, %c0_i32_0 : i32, i32
  }
  func.func @transform_11(%arg0: i32) -> (i32, i32) {
    %c0_i32 = arith.constant 0 : i32
    %c0_i32_0 = arith.constant 0 : i32
    %c0_i32_1 = arith.constant 0 : i32
    return %c0_i32, %c0_i32_0 : i32, i32
  }
  func.func @transform_12(%arg0: i32) -> (i32, i32, i32, i32) {
    %c0_i32 = arith.constant 0 : i32
    %c0_i32_0 = arith.constant 0 : i32
    %c0_i32_1 = arith.constant 0 : i32
    %c0_i32_2 = arith.constant 0 : i32
    return %arg0, %c0_i32, %c0_i32_0, %c0_i32_1 : i32, i32, i32, i32
  }
}

module attributes {stable_mosaic.version = 11 : i64} {
  func.func @_heads_kernel(%arg0: i32, %arg1: memref<1x1x8x32xf32, #tpu.memory_space<vmem>>, %arg2: memref<1x1x8x32xf32, #tpu.memory_space<vmem>>, %arg3: memref<32x128xbf16, #tpu.memory_space<vmem>>, %arg4: memref<1x128xf32, #tpu.memory_space<vmem>>, %arg5: memref<32x128xbf16, #tpu.memory_space<vmem>>, %arg6: memref<1x128xf32, #tpu.memory_space<vmem>>, %arg7: memref<1x8x128xf32, #tpu.memory_space<vmem>>, %arg8: memref<1x8x128xf32, #tpu.memory_space<vmem>>) attributes {dimension_semantics = [#tpu.dimension_semantics<parallel>], iteration_bounds = array<i64: 2>, scalar_prefetch = 0 : i64, scratch_operands = 0 : i64, tpu.core_type = #tpu.core_type<tc>, window_params = [{transform_indices = @transform_0, window_bounds = array<i64: 1, 1, 8, 32>}, {transform_indices = @transform_1, window_bounds = array<i64: 1, 1, 8, 32>}, {pipeline_mode = #tpu.pipeline_mode<synchronous>, transform_indices = @transform_2, window_bounds = array<i64: 32, 128>}, {pipeline_mode = #tpu.pipeline_mode<synchronous>, transform_indices = @transform_3, window_bounds = array<i64: 1, 128>}, {pipeline_mode = #tpu.pipeline_mode<synchronous>, transform_indices = @transform_4, window_bounds = array<i64: 32, 128>}, {pipeline_mode = #tpu.pipeline_mode<synchronous>, transform_indices = @transform_5, window_bounds = array<i64: 1, 128>}, {transform_indices = @transform_6, window_bounds = array<i64: 1, 8, 128>}, {transform_indices = @transform_7, window_bounds = array<i64: 1, 8, 128>}]} {
    %c0 = arith.constant 0 : index
    %c0_0 = arith.constant 0 : index
    %c0_1 = arith.constant 0 : index
    %c0_2 = arith.constant 0 : index
    %0 = vector.load %arg1[%c0, %c0_0, %c0_1, %c0_2] : memref<1x1x8x32xf32, #tpu.memory_space<vmem>>, vector<1x1x8x32xf32>
    %1 = vector.shape_cast %0 : vector<1x1x8x32xf32> to vector<8x32xf32>
    %c0_3 = arith.constant 0 : index
    %c0_4 = arith.constant 0 : index
    %2 = vector.load %arg3[%c0_3, %c0_4] : memref<32x128xbf16, #tpu.memory_space<vmem>>, vector<32x128xbf16>
    %3 = arith.truncf %1 : vector<8x32xf32> to vector<8x32xbf16>
    %cst = arith.constant dense<0.000000e+00> : vector<8x128xf32>
    %4 = tpu.matmul %3, %2, %cst {dimension_numbers = #tpu.dot_dimension_numbers<[1], [0], [0], [1], [0, 0, 1, 1], [], []>} : vector<8x32xbf16>, vector<32x128xbf16>, vector<8x128xf32> -> vector<8x128xf32>
    %c0_5 = arith.constant 0 : index
    %c0_6 = arith.constant 0 : index
    %5 = vector.load %arg4[%c0_5, %c0_6] : memref<1x128xf32, #tpu.memory_space<vmem>>, vector<1x128xf32>
    %6 = vector.broadcast %5 : vector<1x128xf32> to vector<8x128xf32>
    %7 = arith.addf %4, %6 : vector<8x128xf32>
    %c0_7 = arith.constant 0 : index
    %c0_8 = arith.constant 0 : index
    %c0_9 = arith.constant 0 : index
    %8 = vector.load %arg7[%c0_7, %c0_8, %c0_9] : memref<1x8x128xf32, #tpu.memory_space<vmem>>, vector<1x8x128xf32>
    %9 = vector.shape_cast %8 : vector<1x8x128xf32> to vector<8x128xf32>
    %10 = vector.shape_cast %7 : vector<8x128xf32> to vector<1x8x128xf32>
    tpu.vector_store %arg7[%c0_7, %c0_8, %c0_9], %10 {strides = array<i32>} : memref<1x8x128xf32, #tpu.memory_space<vmem>>, vector<1x8x128xf32>,
    %c0_10 = arith.constant 0 : index
    %c0_11 = arith.constant 0 : index
    %c0_12 = arith.constant 0 : index
    %c0_13 = arith.constant 0 : index
    %11 = vector.load %arg2[%c0_10, %c0_11, %c0_12, %c0_13] : memref<1x1x8x32xf32, #tpu.memory_space<vmem>>, vector<1x1x8x32xf32>
    %12 = vector.shape_cast %11 : vector<1x1x8x32xf32> to vector<8x32xf32>
    %c0_14 = arith.constant 0 : index
    %c0_15 = arith.constant 0 : index
    %13 = vector.load %arg5[%c0_14, %c0_15] : memref<32x128xbf16, #tpu.memory_space<vmem>>, vector<32x128xbf16>
    %14 = arith.truncf %12 : vector<8x32xf32> to vector<8x32xbf16>
    %cst_16 = arith.constant dense<0.000000e+00> : vector<8x128xf32>
    %15 = tpu.matmul %14, %13, %cst_16 {dimension_numbers = #tpu.dot_dimension_numbers<[1], [0], [0], [1], [0, 0, 1, 1], [], []>} : vector<8x32xbf16>, vector<32x128xbf16>, vector<8x128xf32> -> vector<8x128xf32>
    %c0_17 = arith.constant 0 : index
    %c0_18 = arith.constant 0 : index
    %16 = vector.load %arg6[%c0_17, %c0_18] : memref<1x128xf32, #tpu.memory_space<vmem>>, vector<1x128xf32>
    %17 = vector.broadcast %16 : vector<1x128xf32> to vector<8x128xf32>
    %18 = arith.addf %15, %17 : vector<8x128xf32>
    %19 = math.tanh %18 : vector<8x128xf32>
    %c0_19 = arith.constant 0 : index
    %c0_20 = arith.constant 0 : index
    %c0_21 = arith.constant 0 : index
    %20 = vector.load %arg8[%c0_19, %c0_20, %c0_21] : memref<1x8x128xf32, #tpu.memory_space<vmem>>, vector<1x8x128xf32>
    %21 = vector.shape_cast %20 : vector<1x8x128xf32> to vector<8x128xf32>
    %22 = vector.shape_cast %19 : vector<8x128xf32> to vector<1x8x128xf32>
    tpu.vector_store %arg8[%c0_19, %c0_20, %c0_21], %22 {strides = array<i32>} : memref<1x8x128xf32, #tpu.memory_space<vmem>>, vector<1x8x128xf32>,
    return
  }
  func.func @transform_0(%arg0: i32) -> (i32, i32, i32, i32) {
    %c2_i32 = arith.constant 2 : i32
    %c0_i32 = arith.constant 0 : i32
    %c0_i32_0 = arith.constant 0 : i32
    %c0_i32_1 = arith.constant 0 : i32
    return %arg0, %c2_i32, %c0_i32, %c0_i32_0 : i32, i32, i32, i32
  }
  func.func @transform_1(%arg0: i32) -> (i32, i32, i32, i32) {
    %c1_i32 = arith.constant 1 : i32
    %c0_i32 = arith.constant 0 : i32
    %c0_i32_0 = arith.constant 0 : i32
    %c0_i32_1 = arith.constant 0 : i32
    return %arg0, %c1_i32, %c0_i32, %c0_i32_0 : i32, i32, i32, i32
  }
  func.func @transform_2(%arg0: i32) -> (i32, i32) {
    %c0_i32 = arith.constant 0 : i32
    %c0_i32_0 = arith.constant 0 : i32
    %c0_i32_1 = arith.constant 0 : i32
    return %c0_i32, %c0_i32_0 : i32, i32
  }
  func.func @transform_3(%arg0: i32) -> (i32, i32) {
    %c0_i32 = arith.constant 0 : i32
    %c0_i32_0 = arith.constant 0 : i32
    %c0_i32_1 = arith.constant 0 : i32
    return %c0_i32, %c0_i32_0 : i32, i32
  }
  func.func @transform_4(%arg0: i32) -> (i32, i32) {
    %c0_i32 = arith.constant 0 : i32
    %c0_i32_0 = arith.constant 0 : i32
    %c0_i32_1 = arith.constant 0 : i32
    return %c0_i32, %c0_i32_0 : i32, i32
  }
  func.func @transform_5(%arg0: i32) -> (i32, i32) {
    %c0_i32 = arith.constant 0 : i32
    %c0_i32_0 = arith.constant 0 : i32
    %c0_i32_1 = arith.constant 0 : i32
    return %c0_i32, %c0_i32_0 : i32, i32
  }
  func.func @transform_6(%arg0: i32) -> (i32, i32, i32) {
    %c0_i32 = arith.constant 0 : i32
    %c0_i32_0 = arith.constant 0 : i32
    %c0_i32_1 = arith.constant 0 : i32
    return %arg0, %c0_i32, %c0_i32_0 : i32, i32, i32
  }
  func.func @transform_7(%arg0: i32) -> (i32, i32, i32) {
    %c0_i32 = arith.constant 0 : i32
    %c0_i32_0 = arith.constant 0 : i32
    %c0_i32_1 = arith.constant 0 : i32
    return %arg0, %c0_i32, %c0_i32_0 : i32, i32, i32
  }
}

module attributes {stable_mosaic.version = 11 : i64} {
  func.func @_transformer_kernel(%arg0: i32, %arg1: i32, %arg2: memref<24x32xf32, #tpu.memory_space<vmem>>, %arg3: memref<24x24xf32, #tpu.memory_space<vmem>>, %arg4: memref<1x32x32xbf16, #tpu.memory_space<vmem>>, %arg5: memref<1x1x32xf32, #tpu.memory_space<vmem>>, %arg6: memref<1x32x32xbf16, #tpu.memory_space<vmem>>, %arg7: memref<1x1x32xf32, #tpu.memory_space<vmem>>, %arg8: memref<1x32x32xbf16, #tpu.memory_space<vmem>>, %arg9: memref<1x1x32xf32, #tpu.memory_space<vmem>>, %arg10: memref<1x32x32xbf16, #tpu.memory_space<vmem>>, %arg11: memref<1x1x32xf32, #tpu.memory_space<vmem>>, %arg12: memref<1x1x32xf32, #tpu.memory_space<vmem>>, %arg13: memref<1x1x32xf32, #tpu.memory_space<vmem>>, %arg14: memref<1x32x128xbf16, #tpu.memory_space<vmem>>, %arg15: memref<1x1x128xf32, #tpu.memory_space<vmem>>, %arg16: memref<1x128x32xbf16, #tpu.memory_space<vmem>>, %arg17: memref<1x1x32xf32, #tpu.memory_space<vmem>>, %arg18: memref<1x1x32xf32, #tpu.memory_space<vmem>>, %arg19: memref<1x1x32xf32, #tpu.memory_space<vmem>>, %arg20: memref<24x32xf32, #tpu.memory_space<vmem>>) attributes {dimension_semantics = [#tpu.dimension_semantics<parallel>, #tpu.dimension_semantics<arbitrary>], iteration_bounds = array<i64: 2, 2>, scalar_prefetch = 0 : i64, scratch_operands = 0 : i64, tpu.core_type = #tpu.core_type<tc>, window_params = [{transform_indices = @transform_0, window_bounds = array<i64: 24, 32>}, {pipeline_mode = #tpu.pipeline_mode<synchronous>, transform_indices = @transform_1, window_bounds = array<i64: 24, 24>}, {transform_indices = @transform_2, window_bounds = array<i64: 1, 32, 32>}, {transform_indices = @transform_3, window_bounds = array<i64: 1, 1, 32>}, {transform_indices = @transform_4, window_bounds = array<i64: 1, 32, 32>}, {transform_indices = @transform_5, window_bounds = array<i64: 1, 1, 32>}, {transform_indices = @transform_6, window_bounds = array<i64: 1, 32, 32>}, {transform_indices = @transform_7, window_bounds = array<i64: 1, 1, 32>}, {transform_indices = @transform_8, window_bounds = array<i64: 1, 32, 32>}, {transform_indices = @transform_9, window_bounds = array<i64: 1, 1, 32>}, {transform_indices = @transform_10, window_bounds = array<i64: 1, 1, 32>}, {transform_indices = @transform_11, window_bounds = array<i64: 1, 1, 32>}, {transform_indices = @transform_12, window_bounds = array<i64: 1, 32, 128>}, {transform_indices = @transform_13, window_bounds = array<i64: 1, 1, 128>}, {transform_indices = @transform_14, window_bounds = array<i64: 1, 128, 32>}, {transform_indices = @transform_15, window_bounds = array<i64: 1, 1, 32>}, {transform_indices = @transform_16, window_bounds = array<i64: 1, 1, 32>}, {transform_indices = @transform_17, window_bounds = array<i64: 1, 1, 32>}, {transform_indices = @transform_18, window_bounds = array<i64: 24, 32>}]} {
    %c0_i32 = arith.constant 0 : i32
    %0 = arith.cmpi eq, %arg1, %c0_i32 : i32
    %1 = arith.extui %0 : i1 to i32
    %c0_i32_0 = arith.constant 0 : i32
    %2 = arith.cmpi ne, %1, %c0_i32_0 : i32
    scf.if %2 {
      %c0_83 = arith.constant 0 : index
      %c0_84 = arith.constant 0 : index
      %173 = vector.load %arg2[%c0_83, %c0_84] : memref<24x32xf32, #tpu.memory_space<vmem>>, vector<24x32xf32>
      %c0_85 = arith.constant 0 : index
      %c0_86 = arith.constant 0 : index
      %174 = vector.load %arg20[%c0_85, %c0_86] : memref<24x32xf32, #tpu.memory_space<vmem>>, vector<24x32xf32>
      tpu.vector_store %arg20[%c0_85, %c0_86], %173 {strides = array<i32>} : memref<24x32xf32, #tpu.memory_space<vmem>>, vector<24x32xf32>,
    } else {
    }
    %c0 = arith.constant 0 : index
    %c0_1 = arith.constant 0 : index
    %3 = vector.load %arg20[%c0, %c0_1] : memref<24x32xf32, #tpu.memory_space<vmem>>, vector<24x32xf32>
    %c0_2 = arith.constant 0 : index
    %c0_3 = arith.constant 0 : index
    %c0_4 = arith.constant 0 : index
    %4 = vector.load %arg4[%c0_2, %c0_3, %c0_4] : memref<1x32x32xbf16, #tpu.memory_space<vmem>>, vector<1x32x32xbf16>
    %5 = vector.shape_cast %4 : vector<1x32x32xbf16> to vector<32x32xbf16>
    %c0_5 = arith.constant 0 : index
    %c0_6 = arith.constant 0 : index
    %c0_7 = arith.constant 0 : index
    %6 = vector.load %arg6[%c0_5, %c0_6, %c0_7] : memref<1x32x32xbf16, #tpu.memory_space<vmem>>, vector<1x32x32xbf16>
    %7 = vector.shape_cast %6 : vector<1x32x32xbf16> to vector<32x32xbf16>
    %c0_8 = arith.constant 0 : index
    %c0_9 = arith.constant 0 : index
    %c0_10 = arith.constant 0 : index
    %8 = vector.load %arg8[%c0_8, %c0_9, %c0_10] : memref<1x32x32xbf16, #tpu.memory_space<vmem>>, vector<1x32x32xbf16>
    %9 = vector.shape_cast %8 : vector<1x32x32xbf16> to vector<32x32xbf16>
    %c0_11 = arith.constant 0 : index
    %c0_12 = arith.constant 0 : index
    %c0_13 = arith.constant 0 : index
    %10 = vector.load %arg10[%c0_11, %c0_12, %c0_13] : memref<1x32x32xbf16, #tpu.memory_space<vmem>>, vector<1x32x32xbf16>
    %11 = vector.shape_cast %10 : vector<1x32x32xbf16> to vector<32x32xbf16>
    %c0_14 = arith.constant 0 : index
    %c0_15 = arith.constant 0 : index
    %c0_16 = arith.constant 0 : index
    %12 = vector.load %arg5[%c0_14, %c0_15, %c0_16] : memref<1x1x32xf32, #tpu.memory_space<vmem>>, vector<1x1x32xf32>
    %13 = vector.shape_cast %12 : vector<1x1x32xf32> to vector<1x32xf32>
    %c0_17 = arith.constant 0 : index
    %c0_18 = arith.constant 0 : index
    %c0_19 = arith.constant 0 : index
    %14 = vector.load %arg7[%c0_17, %c0_18, %c0_19] : memref<1x1x32xf32, #tpu.memory_space<vmem>>, vector<1x1x32xf32>
    %15 = vector.shape_cast %14 : vector<1x1x32xf32> to vector<1x32xf32>
    %c0_20 = arith.constant 0 : index
    %c0_21 = arith.constant 0 : index
    %c0_22 = arith.constant 0 : index
    %16 = vector.load %arg9[%c0_20, %c0_21, %c0_22] : memref<1x1x32xf32, #tpu.memory_space<vmem>>, vector<1x1x32xf32>
    %17 = vector.shape_cast %16 : vector<1x1x32xf32> to vector<1x32xf32>
    %c0_23 = arith.constant 0 : index
    %c0_24 = arith.constant 0 : index
    %c0_25 = arith.constant 0 : index
    %18 = vector.load %arg11[%c0_23, %c0_24, %c0_25] : memref<1x1x32xf32, #tpu.memory_space<vmem>>, vector<1x1x32xf32>
    %19 = vector.shape_cast %18 : vector<1x1x32xf32> to vector<1x32xf32>
    %20 = arith.truncf %3 : vector<24x32xf32> to vector<24x32xbf16>
    %cst = arith.constant dense<0.000000e+00> : vector<24x32xf32>
    %21 = tpu.matmul %20, %5, %cst {dimension_numbers = #tpu.dot_dimension_numbers<[1], [0], [0], [1], [0, 0, 1, 1], [], []>} : vector<24x32xbf16>, vector<32x32xbf16>, vector<24x32xf32> -> vector<24x32xf32>
    %22 = vector.broadcast %13 : vector<1x32xf32> to vector<24x32xf32>
    %23 = arith.addf %21, %22 : vector<24x32xf32>
    %24 = arith.truncf %3 : vector<24x32xf32> to vector<24x32xbf16>
    %cst_26 = arith.constant dense<0.000000e+00> : vector<24x32xf32>
    %25 = tpu.matmul %24, %7, %cst_26 {dimension_numbers = #tpu.dot_dimension_numbers<[1], [0], [0], [1], [0, 0, 1, 1], [], []>} : vector<24x32xbf16>, vector<32x32xbf16>, vector<24x32xf32> -> vector<24x32xf32>
    %26 = vector.broadcast %15 : vector<1x32xf32> to vector<24x32xf32>
    %27 = arith.addf %25, %26 : vector<24x32xf32>
    %28 = arith.truncf %3 : vector<24x32xf32> to vector<24x32xbf16>
    %cst_27 = arith.constant dense<0.000000e+00> : vector<24x32xf32>
    %29 = tpu.matmul %28, %9, %cst_27 {dimension_numbers = #tpu.dot_dimension_numbers<[1], [0], [0], [1], [0, 0, 1, 1], [], []>} : vector<24x32xbf16>, vector<32x32xbf16>, vector<24x32xf32> -> vector<24x32xf32>
    %30 = vector.broadcast %17 : vector<1x32xf32> to vector<24x32xf32>
    %31 = arith.addf %29, %30 : vector<24x32xf32>
    %32 = vector.shape_cast %23 : vector<24x32xf32> to vector<1x24x32xf32>
    %33 = vector.shape_cast %27 : vector<24x32xf32> to vector<1x24x32xf32>
    %34 = vector.shape_cast %31 : vector<24x32xf32> to vector<1x24x32xf32>
    %c0_28 = arith.constant 0 : index
    %c0_29 = arith.constant 0 : index
    %35 = vector.load %arg3[%c0_28, %c0_29] : memref<24x24xf32, #tpu.memory_space<vmem>>, vector<24x24xf32>
    %36 = vector.extract_strided_slice %32 {offsets = [0, 0, 0], sizes = [1, 24, 16], strides = [1, 1, 1]} : vector<1x24x32xf32> to vector<1x24x16xf32>
    %37 = vector.extract_strided_slice %33 {offsets = [0, 0, 0], sizes = [1, 24, 16], strides = [1, 1, 1]} : vector<1x24x32xf32> to vector<1x24x16xf32>
    %38 = vector.extract_strided_slice %34 {offsets = [0, 0, 0], sizes = [1, 24, 16], strides = [1, 1, 1]} : vector<1x24x32xf32> to vector<1x24x16xf32>
    %39 = arith.truncf %36 : vector<1x24x16xf32> to vector<1x24x16xbf16>
    %40 = arith.truncf %37 : vector<1x24x16xf32> to vector<1x24x16xbf16>
    "tpu.trace_start"() <{level = 10 : i32, message = "bqd,bkd->bqk"}> : () -> ()
    %cst_30 = arith.constant dense<0.000000e+00> : vector<1x24x24xf32>
    %41 = tpu.matmul %39, %40, %cst_30 {dimension_numbers = #tpu.dot_dimension_numbers<[2], [2], [1], [1], [0, 0, 0, 1, 1, 1], [0], [0]>} : vector<1x24x16xbf16>, vector<1x24x16xbf16>, vector<1x24x24xf32> -> vector<1x24x24xf32>
    "tpu.trace_stop"() : () -> ()
    %cst_31 = arith.constant 2.500000e-01 : f32
    %42 = vector.broadcast %cst_31 : f32 to vector<1x24x24xf32>
    %43 = arith.mulf %41, %42 : vector<1x24x24xf32>
    %44 = vector.shape_cast %35 : vector<24x24xf32> to vector<1x24x24xf32>
    %45 = arith.addf %43, %44 : vector<1x24x24xf32>
    %cst_32 = arith.constant dense<0xFF800000> : vector<1x24xf32>
    %46 = vector.multi_reduction <maximumf>, %45, %cst_32 [2] : vector<1x24x24xf32> to vector<1x24xf32>
    %47 = vector.shape_cast %46 : vector<1x24xf32> to vector<1x24x1xf32>
    %48 = vector.broadcast %47 : vector<1x24x1xf32> to vector<1x24x24xf32>
    %49 = arith.subf %45, %48 : vector<1x24x24xf32>
    %50 = math.exp %49 : vector<1x24x24xf32>
    %cst_33 = arith.constant dense<0.000000e+00> : vector<1x24xf32>
    %51 = vector.multi_reduction <add>, %50, %cst_33 [2] : vector<1x24x24xf32> to vector<1x24xf32>
    %52 = vector.shape_cast %51 : vector<1x24xf32> to vector<1x24x1xf32>
    %53 = tpu.reciprocal %52 {approx = true} : vector<1x24x1xf32> -> vector<1x24x1xf32>
    %54 = vector.broadcast %53 : vector<1x24x1xf32> to vector<1x24x24xf32>
    %55 = arith.mulf %50, %54 : vector<1x24x24xf32>
    %56 = arith.truncf %55 : vector<1x24x24xf32> to vector<1x24x24xbf16>
    %57 = arith.truncf %38 : vector<1x24x16xf32> to vector<1x24x16xbf16>
    "tpu.trace_start"() <{level = 10 : i32, message = "bqk,bkd->bqd"}> : () -> ()
    %cst_34 = arith.constant dense<0.000000e+00> : vector<1x24x16xf32>
    %58 = tpu.matmul %56, %57, %cst_34 {dimension_numbers = #tpu.dot_dimension_numbers<[2], [1], [1], [2], [0, 0, 0, 1, 1, 2], [0], [0]>} : vector<1x24x24xbf16>, vector<1x24x16xbf16>, vector<1x24x16xf32> -> vector<1x24x16xf32>
    "tpu.trace_stop"() : () -> ()
    %59 = vector.shape_cast %58 : vector<1x24x16xf32> to vector<24x16xf32>
    %60 = vector.extract_strided_slice %32 {offsets = [0, 0, 16], sizes = [1, 24, 16], strides = [1, 1, 1]} : vector<1x24x32xf32> to vector<1x24x16xf32>
    %61 = vector.extract_strided_slice %33 {offsets = [0, 0, 16], sizes = [1, 24, 16], strides = [1, 1, 1]} : vector<1x24x32xf32> to vector<1x24x16xf32>
    %62 = vector.extract_strided_slice %34 {offsets = [0, 0, 16], sizes = [1, 24, 16], strides = [1, 1, 1]} : vector<1x24x32xf32> to vector<1x24x16xf32>
    %63 = arith.truncf %60 : vector<1x24x16xf32> to vector<1x24x16xbf16>
    %64 = arith.truncf %61 : vector<1x24x16xf32> to vector<1x24x16xbf16>
    "tpu.trace_start"() <{level = 10 : i32, message = "bqd,bkd->bqk"}> : () -> ()
    %cst_35 = arith.constant dense<0.000000e+00> : vector<1x24x24xf32>
    %65 = tpu.matmul %63, %64, %cst_35 {dimension_numbers = #tpu.dot_dimension_numbers<[2], [2], [1], [1], [0, 0, 0, 1, 1, 1], [0], [0]>} : vector<1x24x16xbf16>, vector<1x24x16xbf16>, vector<1x24x24xf32> -> vector<1x24x24xf32>
    "tpu.trace_stop"() : () -> ()
    %cst_36 = arith.constant 2.500000e-01 : f32
    %66 = vector.broadcast %cst_36 : f32 to vector<1x24x24xf32>
    %67 = arith.mulf %65, %66 : vector<1x24x24xf32>
    %68 = vector.shape_cast %35 : vector<24x24xf32> to vector<1x24x24xf32>
    %69 = arith.addf %67, %68 : vector<1x24x24xf32>
    %cst_37 = arith.constant dense<0xFF800000> : vector<1x24xf32>
    %70 = vector.multi_reduction <maximumf>, %69, %cst_37 [2] : vector<1x24x24xf32> to vector<1x24xf32>
    %71 = vector.shape_cast %70 : vector<1x24xf32> to vector<1x24x1xf32>
    %72 = vector.broadcast %71 : vector<1x24x1xf32> to vector<1x24x24xf32>
    %73 = arith.subf %69, %72 : vector<1x24x24xf32>
    %74 = math.exp %73 : vector<1x24x24xf32>
    %cst_38 = arith.constant dense<0.000000e+00> : vector<1x24xf32>
    %75 = vector.multi_reduction <add>, %74, %cst_38 [2] : vector<1x24x24xf32> to vector<1x24xf32>
    %76 = vector.shape_cast %75 : vector<1x24xf32> to vector<1x24x1xf32>
    %77 = tpu.reciprocal %76 {approx = true} : vector<1x24x1xf32> -> vector<1x24x1xf32>
    %78 = vector.broadcast %77 : vector<1x24x1xf32> to vector<1x24x24xf32>
    %79 = arith.mulf %74, %78 : vector<1x24x24xf32>
    %80 = arith.truncf %79 : vector<1x24x24xf32> to vector<1x24x24xbf16>
    %81 = arith.truncf %62 : vector<1x24x16xf32> to vector<1x24x16xbf16>
    "tpu.trace_start"() <{level = 10 : i32, message = "bqk,bkd->bqd"}> : () -> ()
    %cst_39 = arith.constant dense<0.000000e+00> : vector<1x24x16xf32>
    %82 = tpu.matmul %80, %81, %cst_39 {dimension_numbers = #tpu.dot_dimension_numbers<[2], [1], [1], [2], [0, 0, 0, 1, 1, 2], [0], [0]>} : vector<1x24x24xbf16>, vector<1x24x16xbf16>, vector<1x24x16xf32> -> vector<1x24x16xf32>
    "tpu.trace_stop"() : () -> ()
    %83 = vector.shape_cast %82 : vector<1x24x16xf32> to vector<24x16xf32>
    %84 = tpu.concatenate %59, %83 in 1 : vector<24x16xf32>, vector<24x16xf32> -> vector<24x32xf32>
    %85 = arith.truncf %84 : vector<24x32xf32> to vector<24x32xbf16>
    %cst_40 = arith.constant dense<0.000000e+00> : vector<24x32xf32>
    %86 = tpu.matmul %85, %11, %cst_40 {dimension_numbers = #tpu.dot_dimension_numbers<[1], [0], [0], [1], [0, 0, 1, 1], [], []>} : vector<24x32xbf16>, vector<32x32xbf16>, vector<24x32xf32> -> vector<24x32xf32>
    %87 = vector.broadcast %19 : vector<1x32xf32> to vector<24x32xf32>
    %88 = arith.addf %86, %87 : vector<24x32xf32>
    %89 = arith.addf %3, %88 : vector<24x32xf32>
    %c0_41 = arith.constant 0 : index
    %c0_42 = arith.constant 0 : index
    %c0_43 = arith.constant 0 : index
    %90 = vector.load %arg12[%c0_41, %c0_42, %c0_43] : memref<1x1x32xf32, #tpu.memory_space<vmem>>, vector<1x1x32xf32>
    %91 = vector.shape_cast %90 : vector<1x1x32xf32> to vector<1x32xf32>
    %c0_44 = arith.constant 0 : index
    %c0_45 = arith.constant 0 : index
    %c0_46 = arith.constant 0 : index
    %92 = vector.load %arg13[%c0_44, %c0_45, %c0_46] : memref<1x1x32xf32, #tpu.memory_space<vmem>>, vector<1x1x32xf32>
    %93 = vector.shape_cast %92 : vector<1x1x32xf32> to vector<1x32xf32>
    %cst_47 = arith.constant dense<0.000000e+00> : vector<24xf32>
    %94 = vector.multi_reduction <add>, %89, %cst_47 [1] : vector<24x32xf32> to vector<24xf32>
    %95 = vector.shape_cast %94 : vector<24xf32> to vector<24x1xf32>
    %cst_48 = arith.constant 3.200000e+01 : f32
    %96 = vector.broadcast %cst_48 : f32 to vector<24x1xf32>
    %97 = arith.divf %95, %96 : vector<24x1xf32>
    %98 = vector.broadcast %97 : vector<24x1xf32> to vector<24x32xf32>
    %99 = arith.subf %89, %98 : vector<24x32xf32>
    %100 = arith.mulf %99, %99 : vector<24x32xf32>
    %cst_49 = arith.constant dense<0.000000e+00> : vector<24xf32>
    %101 = vector.multi_reduction <add>, %100, %cst_49 [1] : vector<24x32xf32> to vector<24xf32>
    %102 = vector.shape_cast %101 : vector<24xf32> to vector<24x1xf32>
    %cst_50 = arith.constant 3.200000e+01 : f32
    %103 = vector.broadcast %cst_50 : f32 to vector<24x1xf32>
    %104 = arith.divf %102, %103 : vector<24x1xf32>
    %105 = vector.broadcast %97 : vector<24x1xf32> to vector<24x32xf32>
    %106 = arith.subf %89, %105 : vector<24x32xf32>
    %cst_51 = arith.constant 9.99999974E-6 : f32
    %107 = vector.broadcast %cst_51 : f32 to vector<24x1xf32>
    %108 = arith.addf %104, %107 : vector<24x1xf32>
    %109 = math.rsqrt %108 : vector<24x1xf32>
    %110 = vector.broadcast %109 : vector<24x1xf32> to vector<24x32xf32>
    %111 = arith.mulf %106, %110 : vector<24x32xf32>
    %112 = vector.broadcast %91 : vector<1x32xf32> to vector<24x32xf32>
    %113 = arith.mulf %111, %112 : vector<24x32xf32>
    %114 = vector.broadcast %93 : vector<1x32xf32> to vector<24x32xf32>
    %115 = arith.addf %113, %114 : vector<24x32xf32>
    %c0_52 = arith.constant 0 : index
    %c0_53 = arith.constant 0 : index
    %c0_54 = arith.constant 0 : index
    %116 = vector.load %arg14[%c0_52, %c0_53, %c0_54] : memref<1x32x128xbf16, #tpu.memory_space<vmem>>, vector<1x32x128xbf16>
    %117 = vector.shape_cast %116 : vector<1x32x128xbf16> to vector<32x128xbf16>
    %118 = arith.truncf %115 : vector<24x32xf32> to vector<24x32xbf16>
    %cst_55 = arith.constant dense<0.000000e+00> : vector<24x128xf32>
    %119 = tpu.matmul %118, %117, %cst_55 {dimension_numbers = #tpu.dot_dimension_numbers<[1], [0], [0], [1], [0, 0, 1, 1], [], []>} : vector<24x32xbf16>, vector<32x128xbf16>, vector<24x128xf32> -> vector<24x128xf32>
    %c0_56 = arith.constant 0 : index
    %c0_57 = arith.constant 0 : index
    %c0_58 = arith.constant 0 : index
    %120 = vector.load %arg15[%c0_56, %c0_57, %c0_58] : memref<1x1x128xf32, #tpu.memory_space<vmem>>, vector<1x1x128xf32>
    %121 = vector.shape_cast %120 : vector<1x1x128xf32> to vector<1x128xf32>
    %122 = vector.broadcast %121 : vector<1x128xf32> to vector<24x128xf32>
    %123 = arith.addf %119, %122 : vector<24x128xf32>
    %cst_59 = arith.constant 5.000000e-01 : f32
    %124 = vector.broadcast %cst_59 : f32 to vector<24x128xf32>
    %125 = arith.mulf %124, %123 : vector<24x128xf32>
    %cst_60 = arith.constant 4.471500e-02 : f32
    %126 = vector.broadcast %cst_60 : f32 to vector<24x128xf32>
    %127 = arith.mulf %126, %123 : vector<24x128xf32>
    %128 = arith.mulf %127, %123 : vector<24x128xf32>
    %129 = arith.mulf %128, %123 : vector<24x128xf32>
    %130 = arith.addf %123, %129 : vector<24x128xf32>
    %cst_61 = arith.constant 0.797884583 : f32
    %131 = vector.broadcast %cst_61 : f32 to vector<24x128xf32>
    %132 = arith.mulf %131, %130 : vector<24x128xf32>
    %133 = math.tanh %132 : vector<24x128xf32>
    %cst_62 = arith.constant 1.000000e+00 : f32
    %134 = vector.broadcast %cst_62 : f32 to vector<24x128xf32>
    %135 = arith.addf %134, %133 : vector<24x128xf32>
    %136 = arith.mulf %125, %135 : vector<24x128xf32>
    %c0_63 = arith.constant 0 : index
    %c0_64 = arith.constant 0 : index
    %c0_65 = arith.constant 0 : index
    %137 = vector.load %arg16[%c0_63, %c0_64, %c0_65] : memref<1x128x32xbf16, #tpu.memory_space<vmem>>, vector<1x128x32xbf16>
    %138 = vector.shape_cast %137 : vector<1x128x32xbf16> to vector<128x32xbf16>
    %139 = arith.truncf %136 : vector<24x128xf32> to vector<24x128xbf16>
    %cst_66 = arith.constant dense<0.000000e+00> : vector<24x32xf32>
    %140 = tpu.matmul %139, %138, %cst_66 {dimension_numbers = #tpu.dot_dimension_numbers<[1], [0], [0], [1], [0, 0, 1, 1], [], []>} : vector<24x128xbf16>, vector<128x32xbf16>, vector<24x32xf32> -> vector<24x32xf32>
    %c0_67 = arith.constant 0 : index
    %c0_68 = arith.constant 0 : index
    %c0_69 = arith.constant 0 : index
    %141 = vector.load %arg17[%c0_67, %c0_68, %c0_69] : memref<1x1x32xf32, #tpu.memory_space<vmem>>, vector<1x1x32xf32>
    %142 = vector.shape_cast %141 : vector<1x1x32xf32> to vector<1x32xf32>
    %143 = vector.broadcast %142 : vector<1x32xf32> to vector<24x32xf32>
    %144 = arith.addf %140, %143 : vector<24x32xf32>
    %145 = arith.addf %115, %144 : vector<24x32xf32>
    %c0_70 = arith.constant 0 : index
    %c0_71 = arith.constant 0 : index
    %c0_72 = arith.constant 0 : index
    %146 = vector.load %arg18[%c0_70, %c0_71, %c0_72] : memref<1x1x32xf32, #tpu.memory_space<vmem>>, vector<1x1x32xf32>
    %147 = vector.shape_cast %146 : vector<1x1x32xf32> to vector<1x32xf32>
    %c0_73 = arith.constant 0 : index
    %c0_74 = arith.constant 0 : index
    %c0_75 = arith.constant 0 : index
    %148 = vector.load %arg19[%c0_73, %c0_74, %c0_75] : memref<1x1x32xf32, #tpu.memory_space<vmem>>, vector<1x1x32xf32>
    %149 = vector.shape_cast %148 : vector<1x1x32xf32> to vector<1x32xf32>
    %cst_76 = arith.constant dense<0.000000e+00> : vector<24xf32>
    %150 = vector.multi_reduction <add>, %145, %cst_76 [1] : vector<24x32xf32> to vector<24xf32>
    %151 = vector.shape_cast %150 : vector<24xf32> to vector<24x1xf32>
    %cst_77 = arith.constant 3.200000e+01 : f32
    %152 = vector.broadcast %cst_77 : f32 to vector<24x1xf32>
    %153 = arith.divf %151, %152 : vector<24x1xf32>
    %154 = vector.broadcast %153 : vector<24x1xf32> to vector<24x32xf32>
    %155 = arith.subf %145, %154 : vector<24x32xf32>
    %156 = arith.mulf %155, %155 : vector<24x32xf32>
    %cst_78 = arith.constant dense<0.000000e+00> : vector<24xf32>
    %157 = vector.multi_reduction <add>, %156, %cst_78 [1] : vector<24x32xf32> to vector<24xf32>
    %158 = vector.shape_cast %157 : vector<24xf32> to vector<24x1xf32>
    %cst_79 = arith.constant 3.200000e+01 : f32
    %159 = vector.broadcast %cst_79 : f32 to vector<24x1xf32>
    %160 = arith.divf %158, %159 : vector<24x1xf32>
    %161 = vector.broadcast %153 : vector<24x1xf32> to vector<24x32xf32>
    %162 = arith.subf %145, %161 : vector<24x32xf32>
    %cst_80 = arith.constant 9.99999974E-6 : f32
    %163 = vector.broadcast %cst_80 : f32 to vector<24x1xf32>
    %164 = arith.addf %160, %163 : vector<24x1xf32>
    %165 = math.rsqrt %164 : vector<24x1xf32>
    %166 = vector.broadcast %165 : vector<24x1xf32> to vector<24x32xf32>
    %167 = arith.mulf %162, %166 : vector<24x32xf32>
    %168 = vector.broadcast %147 : vector<1x32xf32> to vector<24x32xf32>
    %169 = arith.mulf %167, %168 : vector<24x32xf32>
    %170 = vector.broadcast %149 : vector<1x32xf32> to vector<24x32xf32>
    %171 = arith.addf %169, %170 : vector<24x32xf32>
    %c0_81 = arith.constant 0 : index
    %c0_82 = arith.constant 0 : index
    %172 = vector.load %arg20[%c0_81, %c0_82] : memref<24x32xf32, #tpu.memory_space<vmem>>, vector<24x32xf32>
    tpu.vector_store %arg20[%c0_81, %c0_82], %171 {strides = array<i32>} : memref<24x32xf32, #tpu.memory_space<vmem>>, vector<24x32xf32>,
    return
  }
  func.func @transform_0(%arg0: i32, %arg1: i32) -> (i32, i32) {
    %c0_i32 = arith.constant 0 : i32
    %c0_i32_0 = arith.constant 0 : i32
    return %arg0, %c0_i32 : i32, i32
  }
  func.func @transform_1(%arg0: i32, %arg1: i32) -> (i32, i32) {
    %c0_i32 = arith.constant 0 : i32
    %c0_i32_0 = arith.constant 0 : i32
    %c0_i32_1 = arith.constant 0 : i32
    return %c0_i32, %c0_i32_0 : i32, i32
  }
  func.func @transform_2(%arg0: i32, %arg1: i32) -> (i32, i32, i32) {
    %c0_i32 = arith.constant 0 : i32
    %c0_i32_0 = arith.constant 0 : i32
    %c0_i32_1 = arith.constant 0 : i32
    return %arg1, %c0_i32, %c0_i32_0 : i32, i32, i32
  }
  func.func @transform_3(%arg0: i32, %arg1: i32) -> (i32, i32, i32) {
    %c0_i32 = arith.constant 0 : i32
    %c0_i32_0 = arith.constant 0 : i32
    %c0_i32_1 = arith.constant 0 : i32
    return %arg1, %c0_i32, %c0_i32_0 : i32, i32, i32
  }
  func.func @transform_4(%arg0: i32, %arg1: i32) -> (i32, i32, i32) {
    %c0_i32 = arith.constant 0 : i32
    %c0_i32_0 = arith.constant 0 : i32
    %c0_i32_1 = arith.constant 0 : i32
    return %arg1, %c0_i32, %c0_i32_0 : i32, i32, i32
  }
  func.func @transform_5(%arg0: i32, %arg1: i32) -> (i32, i32, i32) {
    %c0_i32 = arith.constant 0 : i32
    %c0_i32_0 = arith.constant 0 : i32
    %c0_i32_1 = arith.constant 0 : i32
    return %arg1, %c0_i32, %c0_i32_0 : i32, i32, i32
  }
  func.func @transform_6(%arg0: i32, %arg1: i32) -> (i32, i32, i32) {
    %c0_i32 = arith.constant 0 : i32
    %c0_i32_0 = arith.constant 0 : i32
    %c0_i32_1 = arith.constant 0 : i32
    return %arg1, %c0_i32, %c0_i32_0 : i32, i32, i32
  }
  func.func @transform_7(%arg0: i32, %arg1: i32) -> (i32, i32, i32) {
    %c0_i32 = arith.constant 0 : i32
    %c0_i32_0 = arith.constant 0 : i32
    %c0_i32_1 = arith.constant 0 : i32
    return %arg1, %c0_i32, %c0_i32_0 : i32, i32, i32
  }
  func.func @transform_8(%arg0: i32, %arg1: i32) -> (i32, i32, i32) {
    %c0_i32 = arith.constant 0 : i32
    %c0_i32_0 = arith.constant 0 : i32
    %c0_i32_1 = arith.constant 0 : i32
    return %arg1, %c0_i32, %c0_i32_0 : i32, i32, i32
  }
  func.func @transform_9(%arg0: i32, %arg1: i32) -> (i32, i32, i32) {
    %c0_i32 = arith.constant 0 : i32
    %c0_i32_0 = arith.constant 0 : i32
    %c0_i32_1 = arith.constant 0 : i32
    return %arg1, %c0_i32, %c0_i32_0 : i32, i32, i32
  }
  func.func @transform_10(%arg0: i32, %arg1: i32) -> (i32, i32, i32) {
    %c0_i32 = arith.constant 0 : i32
    %c0_i32_0 = arith.constant 0 : i32
    %c0_i32_1 = arith.constant 0 : i32
    return %arg1, %c0_i32, %c0_i32_0 : i32, i32, i32
  }
  func.func @transform_11(%arg0: i32, %arg1: i32) -> (i32, i32, i32) {
    %c0_i32 = arith.constant 0 : i32
    %c0_i32_0 = arith.constant 0 : i32
    %c0_i32_1 = arith.constant 0 : i32
    return %arg1, %c0_i32, %c0_i32_0 : i32, i32, i32
  }
  func.func @transform_12(%arg0: i32, %arg1: i32) -> (i32, i32, i32) {
    %c0_i32 = arith.constant 0 : i32
    %c0_i32_0 = arith.constant 0 : i32
    %c0_i32_1 = arith.constant 0 : i32
    return %arg1, %c0_i32, %c0_i32_0 : i32, i32, i32
  }
  func.func @transform_13(%arg0: i32, %arg1: i32) -> (i32, i32, i32) {
    %c0_i32 = arith.constant 0 : i32
    %c0_i32_0 = arith.constant 0 : i32
    %c0_i32_1 = arith.constant 0 : i32
    return %arg1, %c0_i32, %c0_i32_0 : i32, i32, i32
  }
  func.func @transform_14(%arg0: i32, %arg1: i32) -> (i32, i32, i32) {
    %c0_i32 = arith.constant 0 : i32
    %c0_i32_0 = arith.constant 0 : i32
    %c0_i32_1 = arith.constant 0 : i32
    return %arg1, %c0_i32, %c0_i32_0 : i32, i32, i32
  }
  func.func @transform_15(%arg0: i32, %arg1: i32) -> (i32, i32, i32) {
    %c0_i32 = arith.constant 0 : i32
    %c0_i32_0 = arith.constant 0 : i32
    %c0_i32_1 = arith.constant 0 : i32
    return %arg1, %c0_i32, %c0_i32_0 : i32, i32, i32
  }
  func.func @transform_16(%arg0: i32, %arg1: i32) -> (i32, i32, i32) {
    %c0_i32 = arith.constant 0 : i32
    %c0_i32_0 = arith.constant 0 : i32
    %c0_i32_1 = arith.constant 0 : i32
    return %arg1, %c0_i32, %c0_i32_0 : i32, i32, i32
  }
  func.func @transform_17(%arg0: i32, %arg1: i32) -> (i32, i32, i32) {
    %c0_i32 = arith.constant 0 : i32
    %c0_i32_0 = arith.constant 0 : i32
    %c0_i32_1 = arith.constant 0 : i32
    return %arg1, %c0_i32, %c0_i32_0 : i32, i32, i32
  }
  func.func @transform_18(%arg0: i32, %arg1: i32) -> (i32, i32) {
    %c0_i32 = arith.constant 0 : i32
    %c0_i32_0 = arith.constant 0 : i32
    return %arg0, %c0_i32 : i32, i32
  }
}

</mosaic_0001>

<llo_original>
// kernel: decision_transformer_forward.5
$region0: #{decision_transformer_forward.5}
  #allocation0 [shape = 'u32[]', space=smem, size = 0x4, offset = 0x4, fixed_abs, tag = 'smem constant byte address 0x4 - core index']
  #allocation1 [shape = 'u32[72,128]{1,0:T(1,128)}', space=vmem, size = 0x9000, scoped, tag = 'internal scratch']
  %s0 = inlined_call_operand.vmem [shape: f32[2,3,8,32], index: 0, kind: input, shape index: {}, may-alias: {0,1}]
  %s1 = inlined_call_operand.vmem [shape: f32[2,3,8,32], index: 1, kind: input, shape index: {}, may-alias: {0,1}]
  %s2 = inlined_call_operand.vmem [shape: bf16[32,128], index: 2, kind: input, shape index: {}]
  %s3 = inlined_call_operand.vmem [shape: f32[1,128], index: 3, kind: input, shape index: {}]
  %s4 = inlined_call_operand.vmem [shape: bf16[32,128], index: 4, kind: input, shape index: {}]
  %s5 = inlined_call_operand.vmem [shape: f32[1,128], index: 5, kind: input, shape index: {}]
  %s6 = inlined_call_operand.vmem [shape: f32[2,8,128], index: 6, kind: output, shape index: {0}]
  %s7 = inlined_call_operand.vmem [shape: f32[2,8,128], index: 7, kind: output, shape index: {1}]
  %8 = xla_tuple %s6, %s7
  %s9 = sld [smem:[#allocation0]]
  $region65: #{decision_transformer_forward.5} parent=0
    _
  %s11 = ssub.s32 1, %s9
  %s12 = scalar_select 0, %s11, %s9
  loop: start=0, step=1, limit=4
  $region2: #{decision_transformer_forward.5} parent=0 // loop_pre_header
    _
  $region3: #{decision_transformer_forward.5} parent=0 // loop_header
    %s14 = sphi 0, %s18
    %p15 = scmp.ge.s32.totalorder %s14, 4
    %s24 = sphi 0, %s26
    %s27 = sphi 0, %s24
    %s28 = sphi 0, %s27
    %s44 = sphi 0, %s28
    %s50 = sphi 0, %s52
    %s53 = sphi 0, %s50
    %s54 = sphi 0, %s53
    %s70 = sphi 0, %s54
    %s74 = sphi 0, %s74
    %s76 = sphi 0, %s74
    %s77 = sphi 0, %s76
    %s91 = sphi 0, %s77
    %s95 = sphi 0, %s95
    %s97 = sphi 0, %s95
    %s98 = sphi 0, %s97
    %s112 = sphi 0, %s98
    %s116 = sphi 0, %s116
    %s118 = sphi 0, %s116
    %s119 = sphi 0, %s118
    %s133 = sphi 0, %s119
    %s137 = sphi 0, %s137
    %s139 = sphi 0, %s137
    %s140 = sphi 0, %s139
    %s154 = sphi 0, %s140
    %s160 = sphi 0, %s162
    %s163 = sphi 0, %s160
    %s164 = sphi 0, %s163
    %s180 = sphi 0, %s164
    %s186 = sphi 0, %s188
    %s189 = sphi 0, %s186
    %s190 = sphi 0, %s189
    %s206 = sphi 0, %s190
  $region4: #{decision_transformer_forward.5} parent=0 // loop_header_branch
    %17 = sbr.rel (%p15) target = $region8
  $region5: #{decision_transformer_forward.5} parent=0 // loop_body
    %s19 = ssub.s32 %s14, 1
    %s20 = ssub.s32 %s14, 2
    %s21 = sadd.s32 %s14, 1
    %s22 = ssub.s32 %s14, %s21
    %p23 = scmp.eq.s32.totalorder %s22, 0
    %s25 = sadd.s32 %s24, 1
    %s26 = scalar_select %p23, %s24, %s25
    %p29 = pneg %p23
    %p30 = scmp.eq.s32.totalorder %s14, 1
    %p31 = por %p29, %p30
    %p32 = scmp.ne.s32.totalorder %s24, %s27
    %p33 = scmp.eq.s32.totalorder %s14, 0
    %p34 = por %p32, %p33
    %p35 = scmp.ne.s32.totalorder %s24, %s27
    %p36 = scmp.eq.s32.totalorder %s19, 1
    %p37 = por %p35, %p36
    %p38 = scmp.ne.s32.totalorder %s27, %s28
    %p39 = scmp.eq.s32.totalorder %s19, 0
    %p40 = por %p38, %p39
    %p41 = scmp.ne.s32.totalorder %s27, %s28
    %p42 = scmp.eq.s32.totalorder %s20, 1
    %p43 = por %p41, %p42
    %p45 = scmp.ne.s32.totalorder %s28, %s44
    %p46 = scmp.eq.s32.totalorder %s20, 0
    %p47 = por %p45, %p46
    %s48 = ssub.s32 %s14, %s21
    %p49 = scmp.eq.s32.totalorder %s48, 0
    %s51 = sadd.s32 %s50, 1
    %s52 = scalar_select %p49, %s50, %s51
    %p55 = pneg %p49
    %p56 = scmp.eq.s32.totalorder %s14, 1
    %p57 = por %p55, %p56
    %p58 = scmp.ne.s32.totalorder %s50, %s53
    %p59 = scmp.eq.s32.totalorder %s14, 0
    %p60 = por %p58, %p59
    %p61 = scmp.ne.s32.totalorder %s50, %s53
    %p62 = scmp.eq.s32.totalorder %s19, 1
    %p63 = por %p61, %p62
    %p64 = scmp.ne.s32.totalorder %s53, %s54
    %p65 = scmp.eq.s32.totalorder %s19, 0
    %p66 = por %p64, %p65
    %p67 = scmp.ne.s32.totalorder %s53, %s54
    %p68 = scmp.eq.s32.totalorder %s20, 1
    %p69 = por %p67, %p68
    %p71 = scmp.ne.s32.totalorder %s54, %s70
    %p72 = scmp.eq.s32.totalorder %s20, 0
    %p73 = por %p71, %p72
    %s75 = sadd.s32 %s74, 1
    %p78 = scmp.eq.s32.totalorder %s14, 1
    %p79 = scmp.ne.s32.totalorder %s74, %s76
    %p80 = scmp.eq.s32.totalorder %s14, 0
    %p81 = por %p79, %p80
    %p82 = scmp.ne.s32.totalorder %s74, %s76
    %p83 = scmp.eq.s32.totalorder %s19, 1
    %p84 = por %p82, %p83
    %p85 = scmp.ne.s32.totalorder %s76, %s77
    %p86 = scmp.eq.s32.totalorder %s19, 0
    %p87 = por %p85, %p86
    %p88 = scmp.ne.s32.totalorder %s76, %s77
    %p89 = scmp.eq.s32.totalorder %s20, 1
    %p90 = por %p88, %p89
    %p92 = scmp.ne.s32.totalorder %s77, %s91
    %p93 = scmp.eq.s32.totalorder %s20, 0
    %p94 = por %p92, %p93
    %s96 = sadd.s32 %s95, 1
    %p99 = scmp.eq.s32.totalorder %s14, 1
    %p100 = scmp.ne.s32.totalorder %s95, %s97
    %p101 = scmp.eq.s32.totalorder %s14, 0
    %p102 = por %p100, %p101
    %p103 = scmp.ne.s32.totalorder %s95, %s97
    %p104 = scmp.eq.s32.totalorder %s19, 1
    %p105 = por %p103, %p104
    %p106 = scmp.ne.s32.totalorder %s97, %s98
    %p107 = scmp.eq.s32.totalorder %s19, 0
    %p108 = por %p106, %p107
    %p109 = scmp.ne.s32.totalorder %s97, %s98
    %p110 = scmp.eq.s32.totalorder %s20, 1
    %p111 = por %p109, %p110
    %p113 = scmp.ne.s32.totalorder %s98, %s112
    %p114 = scmp.eq.s32.totalorder %s20, 0
    %p115 = por %p113, %p114
    %s117 = sadd.s32 %s116, 1
    %p120 = scmp.eq.s32.totalorder %s14, 1
    %p121 = scmp.ne.s32.totalorder %s116, %s118
    %p122 = scmp.eq.s32.totalorder %s14, 0
    %p123 = por %p121, %p122
    %p124 = scmp.ne.s32.totalorder %s116, %s118
    %p125 = scmp.eq.s32.totalorder %s19, 1
    %p126 = por %p124, %p125
    %p127 = scmp.ne.s32.totalorder %s118, %s119
    %p128 = scmp.eq.s32.totalorder %s19, 0
    %p129 = por %p127, %p128
    %p130 = scmp.ne.s32.totalorder %s118, %s119
    %p131 = scmp.eq.s32.totalorder %s20, 1
    %p132 = por %p130, %p131
    %p134 = scmp.ne.s32.totalorder %s119, %s133
    %p135 = scmp.eq.s32.totalorder %s20, 0
    %p136 = por %p134, %p135
    %s138 = sadd.s32 %s137, 1
    %p141 = scmp.eq.s32.totalorder %s14, 1
    %p142 = scmp.ne.s32.totalorder %s137, %s139
    %p143 = scmp.eq.s32.totalorder %s14, 0
    %p144 = por %p142, %p143
    %p145 = scmp.ne.s32.totalorder %s137, %s139
    %p146 = scmp.eq.s32.totalorder %s19, 1
    %p147 = por %p145, %p146
    %p148 = scmp.ne.s32.totalorder %s139, %s140
    %p149 = scmp.eq.s32.totalorder %s19, 0
    %p150 = por %p148, %p149
    %p151 = scmp.ne.s32.totalorder %s139, %s140
    %p152 = scmp.eq.s32.totalorder %s20, 1
    %p153 = por %p151, %p152
    %p155 = scmp.ne.s32.totalorder %s140, %s154
    %p156 = scmp.eq.s32.totalorder %s20, 0
    %p157 = por %p155, %p156
    %s158 = ssub.s32 %s14, %s21
    %p159 = scmp.eq.s32.totalorder %s158, 0
    %s161 = sadd.s32 %s160, 1
    %s162 = scalar_select %p159, %s160, %s161
    %p165 = pneg %p159
    %p166 = scmp.eq.s32.totalorder %s14, 1
    %p167 = por %p165, %p166
    %p168 = scmp.ne.s32.totalorder %s160, %s163
    %p169 = scmp.eq.s32.totalorder %s14, 0
    %p170 = por %p168, %p169
    %p171 = scmp.ne.s32.totalorder %s160, %s163
    %p172 = scmp.eq.s32.totalorder %s19, 1
    %p173 = por %p171, %p172
    %p174 = scmp.ne.s32.totalorder %s163, %s164
    %p175 = scmp.eq.s32.totalorder %s19, 0
    %p176 = por %p174, %p175
    %p177 = scmp.ne.s32.totalorder %s163, %s164
    %p178 = scmp.eq.s32.totalorder %s20, 1
    %p179 = por %p177, %p178
    %p181 = scmp.ne.s32.totalorder %s164, %s180
    %p182 = scmp.eq.s32.totalorder %s20, 0
    %p183 = por %p181, %p182
    %s184 = ssub.s32 %s14, %s21
    %p185 = scmp.eq.s32.totalorder %s184, 0
    %s187 = sadd.s32 %s186, 1
    %s188 = scalar_select %p185, %s186, %s187
    %p191 = pneg %p185
    %p192 = scmp.eq.s32.totalorder %s14, 1
    %p193 = por %p191, %p192
    %p194 = scmp.ne.s32.totalorder %s186, %s189
    %p195 = scmp.eq.s32.totalorder %s14, 0
    %p196 = por %p194, %p195
    %p197 = scmp.ne.s32.totalorder %s186, %s189
    %p198 = scmp.eq.s32.totalorder %s19, 1
    %p199 = por %p197, %p198
    %p200 = scmp.ne.s32.totalorder %s189, %s190
    %p201 = scmp.eq.s32.totalorder %s19, 0
    %p202 = por %p200, %p201
    %p203 = scmp.ne.s32.totalorder %s189, %s190
    %p204 = scmp.eq.s32.totalorder %s20, 1
    %p205 = por %p203, %p204
    %p207 = scmp.ne.s32.totalorder %s190, %s206
    %p208 = scmp.eq.s32.totalorder %s20, 0
    %p209 = por %p207, %p208
    %p210 = scmp.le.s32.totalorder 1, %s14
    %p211 = scmp.lt.s32.totalorder %s14, 3
    %p212 = pnand %p210, %p211
    %p213 = pneg %p212
    // Predicated region
    $region9: #{decision_transformer_forward.5} parent=5 // pred_check
      _
    $region10: #{decision_transformer_forward.5} parent=5 // pred_check_branch
      %215 = sbr.rel (%p212) target = $region12
    $region11: #{decision_transformer_forward.5} parent=5 // pred_region
      %s216 = ssub.s32 %s14, 1
      // Predicated region
      $region13: #{decision_transformer_forward.5} parent=11 // pred_check
        %p217 = pneg %p87
      $region14: #{decision_transformer_forward.5} parent=11 // pred_check_branch
        %219 = sbr.rel (%p217) target = $region16
      $region15: #{decision_transformer_forward.5} parent=11 // pred_region
        _
      $region16: #{decision_transformer_forward.5} parent=11 // pred_fallthru
        _
      // Predicated region
      $region17: #{decision_transformer_forward.5} parent=11 // pred_check
        %p220 = pneg %p108
      $region18: #{decision_transformer_forward.5} parent=11 // pred_check_branch
        %222 = sbr.rel (%p220) target = $region20
      $region19: #{decision_transformer_forward.5} parent=11 // pred_region
        _
      $region20: #{decision_transformer_forward.5} parent=11 // pred_fallthru
        _
      // Predicated region
      $region21: #{decision_transformer_forward.5} parent=11 // pred_check
        %p223 = pneg %p129
      $region22: #{decision_transformer_forward.5} parent=11 // pred_check_branch
        %225 = sbr.rel (%p223) target = $region24
      $region23: #{decision_transformer_forward.5} parent=11 // pred_region
        _
      $region24: #{decision_transformer_forward.5} parent=11 // pred_fallthru
        _
      // Predicated region
      $region25: #{decision_transformer_forward.5} parent=11 // pred_check
        %p226 = pneg %p150
      $region26: #{decision_transformer_forward.5} parent=11 // pred_check_branch
        %228 = sbr.rel (%p226) target = $region28
      $region27: #{decision_transformer_forward.5} parent=11 // pred_region
        _
      $region28: #{decision_transformer_forward.5} parent=11 // pred_fallthru
        _
    $region12: #{decision_transformer_forward.5} parent=5 // pred_fallthru
      _
    %p229 = scmp.lt.s32.totalorder %s14, 2
    // Predicated region
    $region29: #{decision_transformer_forward.5} parent=5 // pred_check
      %p230 = pneg %p229
    $region30: #{decision_transformer_forward.5} parent=5 // pred_check_branch
      %232 = sbr.rel (%p230) target = $region32
    $region31: #{decision_transformer_forward.5} parent=5 // pred_region
      // Predicated region
      $region33: #{decision_transformer_forward.5} parent=31 // pred_check
        %p233 = pneg %p34
      $region34: #{decision_transformer_forward.5} parent=31 // pred_check_branch
        %235 = sbr.rel (%p233) target = $region36
      $region35: #{decision_transformer_forward.5} parent=31 // pred_region
        %p236 = scmp.lt.s32.totalorder %s14, 1
        %s237 = scalar_select %p236, %s14, 1
        %s238 = smul.addr %s237, 3
        %s239 = sadd.s32 2, %s238
        %s240 = smul.addr %s239, 8
        %s241 = scalar_lea.vmem %s0, %s240
      $region36: #{decision_transformer_forward.5} parent=31 // pred_fallthru
        _
      // Predicated region
      $region37: #{decision_transformer_forward.5} parent=31 // pred_check
        %p242 = pneg %p60
      $region38: #{decision_transformer_forward.5} parent=31 // pred_check_branch
        %244 = sbr.rel (%p242) target = $region40
      $region39: #{decision_transformer_forward.5} parent=31 // pred_region
        %p245 = scmp.lt.s32.totalorder %s14, 1
        %s246 = scalar_select %p245, %s14, 1
        %s247 = smul.addr %s246, 3
        %s248 = sadd.s32 1, %s247
        %s249 = smul.addr %s248, 8
        %s250 = scalar_lea.vmem %s1, %s249
      $region40: #{decision_transformer_forward.5} parent=31 // pred_fallthru
        _
    $region32: #{decision_transformer_forward.5} parent=5 // pred_fallthru
      _
    %p251 = scmp.le.s32.totalorder 1, %s14
    %p252 = scmp.lt.s32.totalorder %s14, 3
    %p253 = pnand %p251, %p252
    %p254 = pneg %p253
    // Predicated region
    $region41: #{decision_transformer_forward.5} parent=5 // pred_check
      _
    $region42: #{decision_transformer_forward.5} parent=5 // pred_check_branch
      %256 = sbr.rel (%p253) target = $region44
    $region43: #{decision_transformer_forward.5} parent=5 // pred_region
      %s257 = ssub.s32 %s14, 1
      %p258 = scmp.lt.s32.totalorder %s19, 1
      %s259 = scalar_select %p258, %s19, 1
      %s260 = smul.addr %s259, 3
      %s261 = sadd.s32 2, %s260
      %s262 = smul.addr %s261, 8
      %s263 = scalar_lea.vmem %s0, %s262
      %p264 = pneg %p40
      %p265 = pneg %p37
      %p266 = scmp.lt.s32.totalorder %s19, 1
      %s267 = scalar_select %p266, %s19, 1
      %s268 = smul.addr %s267, 3
      %s269 = sadd.s32 1, %s268
      %s270 = smul.addr %s269, 8
      %s271 = scalar_lea.vmem %s1, %s270
      %p272 = pneg %p66
      %p273 = pneg %p63
      %p274 = pneg %p87
      %p275 = pneg %p84
      %p276 = pneg %p108
      %p277 = pneg %p105
      %p278 = pneg %p129
      %p279 = pneg %p126
      %p280 = pneg %p150
      %p281 = pneg %p147
      %p282 = pneg %p176
      %p283 = pneg %p173
      %p284 = scmp.lt.s32.totalorder %s19, 1
      %s285 = scalar_select %p284, %s19, 1
      %s286 = smul.addr %s285, 8
      %s287 = scalar_lea.vmem %s6, %s286
      %p288 = pneg %p202
      %p289 = pneg %p199
      %p290 = scmp.lt.s32.totalorder %s19, 1
      %s291 = scalar_select %p290, %s19, 1
      %s292 = smul.addr %s291, 8
      %s293 = scalar_lea.vmem %s7, %s292
      %p294 = scmp.lt.s32.totalorder %s19, 1
      %s295 = scalar_select %p294, %s19, 1
      %s296 = smul.addr %s295, 3
      %s297 = sadd.s32 2, %s296
      %s298 = smul.addr %s297, 8
      %s299 = scalar_lea.vmem %s0, %s298
      %p300 = scmp.lt.s32.totalorder %s19, 1
      %s301 = scalar_select %p300, %s19, 1
      %s302 = smul.addr %s301, 3
      %s303 = sadd.s32 1, %s302
      %s304 = smul.addr %s303, 8
      %s305 = scalar_lea.vmem %s1, %s304
      %p306 = scmp.lt.s32.totalorder %s19, 1
      %s307 = scalar_select %p306, %s19, 1
      %s308 = smul.addr %s307, 8
      %s309 = scalar_lea.vmem %s6, %s308
      %p310 = scmp.lt.s32.totalorder %s19, 1
      %s311 = scalar_select %p310, %s19, 1
      %s312 = smul.addr %s311, 8
      %s313 = scalar_lea.vmem %s7, %s312
      %v315 = vld [vmem:[%s299] sm:$0xff]
      %v316 = vld [vmem:[%s2] sm:$0xf]
      %v317 = vld [vmem:[%s2 + $0x4] sm:$0xf]
      %v318 = vld [vmem:[%s2 + $0x8] sm:$0xf]
      %v319 = vld [vmem:[%s2 + $0xc] sm:$0xf]
      %v320 = vpack.c.bf16 %v315, %v315
      %v321 = vld [vmem:[%s3] sm:$0x1]
      %v323 = vperm.slane %v321, 0
      %v329 = vunpack.c.l.b16 %v316
      %v330 = vunpack.c.l.b16 %v317
      %v331 = vunpack.c.l.b16 %v318
      %v332 = vunpack.c.l.b16 %v319
      %v333 = vpack.c.b16 %v330, %v329
      %v334 = vpack.c.b16 %v332, %v331
      %vm337 = vcmask 261120
      %v339 = vsel %vm337, %v320, 0
      %341 = vmatpush.bf16.msra.mxu0 0
      %342 = vmatpush.bf16.msra.mxu0 0
      %343 = vmatpush.bf16.msra.mxu0 0
      %344 = vmatpush.bf16.msra.mxu0 0
      %345 = vmatpush.bf16.msra.mxu0 0
      %346 = vmatpush.bf16.msra.mxu0 0
      %347 = vmatpush.bf16.msra.mxu0 %v334
      %348 = vmatpush.bf16.msra.mxu0 %v333
      %349 = vmatmul.bf16.gmra.mxu0 %v339
      %v350 = vpop.f32.mrf.mxu0
      %v351 = vadd.f32 %v323, %v350
      %v352 = vpop.f32.mrf.mxu0
      %353 = vdwg.mxu0
      %354 = vst [vmem:[%s309] sm:$0xff] %v351
      %v355 = vld [vmem:[%s305] sm:$0xff]
      %v356 = vld [vmem:[%s4] sm:$0xf]
      %v357 = vld [vmem:[%s4 + $0x4] sm:$0xf]
      %v358 = vld [vmem:[%s4 + $0x8] sm:$0xf]
      %v359 = vld [vmem:[%s4 + $0xc] sm:$0xf]
      %v360 = vpack.c.bf16 %v355, %v355
      %v361 = vld [vmem:[%s5] sm:$0x1]
      %v363 = vperm.slane %v361, 0
      %v369 = vunpack.c.l.b16 %v356
      %v370 = vunpack.c.l.b16 %v357
      %v371 = vunpack.c.l.b16 %v358
      %v372 = vunpack.c.l.b16 %v359
      %v373 = vpack.c.b16 %v370, %v369
      %v374 = vpack.c.b16 %v372, %v371
      %v378 = vsel %vm337, %v360, 0
      %380 = vmatpush.bf16.msra.mxu0 0
      %381 = vmatpush.bf16.msra.mxu0 0
      %382 = vmatpush.bf16.msra.mxu0 0
      %383 = vmatpush.bf16.msra.mxu0 0
      %384 = vmatpush.bf16.msra.mxu0 0
      %385 = vmatpush.bf16.msra.mxu0 0
      %386 = vmatpush.bf16.msra.mxu0 %v374
      %387 = vmatpush.bf16.msra.mxu0 %v373
      %388 = vmatmul.bf16.gmra.mxu0 %v378
      %v389 = vpop.f32.mrf.mxu0
      %v390 = vadd.f32 %v363, %v389
      %v391 = vpop.f32.mrf.mxu0
      %392 = vdwg.mxu0
      %v393 = vtanh.pop %v390
      %394 = vst [vmem:[%s313] sm:$0xff] %v393
      %p395 = scmp.lt.s32.totalorder %s19, 1
      %s396 = scalar_select %p395, %s19, 1
      %s397 = smul.addr %s396, 8
      %s398 = scalar_lea.vmem %s6, %s397
      %p399 = scmp.lt.s32.totalorder %s19, 1
      %s400 = scalar_select %p399, %s19, 1
      %s401 = smul.addr %s400, 8
      %s402 = scalar_lea.vmem %s7, %s401
      // Predicated region
      $region45: #{decision_transformer_forward.5} parent=43 // pred_check
        %p403 = pneg %p173
      $region46: #{decision_transformer_forward.5} parent=43 // pred_check_branch
        %405 = sbr.rel (%p403) target = $region48
      $region47: #{decision_transformer_forward.5} parent=43 // pred_region
        _
      $region48: #{decision_transformer_forward.5} parent=43 // pred_fallthru
        _
      // Predicated region
      $region49: #{decision_transformer_forward.5} parent=43 // pred_check
        %p406 = pneg %p199
      $region50: #{decision_transformer_forward.5} parent=43 // pred_check_branch
        %408 = sbr.rel (%p406) target = $region52
      $region51: #{decision_transformer_forward.5} parent=43 // pred_region
        _
      $region52: #{decision_transformer_forward.5} parent=43 // pred_fallthru
        _
    $region44: #{decision_transformer_forward.5} parent=5 // pred_fallthru
      _
    %p409 = scmp.le.s32.totalorder 2, %s14
    // Predicated region
    $region53: #{decision_transformer_forward.5} parent=5 // pred_check
      %p410 = pneg %p409
    $region54: #{decision_transformer_forward.5} parent=5 // pred_check_branch
      %412 = sbr.rel (%p410) target = $region56
    $region55: #{decision_transformer_forward.5} parent=5 // pred_region
      %s413 = ssub.s32 %s14, 2
      // Predicated region
      $region57: #{decision_transformer_forward.5} parent=55 // pred_check
        %p414 = pneg %p179
      $region58: #{decision_transformer_forward.5} parent=55 // pred_check_branch
        %416 = sbr.rel (%p414) target = $region60
      $region59: #{decision_transformer_forward.5} parent=55 // pred_region
        %p417 = scmp.lt.s32.totalorder %s20, 1
        %s418 = scalar_select %p417, %s20, 1
        %s419 = smul.addr %s418, 8
        %s420 = scalar_lea.vmem %s6, %s419
      $region60: #{decision_transformer_forward.5} parent=55 // pred_fallthru
        _
      // Predicated region
      $region61: #{decision_transformer_forward.5} parent=55 // pred_check
        %p421 = pneg %p205
      $region62: #{decision_transformer_forward.5} parent=55 // pred_check_branch
        %423 = sbr.rel (%p421) target = $region64
      $region63: #{decision_transformer_forward.5} parent=55 // pred_region
        %p424 = scmp.lt.s32.totalorder %s20, 1
        %s425 = scalar_select %p424, %s20, 1
        %s426 = smul.addr %s425, 8
        %s427 = scalar_lea.vmem %s7, %s426
      $region64: #{decision_transformer_forward.5} parent=55 // pred_fallthru
        _
    $region56: #{decision_transformer_forward.5} parent=5 // pred_fallthru
      _
  $region6: #{decision_transformer_forward.5} parent=0 // loop_footer
    %s18 = sadd.s32 1, %s14
  $region7: #{decision_transformer_forward.5} parent=0 // loop_footer_branch
    %13 = sbr.rel target = $region3
  $region8: #{decision_transformer_forward.5} parent=0 // loop_exit
    _

// kernel: decision_transformer_forward.3
$region0: #{decision_transformer_forward.3}
  #allocation0 [shape = 'u32[]', space=smem, size = 0x4, offset = 0x4, fixed_abs, tag = 'smem constant byte address 0x4 - core index']
  #allocation1 [shape = 'u32[72,128]{1,0:T(1,128)}', space=vmem, size = 0x9000, scoped, tag = 'internal scratch']
  %s0 = inlined_call_operand.vmem [shape: f32[2,8,1], index: 0, kind: input, shape index: {}]
  %s1 = inlined_call_operand.vmem [shape: f32[2,8,6], index: 1, kind: input, shape index: {}]
  %s2 = inlined_call_operand.vmem [shape: f32[2,8,3], index: 2, kind: input, shape index: {}]
  %s3 = inlined_call_operand.vmem [shape: f32[2,8,32], index: 3, kind: input, shape index: {}]
  %s4 = inlined_call_operand.vmem [shape: f32[1,32], index: 4, kind: input, shape index: {}]
  %s5 = inlined_call_operand.vmem [shape: f32[1,32], index: 5, kind: input, shape index: {}]
  %s6 = inlined_call_operand.vmem [shape: bf16[6,32], index: 6, kind: input, shape index: {}]
  %s7 = inlined_call_operand.vmem [shape: f32[1,32], index: 7, kind: input, shape index: {}]
  %s8 = inlined_call_operand.vmem [shape: bf16[3,32], index: 8, kind: input, shape index: {}]
  %s9 = inlined_call_operand.vmem [shape: f32[1,32], index: 9, kind: input, shape index: {}]
  %s10 = inlined_call_operand.vmem [shape: f32[1,32], index: 10, kind: input, shape index: {}]
  %s11 = inlined_call_operand.vmem [shape: f32[1,32], index: 11, kind: input, shape index: {}]
  %s12 = inlined_call_operand.vmem [shape: f32[2,3,8,32], index: 12, kind: output, shape index: {}]
  %s13 = sld [smem:[#allocation0]]
  $region81: #{decision_transformer_forward.3} parent=0
    _
  %s15 = ssub.s32 1, %s13
  %s16 = scalar_select 0, %s15, %s13
  loop: start=0, step=1, limit=4
  $region2: #{decision_transformer_forward.3} parent=0 // loop_pre_header
    _
  $region3: #{decision_transformer_forward.3} parent=0 // loop_header
    %s18 = sphi 0, %s22
    %p19 = scmp.ge.s32.totalorder %s18, 4
    %s28 = sphi 0, %s30
    %s31 = sphi 0, %s28
    %s32 = sphi 0, %s31
    %s48 = sphi 0, %s32
    %s54 = sphi 0, %s56
    %s57 = sphi 0, %s54
    %s58 = sphi 0, %s57
    %s74 = sphi 0, %s58
    %s80 = sphi 0, %s82
    %s83 = sphi 0, %s80
    %s84 = sphi 0, %s83
    %s100 = sphi 0, %s84
    %s106 = sphi 0, %s108
    %s109 = sphi 0, %s106
    %s110 = sphi 0, %s109
    %s126 = sphi 0, %s110
    %s130 = sphi 0, %s130
    %s132 = sphi 0, %s130
    %s133 = sphi 0, %s132
    %s147 = sphi 0, %s133
    %s151 = sphi 0, %s151
    %s153 = sphi 0, %s151
    %s154 = sphi 0, %s153
    %s168 = sphi 0, %s154
    %s172 = sphi 0, %s172
    %s174 = sphi 0, %s172
    %s175 = sphi 0, %s174
    %s189 = sphi 0, %s175
    %s193 = sphi 0, %s193
    %s195 = sphi 0, %s193
    %s196 = sphi 0, %s195
    %s210 = sphi 0, %s196
    %s214 = sphi 0, %s214
    %s216 = sphi 0, %s214
    %s217 = sphi 0, %s216
    %s231 = sphi 0, %s217
    %s235 = sphi 0, %s235
    %s237 = sphi 0, %s235
    %s238 = sphi 0, %s237
    %s252 = sphi 0, %s238
    %s256 = sphi 0, %s256
    %s258 = sphi 0, %s256
    %s259 = sphi 0, %s258
    %s273 = sphi 0, %s259
    %s277 = sphi 0, %s277
    %s279 = sphi 0, %s277
    %s280 = sphi 0, %s279
    %s294 = sphi 0, %s280
    %s300 = sphi 0, %s302
    %s303 = sphi 0, %s300
    %s304 = sphi 0, %s303
    %s320 = sphi 0, %s304
  $region4: #{decision_transformer_forward.3} parent=0 // loop_header_branch
    %21 = sbr.rel (%p19) target = $region8
  $region5: #{decision_transformer_forward.3} parent=0 // loop_body
    %s23 = ssub.s32 %s18, 1
    %s24 = ssub.s32 %s18, 2
    %s25 = sadd.s32 %s18, 1
    %s26 = ssub.s32 %s18, %s25
    %p27 = scmp.eq.s32.totalorder %s26, 0
    %s29 = sadd.s32 %s28, 1
    %s30 = scalar_select %p27, %s28, %s29
    %p33 = pneg %p27
    %p34 = scmp.eq.s32.totalorder %s18, 1
    %p35 = por %p33, %p34
    %p36 = scmp.ne.s32.totalorder %s28, %s31
    %p37 = scmp.eq.s32.totalorder %s18, 0
    %p38 = por %p36, %p37
    %p39 = scmp.ne.s32.totalorder %s28, %s31
    %p40 = scmp.eq.s32.totalorder %s23, 1
    %p41 = por %p39, %p40
    %p42 = scmp.ne.s32.totalorder %s31, %s32
    %p43 = scmp.eq.s32.totalorder %s23, 0
    %p44 = por %p42, %p43
    %p45 = scmp.ne.s32.totalorder %s31, %s32
    %p46 = scmp.eq.s32.totalorder %s24, 1
    %p47 = por %p45, %p46
    %p49 = scmp.ne.s32.totalorder %s32, %s48
    %p50 = scmp.eq.s32.totalorder %s24, 0
    %p51 = por %p49, %p50
    %s52 = ssub.s32 %s18, %s25
    %p53 = scmp.eq.s32.totalorder %s52, 0
    %s55 = sadd.s32 %s54, 1
    %s56 = scalar_select %p53, %s54, %s55
    %p59 = pneg %p53
    %p60 = scmp.eq.s32.totalorder %s18, 1
    %p61 = por %p59, %p60
    %p62 = scmp.ne.s32.totalorder %s54, %s57
    %p63 = scmp.eq.s32.totalorder %s18, 0
    %p64 = por %p62, %p63
    %p65 = scmp.ne.s32.totalorder %s54, %s57
    %p66 = scmp.eq.s32.totalorder %s23, 1
    %p67 = por %p65, %p66
    %p68 = scmp.ne.s32.totalorder %s57, %s58
    %p69 = scmp.eq.s32.totalorder %s23, 0
    %p70 = por %p68, %p69
    %p71 = scmp.ne.s32.totalorder %s57, %s58
    %p72 = scmp.eq.s32.totalorder %s24, 1
    %p73 = por %p71, %p72
    %p75 = scmp.ne.s32.totalorder %s58, %s74
    %p76 = scmp.eq.s32.totalorder %s24, 0
    %p77 = por %p75, %p76
    %s78 = ssub.s32 %s18, %s25
    %p79 = scmp.eq.s32.totalorder %s78, 0
    %s81 = sadd.s32 %s80, 1
    %s82 = scalar_select %p79, %s80, %s81
    %p85 = pneg %p79
    %p86 = scmp.eq.s32.totalorder %s18, 1
    %p87 = por %p85, %p86
    %p88 = scmp.ne.s32.totalorder %s80, %s83
    %p89 = scmp.eq.s32.totalorder %s18, 0
    %p90 = por %p88, %p89
    %p91 = scmp.ne.s32.totalorder %s80, %s83
    %p92 = scmp.eq.s32.totalorder %s23, 1
    %p93 = por %p91, %p92
    %p94 = scmp.ne.s32.totalorder %s83, %s84
    %p95 = scmp.eq.s32.totalorder %s23, 0
    %p96 = por %p94, %p95
    %p97 = scmp.ne.s32.totalorder %s83, %s84
    %p98 = scmp.eq.s32.totalorder %s24, 1
    %p99 = por %p97, %p98
    %p101 = scmp.ne.s32.totalorder %s84, %s100
    %p102 = scmp.eq.s32.totalorder %s24, 0
    %p103 = por %p101, %p102
    %s104 = ssub.s32 %s18, %s25
    %p105 = scmp.eq.s32.totalorder %s104, 0
    %s107 = sadd.s32 %s106, 1
    %s108 = scalar_select %p105, %s106, %s107
    %p111 = pneg %p105
    %p112 = scmp.eq.s32.totalorder %s18, 1
    %p113 = por %p111, %p112
    %p114 = scmp.ne.s32.totalorder %s106, %s109
    %p115 = scmp.eq.s32.totalorder %s18, 0
    %p116 = por %p114, %p115
    %p117 = scmp.ne.s32.totalorder %s106, %s109
    %p118 = scmp.eq.s32.totalorder %s23, 1
    %p119 = por %p117, %p118
    %p120 = scmp.ne.s32.totalorder %s109, %s110
    %p121 = scmp.eq.s32.totalorder %s23, 0
    %p122 = por %p120, %p121
    %p123 = scmp.ne.s32.totalorder %s109, %s110
    %p124 = scmp.eq.s32.totalorder %s24, 1
    %p125 = por %p123, %p124
    %p127 = scmp.ne.s32.totalorder %s110, %s126
    %p128 = scmp.eq.s32.totalorder %s24, 0
    %p129 = por %p127, %p128
    %s131 = sadd.s32 %s130, 1
    %p134 = scmp.eq.s32.totalorder %s18, 1
    %p135 = scmp.ne.s32.totalorder %s130, %s132
    %p136 = scmp.eq.s32.totalorder %s18, 0
    %p137 = por %p135, %p136
    %p138 = scmp.ne.s32.totalorder %s130, %s132
    %p139 = scmp.eq.s32.totalorder %s23, 1
    %p140 = por %p138, %p139
    %p141 = scmp.ne.s32.totalorder %s132, %s133
    %p142 = scmp.eq.s32.totalorder %s23, 0
    %p143 = por %p141, %p142
    %p144 = scmp.ne.s32.totalorder %s132, %s133
    %p145 = scmp.eq.s32.totalorder %s24, 1
    %p146 = por %p144, %p145
    %p148 = scmp.ne.s32.totalorder %s133, %s147
    %p149 = scmp.eq.s32.totalorder %s24, 0
    %p150 = por %p148, %p149
    %s152 = sadd.s32 %s151, 1
    %p155 = scmp.eq.s32.totalorder %s18, 1
    %p156 = scmp.ne.s32.totalorder %s151, %s153
    %p157 = scmp.eq.s32.totalorder %s18, 0
    %p158 = por %p156, %p157
    %p159 = scmp.ne.s32.totalorder %s151, %s153
    %p160 = scmp.eq.s32.totalorder %s23, 1
    %p161 = por %p159, %p160
    %p162 = scmp.ne.s32.totalorder %s153, %s154
    %p163 = scmp.eq.s32.totalorder %s23, 0
    %p164 = por %p162, %p163
    %p165 = scmp.ne.s32.totalorder %s153, %s154
    %p166 = scmp.eq.s32.totalorder %s24, 1
    %p167 = por %p165, %p166
    %p169 = scmp.ne.s32.totalorder %s154, %s168
    %p170 = scmp.eq.s32.totalorder %s24, 0
    %p171 = por %p169, %p170
    %s173 = sadd.s32 %s172, 1
    %p176 = scmp.eq.s32.totalorder %s18, 1
    %p177 = scmp.ne.s32.totalorder %s172, %s174
    %p178 = scmp.eq.s32.totalorder %s18, 0
    %p179 = por %p177, %p178
    %p180 = scmp.ne.s32.totalorder %s172, %s174
    %p181 = scmp.eq.s32.totalorder %s23, 1
    %p182 = por %p180, %p181
    %p183 = scmp.ne.s32.totalorder %s174, %s175
    %p184 = scmp.eq.s32.totalorder %s23, 0
    %p185 = por %p183, %p184
    %p186 = scmp.ne.s32.totalorder %s174, %s175
    %p187 = scmp.eq.s32.totalorder %s24, 1
    %p188 = por %p186, %p187
    %p190 = scmp.ne.s32.totalorder %s175, %s189
    %p191 = scmp.eq.s32.totalorder %s24, 0
    %p192 = por %p190, %p191
    %s194 = sadd.s32 %s193, 1
    %p197 = scmp.eq.s32.totalorder %s18, 1
    %p198 = scmp.ne.s32.totalorder %s193, %s195
    %p199 = scmp.eq.s32.totalorder %s18, 0
    %p200 = por %p198, %p199
    %p201 = scmp.ne.s32.totalorder %s193, %s195
    %p202 = scmp.eq.s32.totalorder %s23, 1
    %p203 = por %p201, %p202
    %p204 = scmp.ne.s32.totalorder %s195, %s196
    %p205 = scmp.eq.s32.totalorder %s23, 0
    %p206 = por %p204, %p205
    %p207 = scmp.ne.s32.totalorder %s195, %s196
    %p208 = scmp.eq.s32.totalorder %s24, 1
    %p209 = por %p207, %p208
    %p211 = scmp.ne.s32.totalorder %s196, %s210
    %p212 = scmp.eq.s32.totalorder %s24, 0
    %p213 = por %p211, %p212
    %s215 = sadd.s32 %s214, 1
    %p218 = scmp.eq.s32.totalorder %s18, 1
    %p219 = scmp.ne.s32.totalorder %s214, %s216
    %p220 = scmp.eq.s32.totalorder %s18, 0
    %p221 = por %p219, %p220
    %p222 = scmp.ne.s32.totalorder %s214, %s216
    %p223 = scmp.eq.s32.totalorder %s23, 1
    %p224 = por %p222, %p223
    %p225 = scmp.ne.s32.totalorder %s216, %s217
    %p226 = scmp.eq.s32.totalorder %s23, 0
    %p227 = por %p225, %p226
    %p228 = scmp.ne.s32.totalorder %s216, %s217
    %p229 = scmp.eq.s32.totalorder %s24, 1
    %p230 = por %p228, %p229
    %p232 = scmp.ne.s32.totalorder %s217, %s231
    %p233 = scmp.eq.s32.totalorder %s24, 0
    %p234 = por %p232, %p233
    %s236 = sadd.s32 %s235, 1
    %p239 = scmp.eq.s32.totalorder %s18, 1
    %p240 = scmp.ne.s32.totalorder %s235, %s237
    %p241 = scmp.eq.s32.totalorder %s18, 0
    %p242 = por %p240, %p241
    %p243 = scmp.ne.s32.totalorder %s235, %s237
    %p244 = scmp.eq.s32.totalorder %s23, 1
    %p245 = por %p243, %p244
    %p246 = scmp.ne.s32.totalorder %s237, %s238
    %p247 = scmp.eq.s32.totalorder %s23, 0
    %p248 = por %p246, %p247
    %p249 = scmp.ne.s32.totalorder %s237, %s238
    %p250 = scmp.eq.s32.totalorder %s24, 1
    %p251 = por %p249, %p250
    %p253 = scmp.ne.s32.totalorder %s238, %s252
    %p254 = scmp.eq.s32.totalorder %s24, 0
    %p255 = por %p253, %p254
    %s257 = sadd.s32 %s256, 1
    %p260 = scmp.eq.s32.totalorder %s18, 1
    %p261 = scmp.ne.s32.totalorder %s256, %s258
    %p262 = scmp.eq.s32.totalorder %s18, 0
    %p263 = por %p261, %p262
    %p264 = scmp.ne.s32.totalorder %s256, %s258
    %p265 = scmp.eq.s32.totalorder %s23, 1
    %p266 = por %p264, %p265
    %p267 = scmp.ne.s32.totalorder %s258, %s259
    %p268 = scmp.eq.s32.totalorder %s23, 0
    %p269 = por %p267, %p268
    %p270 = scmp.ne.s32.totalorder %s258, %s259
    %p271 = scmp.eq.s32.totalorder %s24, 1
    %p272 = por %p270, %p271
    %p274 = scmp.ne.s32.totalorder %s259, %s273
    %p275 = scmp.eq.s32.totalorder %s24, 0
    %p276 = por %p274, %p275
    %s278 = sadd.s32 %s277, 1
    %p281 = scmp.eq.s32.totalorder %s18, 1
    %p282 = scmp.ne.s32.totalorder %s277, %s279
    %p283 = scmp.eq.s32.totalorder %s18, 0
    %p284 = por %p282, %p283
    %p285 = scmp.ne.s32.totalorder %s277, %s279
    %p286 = scmp.eq.s32.totalorder %s23, 1
    %p287 = por %p285, %p286
    %p288 = scmp.ne.s32.totalorder %s279, %s280
    %p289 = scmp.eq.s32.totalorder %s23, 0
    %p290 = por %p288, %p289
    %p291 = scmp.ne.s32.totalorder %s279, %s280
    %p292 = scmp.eq.s32.totalorder %s24, 1
    %p293 = por %p291, %p292
    %p295 = scmp.ne.s32.totalorder %s280, %s294
    %p296 = scmp.eq.s32.totalorder %s24, 0
    %p297 = por %p295, %p296
    %s298 = ssub.s32 %s18, %s25
    %p299 = scmp.eq.s32.totalorder %s298, 0
    %s301 = sadd.s32 %s300, 1
    %s302 = scalar_select %p299, %s300, %s301
    %p305 = pneg %p299
    %p306 = scmp.eq.s32.totalorder %s18, 1
    %p307 = por %p305, %p306
    %p308 = scmp.ne.s32.totalorder %s300, %s303
    %p309 = scmp.eq.s32.totalorder %s18, 0
    %p310 = por %p308, %p309
    %p311 = scmp.ne.s32.totalorder %s300, %s303
    %p312 = scmp.eq.s32.totalorder %s23, 1
    %p313 = por %p311, %p312
    %p314 = scmp.ne.s32.totalorder %s303, %s304
    %p315 = scmp.eq.s32.totalorder %s23, 0
    %p316 = por %p314, %p315
    %p317 = scmp.ne.s32.totalorder %s303, %s304
    %p318 = scmp.eq.s32.totalorder %s24, 1
    %p319 = por %p317, %p318
    %p321 = scmp.ne.s32.totalorder %s304, %s320
    %p322 = scmp.eq.s32.totalorder %s24, 0
    %p323 = por %p321, %p322
    %p324 = scmp.le.s32.totalorder 1, %s18
    %p325 = scmp.lt.s32.totalorder %s18, 3
    %p326 = pnand %p324, %p325
    %p327 = pneg %p326
    // Predicated region
    $region9: #{decision_transformer_forward.3} parent=5 // pred_check
      _
    $region10: #{decision_transformer_forward.3} parent=5 // pred_check_branch
      %329 = sbr.rel (%p326) target = $region12
    $region11: #{decision_transformer_forward.3} parent=5 // pred_region
      %s330 = ssub.s32 %s18, 1
      // Predicated region
      $region13: #{decision_transformer_forward.3} parent=11 // pred_check
        %p331 = pneg %p143
      $region14: #{decision_transformer_forward.3} parent=11 // pred_check_branch
        %333 = sbr.rel (%p331) target = $region16
      $region15: #{decision_transformer_forward.3} parent=11 // pred_region
        _
      $region16: #{decision_transformer_forward.3} parent=11 // pred_fallthru
        _
      // Predicated region
      $region17: #{decision_transformer_forward.3} parent=11 // pred_check
        %p334 = pneg %p164
      $region18: #{decision_transformer_forward.3} parent=11 // pred_check_branch
        %336 = sbr.rel (%p334) target = $region20
      $region19: #{decision_transformer_forward.3} parent=11 // pred_region
        _
      $region20: #{decision_transformer_forward.3} parent=11 // pred_fallthru
        _
      // Predicated region
      $region21: #{decision_transformer_forward.3} parent=11 // pred_check
        %p337 = pneg %p185
      $region22: #{decision_transformer_forward.3} parent=11 // pred_check_branch
        %339 = sbr.rel (%p337) target = $region24
      $region23: #{decision_transformer_forward.3} parent=11 // pred_region
        _
      $region24: #{decision_transformer_forward.3} parent=11 // pred_fallthru
        _
      // Predicated region
      $region25: #{decision_transformer_forward.3} parent=11 // pred_check
        %p340 = pneg %p206
      $region26: #{decision_transformer_forward.3} parent=11 // pred_check_branch
        %342 = sbr.rel (%p340) target = $region28
      $region27: #{decision_transformer_forward.3} parent=11 // pred_region
        _
      $region28: #{decision_transformer_forward.3} parent=11 // pred_fallthru
        _
      // Predicated region
      $region29: #{decision_transformer_forward.3} parent=11 // pred_check
        %p343 = pneg %p227
      $region30: #{decision_transformer_forward.3} parent=11 // pred_check_branch
        %345 = sbr.rel (%p343) target = $region32
      $region31: #{decision_transformer_forward.3} parent=11 // pred_region
        _
      $region32: #{decision_transformer_forward.3} parent=11 // pred_fallthru
        _
      // Predicated region
      $region33: #{decision_transformer_forward.3} parent=11 // pred_check
        %p346 = pneg %p248
      $region34: #{decision_transformer_forward.3} parent=11 // pred_check_branch
        %348 = sbr.rel (%p346) target = $region36
      $region35: #{decision_transformer_forward.3} parent=11 // pred_region
        _
      $region36: #{decision_transformer_forward.3} parent=11 // pred_fallthru
        _
      // Predicated region
      $region37: #{decision_transformer_forward.3} parent=11 // pred_check
        %p349 = pneg %p269
      $region38: #{decision_transformer_forward.3} parent=11 // pred_check_branch
        %351 = sbr.rel (%p349) target = $region40
      $region39: #{decision_transformer_forward.3} parent=11 // pred_region
        _
      $region40: #{decision_transformer_forward.3} parent=11 // pred_fallthru
        _
      // Predicated region
      $region41: #{decision_transformer_forward.3} parent=11 // pred_check
        %p352 = pneg %p290
      $region42: #{decision_transformer_forward.3} parent=11 // pred_check_branch
        %354 = sbr.rel (%p352) target = $region44
      $region43: #{decision_transformer_forward.3} parent=11 // pred_region
        _
      $region44: #{decision_transformer_forward.3} parent=11 // pred_fallthru
        _
    $region12: #{decision_transformer_forward.3} parent=5 // pred_fallthru
      _
    %p355 = scmp.lt.s32.totalorder %s18, 2
    // Predicated region
    $region45: #{decision_transformer_forward.3} parent=5 // pred_check
      %p356 = pneg %p355
    $region46: #{decision_transformer_forward.3} parent=5 // pred_check_branch
      %358 = sbr.rel (%p356) target = $region48
    $region47: #{decision_transformer_forward.3} parent=5 // pred_region
      // Predicated region
      $region49: #{decision_transformer_forward.3} parent=47 // pred_check
        %p359 = pneg %p38
      $region50: #{decision_transformer_forward.3} parent=47 // pred_check_branch
        %361 = sbr.rel (%p359) target = $region52
      $region51: #{decision_transformer_forward.3} parent=47 // pred_region
        %p362 = scmp.lt.s32.totalorder %s18, 1
        %s363 = scalar_select %p362, %s18, 1
        %s364 = smul.addr %s363, 8
        %s365 = scalar_lea.vmem %s0, %s364
      $region52: #{decision_transformer_forward.3} parent=47 // pred_fallthru
        _
      // Predicated region
      $region53: #{decision_transformer_forward.3} parent=47 // pred_check
        %p366 = pneg %p64
      $region54: #{decision_transformer_forward.3} parent=47 // pred_check_branch
        %368 = sbr.rel (%p366) target = $region56
      $region55: #{decision_transformer_forward.3} parent=47 // pred_region
        %p369 = scmp.lt.s32.totalorder %s18, 1
        %s370 = scalar_select %p369, %s18, 1
        %s371 = smul.addr %s370, 8
        %s372 = scalar_lea.vmem %s1, %s371
      $region56: #{decision_transformer_forward.3} parent=47 // pred_fallthru
        _
      // Predicated region
      $region57: #{decision_transformer_forward.3} parent=47 // pred_check
        %p373 = pneg %p90
      $region58: #{decision_transformer_forward.3} parent=47 // pred_check_branch
        %375 = sbr.rel (%p373) target = $region60
      $region59: #{decision_transformer_forward.3} parent=47 // pred_region
        %p376 = scmp.lt.s32.totalorder %s18, 1
        %s377 = scalar_select %p376, %s18, 1
        %s378 = smul.addr %s377, 8
        %s379 = scalar_lea.vmem %s2, %s378
      $region60: #{decision_transformer_forward.3} parent=47 // pred_fallthru
        _
      // Predicated region
      $region61: #{decision_transformer_forward.3} parent=47 // pred_check
        %p380 = pneg %p116
      $region62: #{decision_transformer_forward.3} parent=47 // pred_check_branch
        %382 = sbr.rel (%p380) target = $region64
      $region63: #{decision_transformer_forward.3} parent=47 // pred_region
        %p383 = scmp.lt.s32.totalorder %s18, 1
        %s384 = scalar_select %p383, %s18, 1
        %s385 = smul.addr %s384, 8
        %s386 = scalar_lea.vmem %s3, %s385
      $region64: #{decision_transformer_forward.3} parent=47 // pred_fallthru
        _
    $region48: #{decision_transformer_forward.3} parent=5 // pred_fallthru
      _
    %p387 = scmp.le.s32.totalorder 1, %s18
    %p388 = scmp.lt.s32.totalorder %s18, 3
    %p389 = pnand %p387, %p388
    %p390 = pneg %p389
    // Predicated region
    $region65: #{decision_transformer_forward.3} parent=5 // pred_check
      _
    $region66: #{decision_transformer_forward.3} parent=5 // pred_check_branch
      %392 = sbr.rel (%p389) target = $region68
    $region67: #{decision_transformer_forward.3} parent=5 // pred_region
      %s393 = ssub.s32 %s18, 1
      %p394 = scmp.lt.s32.totalorder %s23, 1
      %s395 = scalar_select %p394, %s23, 1
      %s396 = smul.addr %s395, 8
      %s397 = scalar_lea.vmem %s0, %s396
      %p398 = pneg %p44
      %p399 = pneg %p41
      %p400 = scmp.lt.s32.totalorder %s23, 1
      %s401 = scalar_select %p400, %s23, 1
      %s402 = smul.addr %s401, 8
      %s403 = scalar_lea.vmem %s1, %s402
      %p404 = pneg %p70
      %p405 = pneg %p67
      %p406 = scmp.lt.s32.totalorder %s23, 1
      %s407 = scalar_select %p406, %s23, 1
      %s408 = smul.addr %s407, 8
      %s409 = scalar_lea.vmem %s2, %s408
      %p410 = pneg %p96
      %p411 = pneg %p93
      %p412 = scmp.lt.s32.totalorder %s23, 1
      %s413 = scalar_select %p412, %s23, 1
      %s414 = smul.addr %s413, 8
      %s415 = scalar_lea.vmem %s3, %s414
      %p416 = pneg %p122
      %p417 = pneg %p119
      %p418 = pneg %p143
      %p419 = pneg %p140
      %p420 = pneg %p164
      %p421 = pneg %p161
      %p422 = pneg %p185
      %p423 = pneg %p182
      %p424 = pneg %p206
      %p425 = pneg %p203
      %p426 = pneg %p227
      %p427 = pneg %p224
      %p428 = pneg %p248
      %p429 = pneg %p245
      %p430 = pneg %p269
      %p431 = pneg %p266
      %p432 = pneg %p290
      %p433 = pneg %p287
      %p434 = pneg %p316
      %p435 = pneg %p313
      %p436 = scmp.lt.s32.totalorder %s23, 1
      %s437 = scalar_select %p436, %s23, 1
      %s438 = smul.addr %s437, 3
      %s439 = smul.addr %s438, 8
      %s440 = scalar_lea.vmem %s12, %s439
      %p441 = scmp.lt.s32.totalorder %s23, 1
      %s442 = scalar_select %p441, %s23, 1
      %s443 = smul.addr %s442, 8
      %s444 = scalar_lea.vmem %s0, %s443
      %p445 = scmp.lt.s32.totalorder %s23, 1
      %s446 = scalar_select %p445, %s23, 1
      %s447 = smul.addr %s446, 8
      %s448 = scalar_lea.vmem %s1, %s447
      %p449 = scmp.lt.s32.totalorder %s23, 1
      %s450 = scalar_select %p449, %s23, 1
      %s451 = smul.addr %s450, 8
      %s452 = scalar_lea.vmem %s2, %s451
      %p453 = scmp.lt.s32.totalorder %s23, 1
      %s454 = scalar_select %p453, %s23, 1
      %s455 = smul.addr %s454, 8
      %s456 = scalar_lea.vmem %s3, %s455
      %p457 = scmp.lt.s32.totalorder %s23, 1
      %s458 = scalar_select %p457, %s23, 1
      %s459 = smul.addr %s458, 3
      %s460 = smul.addr %s459, 8
      %s461 = scalar_lea.vmem %s12, %s460
      %v463 = vld [vmem:[%s456] sm:$0xff]
      %v464 = vld [vmem:[%s10] sm:$0x1]
      %v465 = vld [vmem:[%s11] sm:$0x1]
      %v466 = vld [vmem:[%s444] sm:$0xff]
      %v467 = vld [vmem:[%s4] sm:$0x1]
      %469 = vset.pattern.permute.xlu0 0
      %470 = vperm.xlu0 %469, %v466
      %v471 = vpop.permute.xlu0 %470
      %v474 = vperm.slane %v467, 0
      %v476 = vmul.f32 %v471, %v474
      %v477 = vld [vmem:[%s5] sm:$0x1]
      %v479 = vperm.slane %v477, 0
      %v481 = vadd.f32 %v476, %v479
      %v482 = vadd.f32 %v481, %v463
      %v483 = vld [vmem:[%s448] sm:$0xff]
      %v484 = vld [vmem:[%s6] sm:$0x7]
      %v485 = vpack.c.bf16 %v483, %v483
      %v486 = vld [vmem:[%s7] sm:$0x1]
      %v488 = vperm.slane %v486, 0
      %vm490 = vcmask 48128
      %v492 = vsel %vm490, %v485, 0
      %vm494 = vcmask 1042432
      %v496 = vsel %vm494, %v484, 0
      %498 = vmatpush.bf16.msra.mxu0 0
      %499 = vmatpush.bf16.msra.mxu0 0
      %500 = vmatpush.bf16.msra.mxu0 0
      %501 = vmatpush.bf16.msra.mxu0 0
      %502 = vmatpush.bf16.msra.mxu0 0
      %503 = vmatpush.bf16.msra.mxu0 0
      %504 = vmatpush.bf16.msra.mxu0 0
      %505 = vmatpush.bf16.msra.mxu0 %v496
      %506 = vmatmul.bf16.gmra.mxu0 %v492
      %v507 = vpop.f32.mrf.mxu0
      %v508 = vadd.f32 %v488, %v507
      %v509 = vpop.f32.mrf.mxu0
      %510 = vdwg.mxu0
      %v511 = vadd.f32 %v508, %v463
      %v512 = vld [vmem:[%s452] sm:$0xff]
      %v513 = vld [vmem:[%s8] sm:$0x3]
      %v514 = vpack.c.bf16 %v512, %v512
      %v515 = vld [vmem:[%s9] sm:$0x1]
      %v517 = vperm.slane %v515, 0
      %vm519 = vcmask 23552
      %v521 = vsel %vm519, %v514, 0
      %vm523 = vcmask 1040384
      %vm524 = vcmask 1041408
      %v525 = vsel %vm523, 4294967295, 65535
      %v526 = vsel %vm524, %v525, 0
      %v528 = vand.u32 %v513, %v526
      %530 = vmatpush.bf16.msra.mxu0 0
      %531 = vmatpush.bf16.msra.mxu0 0
      %532 = vmatpush.bf16.msra.mxu0 0
      %533 = vmatpush.bf16.msra.mxu0 0
      %534 = vmatpush.bf16.msra.mxu0 0
      %535 = vmatpush.bf16.msra.mxu0 0
      %536 = vmatpush.bf16.msra.mxu0 0
      %537 = vmatpush.bf16.msra.mxu0 %v528
      %538 = vmatmul.bf16.gmra.mxu0 %v521
      %v539 = vpop.f32.mrf.mxu0
      %v540 = vadd.f32 %v517, %v539
      %v541 = vpop.f32.mrf.mxu0
      %542 = vdwg.mxu0
      %v543 = vadd.f32 %v540, %v463
      %v544 = vadd.f32 %v543, %v463
      %vm545 = vcmask 261120
      %v546 = vsel %vm545, %v482, 0.0
      %547 = vadd.xlane.f32.xlu0 %v546
      %v548 = vpop.xlane.xlu0 %547
      %v549 = vrcp.pop 32.0
      %v550 = vmul.f32 32.0, %v549
      %v551 = vsub.f32 1.0, %v550
      %v552 = vmul.f32 %v549, %v551
      %v553 = vadd.f32 %v549, %v552
      %vm554 = vweird.f32 %v549
      %v555 = vsel %vm554, %v549, %v553
      %v556 = vmul.f32 %v548, %v555
      %v557 = vsub.f32 %v482, %v556
      %v558 = vmul.f32 %v557, %v557
      %v559 = vsel %vm545, %v558, 0.0
      %560 = vadd.xlane.f32.xlu0 %v559
      %v561 = vpop.xlane.xlu0 %560
      %v562 = vmul.f32 %v561, %v555
      %v563 = vadd.f32 %v562, 1e-05
      %v564 = vrsqrt.pop %v563
      %v565 = vmul.f32 %v564, %v563
      %v566 = vmul.f32 %v565, %v564
      %v567 = vmul.f32 0.5, %v566
      %v568 = vsub.f32 1.5, %v567
      %v569 = vmul.f32 %v564, %v568
      %vm570 = vweird.f32 %v563
      %vm571 = vweird.f32 %v564
      %vm572 = vmor %vm570, %vm571
      %v573 = vsel %vm572, %v564, %v569
      %v574 = vmul.f32 %v557, %v573
      %v576 = vperm.slane %v464, 0
      %v578 = vmul.f32 %v574, %v576
      %v580 = vperm.slane %v465, 0
      %v582 = vadd.f32 %v578, %v580
      %583 = vst.msk [vmem:[%s461] sm:$0xff] %vm545, %v582
      %v584 = vsel %vm545, %v511, 0.0
      %585 = vadd.xlane.f32.xlu0 %v584
      %v586 = vpop.xlane.xlu0 %585
      %v587 = vmul.f32 %v586, %v555
      %v588 = vsub.f32 %v511, %v587
      %v589 = vmul.f32 %v588, %v588
      %v590 = vsel %vm545, %v589, 0.0
      %591 = vadd.xlane.f32.xlu0 %v590
      %v592 = vpop.xlane.xlu0 %591
      %v593 = vmul.f32 %v592, %v555
      %v594 = vadd.f32 %v593, 1e-05
      %v595 = vrsqrt.pop %v594
      %v596 = vmul.f32 %v595, %v594
      %v597 = vmul.f32 %v596, %v595
      %v598 = vmul.f32 0.5, %v597
      %v599 = vsub.f32 1.5, %v598
      %v600 = vmul.f32 %v595, %v599
      %vm601 = vweird.f32 %v594
      %vm602 = vweird.f32 %v595
      %vm603 = vmor %vm601, %vm602
      %v604 = vsel %vm603, %v595, %v600
      %v605 = vmul.f32 %v588, %v604
      %v606 = vmul.f32 %v605, %v576
      %v607 = vadd.f32 %v606, %v580
      %s608 = scalar_lea.vmem %s461, 8
      %609 = vst.msk [vmem:[%s608] sm:$0xff] %vm545, %v607
      %v610 = vsel %vm545, %v544, 0.0
      %611 = vadd.xlane.f32.xlu0 %v610
      %v612 = vpop.xlane.xlu0 %611
      %v613 = vmul.f32 %v612, %v555
      %v614 = vsub.f32 %v544, %v613
      %v615 = vmul.f32 %v614, %v614
      %v616 = vsel %vm545, %v615, 0.0
      %617 = vadd.xlane.f32.xlu0 %v616
      %v618 = vpop.xlane.xlu0 %617
      %v619 = vmul.f32 %v618, %v555
      %v620 = vadd.f32 %v619, 1e-05
      %v621 = vrsqrt.pop %v620
      %v622 = vmul.f32 %v621, %v620
      %v623 = vmul.f32 %v622, %v621
      %v624 = vmul.f32 0.5, %v623
      %v625 = vsub.f32 1.5, %v624
      %v626 = vmul.f32 %v621, %v625
      %vm627 = vweird.f32 %v620
      %vm628 = vweird.f32 %v621
      %vm629 = vmor %vm627, %vm628
      %v630 = vsel %vm629, %v621, %v626
      %v631 = vmul.f32 %v614, %v630
      %v632 = vmul.f32 %v631, %v576
      %v633 = vadd.f32 %v632, %v580
      %s634 = scalar_lea.vmem %s461, 16
      %635 = vst.msk [vmem:[%s634] sm:$0xff] %vm545, %v633
      %p636 = scmp.lt.s32.totalorder %s23, 1
      %s637 = scalar_select %p636, %s23, 1
      %s638 = smul.addr %s637, 3
      %s639 = smul.addr %s638, 8
      %s640 = scalar_lea.vmem %s12, %s639
      // Predicated region
      $region69: #{decision_transformer_forward.3} parent=67 // pred_check
        %p641 = pneg %p313
      $region70: #{decision_transformer_forward.3} parent=67 // pred_check_branch
        %643 = sbr.rel (%p641) target = $region72
      $region71: #{decision_transformer_forward.3} parent=67 // pred_region
        _
      $region72: #{decision_transformer_forward.3} parent=67 // pred_fallthru
        _
    $region68: #{decision_transformer_forward.3} parent=5 // pred_fallthru
      _
    %p644 = scmp.le.s32.totalorder 2, %s18
    // Predicated region
    $region73: #{decision_transformer_forward.3} parent=5 // pred_check
      %p645 = pneg %p644
    $region74: #{decision_transformer_forward.3} parent=5 // pred_check_branch
      %647 = sbr.rel (%p645) target = $region76
    $region75: #{decision_transformer_forward.3} parent=5 // pred_region
      %s648 = ssub.s32 %s18, 2
      // Predicated region
      $region77: #{decision_transformer_forward.3} parent=75 // pred_check
        %p649 = pneg %p319
      $region78: #{decision_transformer_forward.3} parent=75 // pred_check_branch
        %651 = sbr.rel (%p649) target = $region80
      $region79: #{decision_transformer_forward.3} parent=75 // pred_region
        %p652 = scmp.lt.s32.totalorder %s24, 1
        %s653 = scalar_select %p652, %s24, 1
        %s654 = smul.addr %s653, 3
        %s655 = smul.addr %s654, 8
        %s656 = scalar_lea.vmem %s12, %s655
      $region80: #{decision_transformer_forward.3} parent=75 // pred_fallthru
        _
    $region76: #{decision_transformer_forward.3} parent=5 // pred_fallthru
      _
  $region6: #{decision_transformer_forward.3} parent=0 // loop_footer
    %s22 = sadd.s32 1, %s18
  $region7: #{decision_transformer_forward.3} parent=0 // loop_footer_branch
    %17 = sbr.rel target = $region3
  $region8: #{decision_transformer_forward.3} parent=0 // loop_exit
    _

// kernel: decision_transformer_forward.4
$region0: #{decision_transformer_forward.4}
  #allocation0 [shape = 'u32[]', space=smem, size = 0x4, offset = 0x4, fixed_abs, tag = 'smem constant byte address 0x4 - core index']
  #allocation1 [shape = 'u32[72,128]{1,0:T(1,128)}', space=vmem, size = 0x9000, scoped, tag = 'internal scratch']
  %s0 = inlined_call_operand.vmem [shape: f32[48,32], index: 0, kind: input, shape index: {}]
  %s1 = inlined_call_operand.vmem [shape: f32[24,24], index: 1, kind: input, shape index: {}]
  %s2 = inlined_call_operand.vmem [shape: bf16[2,32,32], index: 2, kind: input, shape index: {}]
  %s3 = inlined_call_operand.vmem [shape: f32[2,1,32], index: 3, kind: input, shape index: {}]
  %s4 = inlined_call_operand.vmem [shape: bf16[2,32,32], index: 4, kind: input, shape index: {}]
  %s5 = inlined_call_operand.vmem [shape: f32[2,1,32], index: 5, kind: input, shape index: {}]
  %s6 = inlined_call_operand.vmem [shape: bf16[2,32,32], index: 6, kind: input, shape index: {}]
  %s7 = inlined_call_operand.vmem [shape: f32[2,1,32], index: 7, kind: input, shape index: {}]
  %s8 = inlined_call_operand.vmem [shape: bf16[2,32,32], index: 8, kind: input, shape index: {}]
  %s9 = inlined_call_operand.vmem [shape: f32[2,1,32], index: 9, kind: input, shape index: {}]
  %s10 = inlined_call_operand.vmem [shape: f32[2,1,32], index: 10, kind: input, shape index: {}]
  %s11 = inlined_call_operand.vmem [shape: f32[2,1,32], index: 11, kind: input, shape index: {}]
  %s12 = inlined_call_operand.vmem [shape: bf16[2,32,128], index: 12, kind: input, shape index: {}]
  %s13 = inlined_call_operand.vmem [shape: f32[2,1,128], index: 13, kind: input, shape index: {}]
  %s14 = inlined_call_operand.vmem [shape: bf16[2,128,32], index: 14, kind: input, shape index: {}]
  %s15 = inlined_call_operand.vmem [shape: f32[2,1,32], index: 15, kind: input, shape index: {}]
  %s16 = inlined_call_operand.vmem [shape: f32[2,1,32], index: 16, kind: input, shape index: {}]
  %s17 = inlined_call_operand.vmem [shape: f32[2,1,32], index: 17, kind: input, shape index: {}]
  %s18 = inlined_call_operand.vmem [shape: f32[48,32], index: 18, kind: output, shape index: {}]
  %s19 = sld [smem:[#allocation0]]
  $region109: #{decision_transformer_forward.4} parent=0
    _
  %s21 = ssub.s32 1, %s19
  %s22 = scalar_select 0, %s21, %s19
  loop: start=0, step=1, limit=6
  $region2: #{decision_transformer_forward.4} parent=0 // loop_pre_header
    _
  $region3: #{decision_transformer_forward.4} parent=0 // loop_header
    %s24 = sphi 0, %s28
    %p25 = scmp.ge.s32.totalorder %s24, 6
    %s31 = sphi 0, %s43
    %s32 = sphi 0, %s39
    %s33 = sphi 0, %s31
    %s34 = sphi 0, %s32
    %s35 = sphi 0, %s33
    %s36 = sphi 0, %s34
    %s46 = sphi 0, %s48
    %s49 = sphi 0, %s46
    %s50 = sphi 0, %s49
    %s66 = sphi 0, %s50
    %s70 = sphi 0, %s70
    %s72 = sphi 0, %s70
    %s73 = sphi 0, %s72
    %s87 = sphi 0, %s73
    %s93 = sphi 0, %s95
    %s96 = sphi 0, %s93
    %s97 = sphi 0, %s96
    %s113 = sphi 0, %s97
    %s119 = sphi 0, %s121
    %s122 = sphi 0, %s119
    %s123 = sphi 0, %s122
    %s139 = sphi 0, %s123
    %s145 = sphi 0, %s147
    %s148 = sphi 0, %s145
    %s149 = sphi 0, %s148
    %s165 = sphi 0, %s149
    %s171 = sphi 0, %s173
    %s174 = sphi 0, %s171
    %s175 = sphi 0, %s174
    %s191 = sphi 0, %s175
    %s197 = sphi 0, %s199
    %s200 = sphi 0, %s197
    %s201 = sphi 0, %s200
    %s217 = sphi 0, %s201
    %s223 = sphi 0, %s225
    %s226 = sphi 0, %s223
    %s227 = sphi 0, %s226
    %s243 = sphi 0, %s227
    %s249 = sphi 0, %s251
    %s252 = sphi 0, %s249
    %s253 = sphi 0, %s252
    %s269 = sphi 0, %s253
    %s275 = sphi 0, %s277
    %s278 = sphi 0, %s275
    %s279 = sphi 0, %s278
    %s295 = sphi 0, %s279
    %s301 = sphi 0, %s303
    %s304 = sphi 0, %s301
    %s305 = sphi 0, %s304
    %s321 = sphi 0, %s305
    %s327 = sphi 0, %s329
    %s330 = sphi 0, %s327
    %s331 = sphi 0, %s330
    %s347 = sphi 0, %s331
    %s353 = sphi 0, %s355
    %s356 = sphi 0, %s353
    %s357 = sphi 0, %s356
    %s373 = sphi 0, %s357
    %s379 = sphi 0, %s381
    %s382 = sphi 0, %s379
    %s383 = sphi 0, %s382
    %s399 = sphi 0, %s383
    %s405 = sphi 0, %s407
    %s408 = sphi 0, %s405
    %s409 = sphi 0, %s408
    %s425 = sphi 0, %s409
    %s431 = sphi 0, %s433
    %s434 = sphi 0, %s431
    %s435 = sphi 0, %s434
    %s451 = sphi 0, %s435
    %s457 = sphi 0, %s459
    %s460 = sphi 0, %s457
    %s461 = sphi 0, %s460
    %s477 = sphi 0, %s461
    %s483 = sphi 0, %s485
    %s486 = sphi 0, %s483
    %s487 = sphi 0, %s486
    %s503 = sphi 0, %s487
    %s509 = sphi 0, %s511
    %s512 = sphi 0, %s509
    %s513 = sphi 0, %s512
    %s529 = sphi 0, %s513
  $region4: #{decision_transformer_forward.4} parent=0 // loop_header_branch
    %27 = sbr.rel (%p25) target = $region8
  $region5: #{decision_transformer_forward.4} parent=0 // loop_body
    %s29 = ssub.s32 %s24, 1
    %s30 = ssub.s32 %s24, 2
    %s37 = sadd.s32 1, %s32
    %p38 = scmp.ge.s32.totalorder %s37, 2
    %s39 = scalar_select %p38, 0, %s37
    %s40 = sadd.s32 1, %s31
    %s41 = scalar_select %p38, %s40, %s31
    %p42 = scmp.ge.s32.totalorder %s41, 2
    %s43 = scalar_select %p42, 0, %s41
    %s44 = ssub.s32 %s31, %s43
    %p45 = scmp.eq.s32.totalorder %s44, 0
    %s47 = sadd.s32 %s46, 1
    %s48 = scalar_select %p45, %s46, %s47
    %p51 = pneg %p45
    %p52 = scmp.eq.s32.totalorder %s24, 3
    %p53 = por %p51, %p52
    %p54 = scmp.ne.s32.totalorder %s46, %s49
    %p55 = scmp.eq.s32.totalorder %s24, 0
    %p56 = por %p54, %p55
    %p57 = scmp.ne.s32.totalorder %s46, %s49
    %p58 = scmp.eq.s32.totalorder %s29, 3
    %p59 = por %p57, %p58
    %p60 = scmp.ne.s32.totalorder %s49, %s50
    %p61 = scmp.eq.s32.totalorder %s29, 0
    %p62 = por %p60, %p61
    %p63 = scmp.ne.s32.totalorder %s49, %s50
    %p64 = scmp.eq.s32.totalorder %s30, 3
    %p65 = por %p63, %p64
    %p67 = scmp.ne.s32.totalorder %s50, %s66
    %p68 = scmp.eq.s32.totalorder %s30, 0
    %p69 = por %p67, %p68
    %s71 = sadd.s32 %s70, 1
    %p74 = scmp.eq.s32.totalorder %s24, 3
    %p75 = scmp.ne.s32.totalorder %s70, %s72
    %p76 = scmp.eq.s32.totalorder %s24, 0
    %p77 = por %p75, %p76
    %p78 = scmp.ne.s32.totalorder %s70, %s72
    %p79 = scmp.eq.s32.totalorder %s29, 3
    %p80 = por %p78, %p79
    %p81 = scmp.ne.s32.totalorder %s72, %s73
    %p82 = scmp.eq.s32.totalorder %s29, 0
    %p83 = por %p81, %p82
    %p84 = scmp.ne.s32.totalorder %s72, %s73
    %p85 = scmp.eq.s32.totalorder %s30, 3
    %p86 = por %p84, %p85
    %p88 = scmp.ne.s32.totalorder %s73, %s87
    %p89 = scmp.eq.s32.totalorder %s30, 0
    %p90 = por %p88, %p89
    %s91 = ssub.s32 %s32, %s39
    %p92 = scmp.eq.s32.totalorder %s91, 0
    %s94 = sadd.s32 %s93, 1
    %s95 = scalar_select %p92, %s93, %s94
    %p98 = pneg %p92
    %p99 = scmp.eq.s32.totalorder %s24, 3
    %p100 = por %p98, %p99
    %p101 = scmp.ne.s32.totalorder %s93, %s96
    %p102 = scmp.eq.s32.totalorder %s24, 0
    %p103 = por %p101, %p102
    %p104 = scmp.ne.s32.totalorder %s93, %s96
    %p105 = scmp.eq.s32.totalorder %s29, 3
    %p106 = por %p104, %p105
    %p107 = scmp.ne.s32.totalorder %s96, %s97
    %p108 = scmp.eq.s32.totalorder %s29, 0
    %p109 = por %p107, %p108
    %p110 = scmp.ne.s32.totalorder %s96, %s97
    %p111 = scmp.eq.s32.totalorder %s30, 3
    %p112 = por %p110, %p111
    %p114 = scmp.ne.s32.totalorder %s97, %s113
    %p115 = scmp.eq.s32.totalorder %s30, 0
    %p116 = por %p114, %p115
    %s117 = ssub.s32 %s32, %s39
    %p118 = scmp.eq.s32.totalorder %s117, 0
    %s120 = sadd.s32 %s119, 1
    %s121 = scalar_select %p118, %s119, %s120
    %p124 = pneg %p118
    %p125 = scmp.eq.s32.totalorder %s24, 3
    %p126 = por %p124, %p125
    %p127 = scmp.ne.s32.totalorder %s119, %s122
    %p128 = scmp.eq.s32.totalorder %s24, 0
    %p129 = por %p127, %p128
    %p130 = scmp.ne.s32.totalorder %s119, %s122
    %p131 = scmp.eq.s32.totalorder %s29, 3
    %p132 = por %p130, %p131
    %p133 = scmp.ne.s32.totalorder %s122, %s123
    %p134 = scmp.eq.s32.totalorder %s29, 0
    %p135 = por %p133, %p134
    %p136 = scmp.ne.s32.totalorder %s122, %s123
    %p137 = scmp.eq.s32.totalorder %s30, 3
    %p138 = por %p136, %p137
    %p140 = scmp.ne.s32.totalorder %s123, %s139
    %p141 = scmp.eq.s32.totalorder %s30, 0
    %p142 = por %p140, %p141
    %s143 = ssub.s32 %s32, %s39
    %p144 = scmp.eq.s32.totalorder %s143, 0
    %s146 = sadd.s32 %s145, 1
    %s147 = scalar_select %p144, %s145, %s146
    %p150 = pneg %p144
    %p151 = scmp.eq.s32.totalorder %s24, 3
    %p152 = por %p150, %p151
    %p153 = scmp.ne.s32.totalorder %s145, %s148
    %p154 = scmp.eq.s32.totalorder %s24, 0
    %p155 = por %p153, %p154
    %p156 = scmp.ne.s32.totalorder %s145, %s148
    %p157 = scmp.eq.s32.totalorder %s29, 3
    %p158 = por %p156, %p157
    %p159 = scmp.ne.s32.totalorder %s148, %s149
    %p160 = scmp.eq.s32.totalorder %s29, 0
    %p161 = por %p159, %p160
    %p162 = scmp.ne.s32.totalorder %s148, %s149
    %p163 = scmp.eq.s32.totalorder %s30, 3
    %p164 = por %p162, %p163
    %p166 = scmp.ne.s32.totalorder %s149, %s165
    %p167 = scmp.eq.s32.totalorder %s30, 0
    %p168 = por %p166, %p167
    %s169 = ssub.s32 %s32, %s39
    %p170 = scmp.eq.s32.totalorder %s169, 0
    %s172 = sadd.s32 %s171, 1
    %s173 = scalar_select %p170, %s171, %s172
    %p176 = pneg %p170
    %p177 = scmp.eq.s32.totalorder %s24, 3
    %p178 = por %p176, %p177
    %p179 = scmp.ne.s32.totalorder %s171, %s174
    %p180 = scmp.eq.s32.totalorder %s24, 0
    %p181 = por %p179, %p180
    %p182 = scmp.ne.s32.totalorder %s171, %s174
    %p183 = scmp.eq.s32.totalorder %s29, 3
    %p184 = por %p182, %p183
    %p185 = scmp.ne.s32.totalorder %s174, %s175
    %p186 = scmp.eq.s32.totalorder %s29, 0
    %p187 = por %p185, %p186
    %p188 = scmp.ne.s32.totalorder %s174, %s175
    %p189 = scmp.eq.s32.totalorder %s30, 3
    %p190 = por %p188, %p189
    %p192 = scmp.ne.s32.totalorder %s175, %s191
    %p193 = scmp.eq.s32.totalorder %s30, 0
    %p194 = por %p192, %p193
    %s195 = ssub.s32 %s32, %s39
    %p196 = scmp.eq.s32.totalorder %s195, 0
    %s198 = sadd.s32 %s197, 1
    %s199 = scalar_select %p196, %s197, %s198
    %p202 = pneg %p196
    %p203 = scmp.eq.s32.totalorder %s24, 3
    %p204 = por %p202, %p203
    %p205 = scmp.ne.s32.totalorder %s197, %s200
    %p206 = scmp.eq.s32.totalorder %s24, 0
    %p207 = por %p205, %p206
    %p208 = scmp.ne.s32.totalorder %s197, %s200
    %p209 = scmp.eq.s32.totalorder %s29, 3
    %p210 = por %p208, %p209
    %p211 = scmp.ne.s32.totalorder %s200, %s201
    %p212 = scmp.eq.s32.totalorder %s29, 0
    %p213 = por %p211, %p212
    %p214 = scmp.ne.s32.totalorder %s200, %s201
    %p215 = scmp.eq.s32.totalorder %s30, 3
    %p216 = por %p214, %p215
    %p218 = scmp.ne.s32.totalorder %s201, %s217
    %p219 = scmp.eq.s32.totalorder %s30, 0
    %p220 = por %p218, %p219
    %s221 = ssub.s32 %s32, %s39
    %p222 = scmp.eq.s32.totalorder %s221, 0
    %s224 = sadd.s32 %s223, 1
    %s225 = scalar_select %p222, %s223, %s224
    %p228 = pneg %p222
    %p229 = scmp.eq.s32.totalorder %s24, 3
    %p230 = por %p228, %p229
    %p231 = scmp.ne.s32.totalorder %s223, %s226
    %p232 = scmp.eq.s32.totalorder %s24, 0
    %p233 = por %p231, %p232
    %p234 = scmp.ne.s32.totalorder %s223, %s226
    %p235 = scmp.eq.s32.totalorder %s29, 3
    %p236 = por %p234, %p235
    %p237 = scmp.ne.s32.totalorder %s226, %s227
    %p238 = scmp.eq.s32.totalorder %s29, 0
    %p239 = por %p237, %p238
    %p240 = scmp.ne.s32.totalorder %s226, %s227
    %p241 = scmp.eq.s32.totalorder %s30, 3
    %p242 = por %p240, %p241
    %p244 = scmp.ne.s32.totalorder %s227, %s243
    %p245 = scmp.eq.s32.totalorder %s30, 0
    %p246 = por %p244, %p245
    %s247 = ssub.s32 %s32, %s39
    %p248 = scmp.eq.s32.totalorder %s247, 0
    %s250 = sadd.s32 %s249, 1
    %s251 = scalar_select %p248, %s249, %s250
    %p254 = pneg %p248
    %p255 = scmp.eq.s32.totalorder %s24, 3
    %p256 = por %p254, %p255
    %p257 = scmp.ne.s32.totalorder %s249, %s252
    %p258 = scmp.eq.s32.totalorder %s24, 0
    %p259 = por %p257, %p258
    %p260 = scmp.ne.s32.totalorder %s249, %s252
    %p261 = scmp.eq.s32.totalorder %s29, 3
    %p262 = por %p260, %p261
    %p263 = scmp.ne.s32.totalorder %s252, %s253
    %p264 = scmp.eq.s32.totalorder %s29, 0
    %p265 = por %p263, %p264
    %p266 = scmp.ne.s32.totalorder %s252, %s253
    %p267 = scmp.eq.s32.totalorder %s30, 3
    %p268 = por %p266, %p267
    %p270 = scmp.ne.s32.totalorder %s253, %s269
    %p271 = scmp.eq.s32.totalorder %s30, 0
    %p272 = por %p270, %p271
    %s273 = ssub.s32 %s32, %s39
    %p274 = scmp.eq.s32.totalorder %s273, 0
    %s276 = sadd.s32 %s275, 1
    %s277 = scalar_select %p274, %s275, %s276
    %p280 = pneg %p274
    %p281 = scmp.eq.s32.totalorder %s24, 3
    %p282 = por %p280, %p281
    %p283 = scmp.ne.s32.totalorder %s275, %s278
    %p284 = scmp.eq.s32.totalorder %s24, 0
    %p285 = por %p283, %p284
    %p286 = scmp.ne.s32.totalorder %s275, %s278
    %p287 = scmp.eq.s32.totalorder %s29, 3
    %p288 = por %p286, %p287
    %p289 = scmp.ne.s32.totalorder %s278, %s279
    %p290 = scmp.eq.s32.totalorder %s29, 0
    %p291 = por %p289, %p290
    %p292 = scmp.ne.s32.totalorder %s278, %s279
    %p293 = scmp.eq.s32.totalorder %s30, 3
    %p294 = por %p292, %p293
    %p296 = scmp.ne.s32.totalorder %s279, %s295
    %p297 = scmp.eq.s32.totalorder %s30, 0
    %p298 = por %p296, %p297
    %s299 = ssub.s32 %s32, %s39
    %p300 = scmp.eq.s32.totalorder %s299, 0
    %s302 = sadd.s32 %s301, 1
    %s303 = scalar_select %p300, %s301, %s302
    %p306 = pneg %p300
    %p307 = scmp.eq.s32.totalorder %s24, 3
    %p308 = por %p306, %p307
    %p309 = scmp.ne.s32.totalorder %s301, %s304
    %p310 = scmp.eq.s32.totalorder %s24, 0
    %p311 = por %p309, %p310
    %p312 = scmp.ne.s32.totalorder %s301, %s304
    %p313 = scmp.eq.s32.totalorder %s29, 3
    %p314 = por %p312, %p313
    %p315 = scmp.ne.s32.totalorder %s304, %s305
    %p316 = scmp.eq.s32.totalorder %s29, 0
    %p317 = por %p315, %p316
    %p318 = scmp.ne.s32.totalorder %s304, %s305
    %p319 = scmp.eq.s32.totalorder %s30, 3
    %p320 = por %p318, %p319
    %p322 = scmp.ne.s32.totalorder %s305, %s321
    %p323 = scmp.eq.s32.totalorder %s30, 0
    %p324 = por %p322, %p323
    %s325 = ssub.s32 %s32, %s39
    %p326 = scmp.eq.s32.totalorder %s325, 0
    %s328 = sadd.s32 %s327, 1
    %s329 = scalar_select %p326, %s327, %s328
    %p332 = pneg %p326
    %p333 = scmp.eq.s32.totalorder %s24, 3
    %p334 = por %p332, %p333
    %p335 = scmp.ne.s32.totalorder %s327, %s330
    %p336 = scmp.eq.s32.totalorder %s24, 0
    %p337 = por %p335, %p336
    %p338 = scmp.ne.s32.totalorder %s327, %s330
    %p339 = scmp.eq.s32.totalorder %s29, 3
    %p340 = por %p338, %p339
    %p341 = scmp.ne.s32.totalorder %s330, %s331
    %p342 = scmp.eq.s32.totalorder %s29, 0
    %p343 = por %p341, %p342
    %p344 = scmp.ne.s32.totalorder %s330, %s331
    %p345 = scmp.eq.s32.totalorder %s30, 3
    %p346 = por %p344, %p345
    %p348 = scmp.ne.s32.totalorder %s331, %s347
    %p349 = scmp.eq.s32.totalorder %s30, 0
    %p350 = por %p348, %p349
    %s351 = ssub.s32 %s32, %s39
    %p352 = scmp.eq.s32.totalorder %s351, 0
    %s354 = sadd.s32 %s353, 1
    %s355 = scalar_select %p352, %s353, %s354
    %p358 = pneg %p352
    %p359 = scmp.eq.s32.totalorder %s24, 3
    %p360 = por %p358, %p359
    %p361 = scmp.ne.s32.totalorder %s353, %s356
    %p362 = scmp.eq.s32.totalorder %s24, 0
    %p363 = por %p361, %p362
    %p364 = scmp.ne.s32.totalorder %s353, %s356
    %p365 = scmp.eq.s32.totalorder %s29, 3
    %p366 = por %p364, %p365
    %p367 = scmp.ne.s32.totalorder %s356, %s357
    %p368 = scmp.eq.s32.totalorder %s29, 0
    %p369 = por %p367, %p368
    %p370 = scmp.ne.s32.totalorder %s356, %s357
    %p371 = scmp.eq.s32.totalorder %s30, 3
    %p372 = por %p370, %p371
    %p374 = scmp.ne.s32.totalorder %s357, %s373
    %p375 = scmp.eq.s32.totalorder %s30, 0
    %p376 = por %p374, %p375
    %s377 = ssub.s32 %s32, %s39
    %p378 = scmp.eq.s32.totalorder %s377, 0
    %s380 = sadd.s32 %s379, 1
    %s381 = scalar_select %p378, %s379, %s380
    %p384 = pneg %p378
    %p385 = scmp.eq.s32.totalorder %s24, 3
    %p386 = por %p384, %p385
    %p387 = scmp.ne.s32.totalorder %s379, %s382
    %p388 = scmp.eq.s32.totalorder %s24, 0
    %p389 = por %p387, %p388
    %p390 = scmp.ne.s32.totalorder %s379, %s382
    %p391 = scmp.eq.s32.totalorder %s29, 3
    %p392 = por %p390, %p391
    %p393 = scmp.ne.s32.totalorder %s382, %s383
    %p394 = scmp.eq.s32.totalorder %s29, 0
    %p395 = por %p393, %p394
    %p396 = scmp.ne.s32.totalorder %s382, %s383
    %p397 = scmp.eq.s32.totalorder %s30, 3
    %p398 = por %p396, %p397
    %p400 = scmp.ne.s32.totalorder %s383, %s399
    %p401 = scmp.eq.s32.totalorder %s30, 0
    %p402 = por %p400, %p401
    %s403 = ssub.s32 %s32, %s39
    %p404 = scmp.eq.s32.totalorder %s403, 0
    %s406 = sadd.s32 %s405, 1
    %s407 = scalar_select %p404, %s405, %s406
    %p410 = pneg %p404
    %p411 = scmp.eq.s32.totalorder %s24, 3
    %p412 = por %p410, %p411
    %p413 = scmp.ne.s32.totalorder %s405, %s408
    %p414 = scmp.eq.s32.totalorder %s24, 0
    %p415 = por %p413, %p414
    %p416 = scmp.ne.s32.totalorder %s405, %s408
    %p417 = scmp.eq.s32.totalorder %s29, 3
    %p418 = por %p416, %p417
    %p419 = scmp.ne.s32.totalorder %s408, %s409
    %p420 = scmp.eq.s32.totalorder %s29, 0
    %p421 = por %p419, %p420
    %p422 = scmp.ne.s32.totalorder %s408, %s409
    %p423 = scmp.eq.s32.totalorder %s30, 3
    %p424 = por %p422, %p423
    %p426 = scmp.ne.s32.totalorder %s409, %s425
    %p427 = scmp.eq.s32.totalorder %s30, 0
    %p428 = por %p426, %p427
    %s429 = ssub.s32 %s32, %s39
    %p430 = scmp.eq.s32.totalorder %s429, 0
    %s432 = sadd.s32 %s431, 1
    %s433 = scalar_select %p430, %s431, %s432
    %p436 = pneg %p430
    %p437 = scmp.eq.s32.totalorder %s24, 3
    %p438 = por %p436, %p437
    %p439 = scmp.ne.s32.totalorder %s431, %s434
    %p440 = scmp.eq.s32.totalorder %s24, 0
    %p441 = por %p439, %p440
    %p442 = scmp.ne.s32.totalorder %s431, %s434
    %p443 = scmp.eq.s32.totalorder %s29, 3
    %p444 = por %p442, %p443
    %p445 = scmp.ne.s32.totalorder %s434, %s435
    %p446 = scmp.eq.s32.totalorder %s29, 0
    %p447 = por %p445, %p446
    %p448 = scmp.ne.s32.totalorder %s434, %s435
    %p449 = scmp.eq.s32.totalorder %s30, 3
    %p450 = por %p448, %p449
    %p452 = scmp.ne.s32.totalorder %s435, %s451
    %p453 = scmp.eq.s32.totalorder %s30, 0
    %p454 = por %p452, %p453
    %s455 = ssub.s32 %s32, %s39
    %p456 = scmp.eq.s32.totalorder %s455, 0
    %s458 = sadd.s32 %s457, 1
    %s459 = scalar_select %p456, %s457, %s458
    %p462 = pneg %p456
    %p463 = scmp.eq.s32.totalorder %s24, 3
    %p464 = por %p462, %p463
    %p465 = scmp.ne.s32.totalorder %s457, %s460
    %p466 = scmp.eq.s32.totalorder %s24, 0
    %p467 = por %p465, %p466
    %p468 = scmp.ne.s32.totalorder %s457, %s460
    %p469 = scmp.eq.s32.totalorder %s29, 3
    %p470 = por %p468, %p469
    %p471 = scmp.ne.s32.totalorder %s460, %s461
    %p472 = scmp.eq.s32.totalorder %s29, 0
    %p473 = por %p471, %p472
    %p474 = scmp.ne.s32.totalorder %s460, %s461
    %p475 = scmp.eq.s32.totalorder %s30, 3
    %p476 = por %p474, %p475
    %p478 = scmp.ne.s32.totalorder %s461, %s477
    %p479 = scmp.eq.s32.totalorder %s30, 0
    %p480 = por %p478, %p479
    %s481 = ssub.s32 %s32, %s39
    %p482 = scmp.eq.s32.totalorder %s481, 0
    %s484 = sadd.s32 %s483, 1
    %s485 = scalar_select %p482, %s483, %s484
    %p488 = pneg %p482
    %p489 = scmp.eq.s32.totalorder %s24, 3
    %p490 = por %p488, %p489
    %p491 = scmp.ne.s32.totalorder %s483, %s486
    %p492 = scmp.eq.s32.totalorder %s24, 0
    %p493 = por %p491, %p492
    %p494 = scmp.ne.s32.totalorder %s483, %s486
    %p495 = scmp.eq.s32.totalorder %s29, 3
    %p496 = por %p494, %p495
    %p497 = scmp.ne.s32.totalorder %s486, %s487
    %p498 = scmp.eq.s32.totalorder %s29, 0
    %p499 = por %p497, %p498
    %p500 = scmp.ne.s32.totalorder %s486, %s487
    %p501 = scmp.eq.s32.totalorder %s30, 3
    %p502 = por %p500, %p501
    %p504 = scmp.ne.s32.totalorder %s487, %s503
    %p505 = scmp.eq.s32.totalorder %s30, 0
    %p506 = por %p504, %p505
    %s507 = ssub.s32 %s31, %s43
    %p508 = scmp.eq.s32.totalorder %s507, 0
    %s510 = sadd.s32 %s509, 1
    %s511 = scalar_select %p508, %s509, %s510
    %p514 = pneg %p508
    %p515 = scmp.eq.s32.totalorder %s24, 3
    %p516 = por %p514, %p515
    %p517 = scmp.ne.s32.totalorder %s509, %s512
    %p518 = scmp.eq.s32.totalorder %s24, 0
    %p519 = por %p517, %p518
    %p520 = scmp.ne.s32.totalorder %s509, %s512
    %p521 = scmp.eq.s32.totalorder %s29, 3
    %p522 = por %p520, %p521
    %p523 = scmp.ne.s32.totalorder %s512, %s513
    %p524 = scmp.eq.s32.totalorder %s29, 0
    %p525 = por %p523, %p524
    %p526 = scmp.ne.s32.totalorder %s512, %s513
    %p527 = scmp.eq.s32.totalorder %s30, 3
    %p528 = por %p526, %p527
    %p530 = scmp.ne.s32.totalorder %s513, %s529
    %p531 = scmp.eq.s32.totalorder %s30, 0
    %p532 = por %p530, %p531
    %p533 = scmp.le.s32.totalorder 1, %s24
    %p534 = scmp.lt.s32.totalorder %s24, 5
    %p535 = pnand %p533, %p534
    %p536 = pneg %p535
    // Predicated region
    $region9: #{decision_transformer_forward.4} parent=5 // pred_check
      _
    $region10: #{decision_transformer_forward.4} parent=5 // pred_check_branch
      %538 = sbr.rel (%p535) target = $region12
    $region11: #{decision_transformer_forward.4} parent=5 // pred_region
      %s539 = ssub.s32 %s24, 1
      // Predicated region
      $region13: #{decision_transformer_forward.4} parent=11 // pred_check
        %p540 = pneg %p83
      $region14: #{decision_transformer_forward.4} parent=11 // pred_check_branch
        %542 = sbr.rel (%p540) target = $region16
      $region15: #{decision_transformer_forward.4} parent=11 // pred_region
        _
      $region16: #{decision_transformer_forward.4} parent=11 // pred_fallthru
        _
    $region12: #{decision_transformer_forward.4} parent=5 // pred_fallthru
      _
    %p543 = scmp.lt.s32.totalorder %s24, 4
    // Predicated region
    $region17: #{decision_transformer_forward.4} parent=5 // pred_check
      %p544 = pneg %p543
    $region18: #{decision_transformer_forward.4} parent=5 // pred_check_branch
      %546 = sbr.rel (%p544) target = $region20
    $region19: #{decision_transformer_forward.4} parent=5 // pred_region
      // Predicated region
      $region21: #{decision_transformer_forward.4} parent=19 // pred_check
        %p547 = pneg %p56
      $region22: #{decision_transformer_forward.4} parent=19 // pred_check_branch
        %549 = sbr.rel (%p547) target = $region24
      $region23: #{decision_transformer_forward.4} parent=19 // pred_region
        %s550 = smul.u32 3, %s31
        %p551 = scmp.lt.s32.totalorder %s550, 5
        %s552 = scalar_select %p551, %s550, 5
        %s553 = smul.addr %s552, 8
        %s554 = scalar_lea.vmem %s0, %s553
        %s555 = smul.u32 3, %s31
      $region24: #{decision_transformer_forward.4} parent=19 // pred_fallthru
        _
      // Predicated region
      $region25: #{decision_transformer_forward.4} parent=19 // pred_check
        %p556 = pneg %p103
      $region26: #{decision_transformer_forward.4} parent=19 // pred_check_branch
        %558 = sbr.rel (%p556) target = $region28
      $region27: #{decision_transformer_forward.4} parent=19 // pred_region
        %p559 = scmp.lt.s32.totalorder %s32, 1
        %s560 = scalar_select %p559, %s32, 1
        %s561 = smul.addr %s560, 4
        %s562 = smul.addr %s561, 4
        %s563 = scalar_lea.vmem %s2, %s562
      $region28: #{decision_transformer_forward.4} parent=19 // pred_fallthru
        _
      // Predicated region
      $region29: #{decision_transformer_forward.4} parent=19 // pred_check
        %p564 = pneg %p129
      $region30: #{decision_transformer_forward.4} parent=19 // pred_check_branch
        %566 = sbr.rel (%p564) target = $region32
      $region31: #{decision_transformer_forward.4} parent=19 // pred_region
        %p567 = scmp.lt.s32.totalorder %s32, 1
        %s568 = scalar_select %p567, %s32, 1
        %s569 = scalar_lea.vmem %s3, %s568
      $region32: #{decision_transformer_forward.4} parent=19 // pred_fallthru
        _
      // Predicated region
      $region33: #{decision_transformer_forward.4} parent=19 // pred_check
        %p570 = pneg %p155
      $region34: #{decision_transformer_forward.4} parent=19 // pred_check_branch
        %572 = sbr.rel (%p570) target = $region36
      $region35: #{decision_transformer_forward.4} parent=19 // pred_region
        %p573 = scmp.lt.s32.totalorder %s32, 1
        %s574 = scalar_select %p573, %s32, 1
        %s575 = smul.addr %s574, 4
        %s576 = smul.addr %s575, 4
        %s577 = scalar_lea.vmem %s4, %s576
      $region36: #{decision_transformer_forward.4} parent=19 // pred_fallthru
        _
      // Predicated region
      $region37: #{decision_transformer_forward.4} parent=19 // pred_check
        %p578 = pneg %p181
      $region38: #{decision_transformer_forward.4} parent=19 // pred_check_branch
        %580 = sbr.rel (%p578) target = $region40
      $region39: #{decision_transformer_forward.4} parent=19 // pred_region
        %p581 = scmp.lt.s32.totalorder %s32, 1
        %s582 = scalar_select %p581, %s32, 1
        %s583 = scalar_lea.vmem %s5, %s582
      $region40: #{decision_transformer_forward.4} parent=19 // pred_fallthru
        _
      // Predicated region
      $region41: #{decision_transformer_forward.4} parent=19 // pred_check
        %p584 = pneg %p207
      $region42: #{decision_transformer_forward.4} parent=19 // pred_check_branch
        %586 = sbr.rel (%p584) target = $region44
      $region43: #{decision_transformer_forward.4} parent=19 // pred_region
        %p587 = scmp.lt.s32.totalorder %s32, 1
        %s588 = scalar_select %p587, %s32, 1
        %s589 = smul.addr %s588, 4
        %s590 = smul.addr %s589, 4
        %s591 = scalar_lea.vmem %s6, %s590
      $region44: #{decision_transformer_forward.4} parent=19 // pred_fallthru
        _
      // Predicated region
      $region45: #{decision_transformer_forward.4} parent=19 // pred_check
        %p592 = pneg %p233
      $region46: #{decision_transformer_forward.4} parent=19 // pred_check_branch
        %594 = sbr.rel (%p592) target = $region48
      $region47: #{decision_transformer_forward.4} parent=19 // pred_region
        %p595 = scmp.lt.s32.totalorder %s32, 1
        %s596 = scalar_select %p595, %s32, 1
        %s597 = scalar_lea.vmem %s7, %s596
      $region48: #{decision_transformer_forward.4} parent=19 // pred_fallthru
        _
      // Predicated region
      $region49: #{decision_transformer_forward.4} parent=19 // pred_check
        %p598 = pneg %p259
      $region50: #{decision_transformer_forward.4} parent=19 // pred_check_branch
        %600 = sbr.rel (%p598) target = $region52
      $region51: #{decision_transformer_forward.4} parent=19 // pred_region
        %p601 = scmp.lt.s32.totalorder %s32, 1
        %s602 = scalar_select %p601, %s32, 1
        %s603 = smul.addr %s602, 4
        %s604 = smul.addr %s603, 4
        %s605 = scalar_lea.vmem %s8, %s604
      $region52: #{decision_transformer_forward.4} parent=19 // pred_fallthru
        _
      // Predicated region
      $region53: #{decision_transformer_forward.4} parent=19 // pred_check
        %p606 = pneg %p285
      $region54: #{decision_transformer_forward.4} parent=19 // pred_check_branch
        %608 = sbr.rel (%p606) target = $region56
      $region55: #{decision_transformer_forward.4} parent=19 // pred_region
        %p609 = scmp.lt.s32.totalorder %s32, 1
        %s610 = scalar_select %p609, %s32, 1
        %s611 = scalar_lea.vmem %s9, %s610
      $region56: #{decision_transformer_forward.4} parent=19 // pred_fallthru
        _
      // Predicated region
      $region57: #{decision_transformer_forward.4} parent=19 // pred_check
        %p612 = pneg %p311
      $region58: #{decision_transformer_forward.4} parent=19 // pred_check_branch
        %614 = sbr.rel (%p612) target = $region60
      $region59: #{decision_transformer_forward.4} parent=19 // pred_region
        %p615 = scmp.lt.s32.totalorder %s32, 1
        %s616 = scalar_select %p615, %s32, 1
        %s617 = scalar_lea.vmem %s10, %s616
      $region60: #{decision_transformer_forward.4} parent=19 // pred_fallthru
        _
      // Predicated region
      $region61: #{decision_transformer_forward.4} parent=19 // pred_check
        %p618 = pneg %p337
      $region62: #{decision_transformer_forward.4} parent=19 // pred_check_branch
        %620 = sbr.rel (%p618) target = $region64
      $region63: #{decision_transformer_forward.4} parent=19 // pred_region
        %p621 = scmp.lt.s32.totalorder %s32, 1
        %s622 = scalar_select %p621, %s32, 1
        %s623 = scalar_lea.vmem %s11, %s622
      $region64: #{decision_transformer_forward.4} parent=19 // pred_fallthru
        _
      // Predicated region
      $region65: #{decision_transformer_forward.4} parent=19 // pred_check
        %p624 = pneg %p363
      $region66: #{decision_transformer_forward.4} parent=19 // pred_check_branch
        %626 = sbr.rel (%p624) target = $region68
      $region67: #{decision_transformer_forward.4} parent=19 // pred_region
        %p627 = scmp.lt.s32.totalorder %s32, 1
        %s628 = scalar_select %p627, %s32, 1
        %s629 = smul.addr %s628, 4
        %s630 = smul.addr %s629, 4
        %s631 = scalar_lea.vmem %s12, %s630
      $region68: #{decision_transformer_forward.4} parent=19 // pred_fallthru
        _
      // Predicated region
      $region69: #{decision_transformer_forward.4} parent=19 // pred_check
        %p632 = pneg %p389
      $region70: #{decision_transformer_forward.4} parent=19 // pred_check_branch
        %634 = sbr.rel (%p632) target = $region72
      $region71: #{decision_transformer_forward.4} parent=19 // pred_region
        %p635 = scmp.lt.s32.totalorder %s32, 1
        %s636 = scalar_select %p635, %s32, 1
        %s637 = scalar_lea.vmem %s13, %s636
      $region72: #{decision_transformer_forward.4} parent=19 // pred_fallthru
        _
      // Predicated region
      $region73: #{decision_transformer_forward.4} parent=19 // pred_check
        %p638 = pneg %p415
      $region74: #{decision_transformer_forward.4} parent=19 // pred_check_branch
        %640 = sbr.rel (%p638) target = $region76
      $region75: #{decision_transformer_forward.4} parent=19 // pred_region
        %p641 = scmp.lt.s32.totalorder %s32, 1
        %s642 = scalar_select %p641, %s32, 1
        %s643 = smul.addr %s642, 16
        %s644 = smul.addr %s643, 4
        %s645 = scalar_lea.vmem %s14, %s644
      $region76: #{decision_transformer_forward.4} parent=19 // pred_fallthru
        _
      // Predicated region
      $region77: #{decision_transformer_forward.4} parent=19 // pred_check
        %p646 = pneg %p441
      $region78: #{decision_transformer_forward.4} parent=19 // pred_check_branch
        %648 = sbr.rel (%p646) target = $region80
      $region79: #{decision_transformer_forward.4} parent=19 // pred_region
        %p649 = scmp.lt.s32.totalorder %s32, 1
        %s650 = scalar_select %p649, %s32, 1
        %s651 = scalar_lea.vmem %s15, %s650
      $region80: #{decision_transformer_forward.4} parent=19 // pred_fallthru
        _
      // Predicated region
      $region81: #{decision_transformer_forward.4} parent=19 // pred_check
        %p652 = pneg %p467
      $region82: #{decision_transformer_forward.4} parent=19 // pred_check_branch
        %654 = sbr.rel (%p652) target = $region84
      $region83: #{decision_transformer_forward.4} parent=19 // pred_region
        %p655 = scmp.lt.s32.totalorder %s32, 1
        %s656 = scalar_select %p655, %s32, 1
        %s657 = scalar_lea.vmem %s16, %s656
      $region84: #{decision_transformer_forward.4} parent=19 // pred_fallthru
        _
      // Predicated region
      $region85: #{decision_transformer_forward.4} parent=19 // pred_check
        %p658 = pneg %p493
      $region86: #{decision_transformer_forward.4} parent=19 // pred_check_branch
        %660 = sbr.rel (%p658) target = $region88
      $region87: #{decision_transformer_forward.4} parent=19 // pred_region
        %p661 = scmp.lt.s32.totalorder %s32, 1
        %s662 = scalar_select %p661, %s32, 1
        %s663 = scalar_lea.vmem %s17, %s662
      $region88: #{decision_transformer_forward.4} parent=19 // pred_fallthru
        _
    $region20: #{decision_transformer_forward.4} parent=5 // pred_fallthru
      _
    %p664 = scmp.le.s32.totalorder 1, %s24
    %p665 = scmp.lt.s32.totalorder %s24, 5
    %p666 = pnand %p664, %p665
    %p667 = pneg %p666
    // Predicated region
    $region89: #{decision_transformer_forward.4} parent=5 // pred_check
      _
    $region90: #{decision_transformer_forward.4} parent=5 // pred_check_branch
      %669 = sbr.rel (%p666) target = $region92
    $region91: #{decision_transformer_forward.4} parent=5 // pred_region
      %s670 = ssub.s32 %s24, 1
      %s671 = smul.u32 3, %s33
      %p672 = scmp.lt.s32.totalorder %s671, 5
      %s673 = scalar_select %p672, %s671, 5
      %s674 = smul.addr %s673, 8
      %s675 = scalar_lea.vmem %s0, %s674
      %p676 = pneg %p62
      %p677 = pneg %p59
      %p678 = pneg %p83
      %p679 = pneg %p80
      %p680 = scmp.lt.s32.totalorder %s34, 1
      %s681 = scalar_select %p680, %s34, 1
      %s682 = smul.addr %s681, 4
      %s683 = smul.addr %s682, 4
      %s684 = scalar_lea.vmem %s2, %s683
      %p685 = pneg %p109
      %p686 = pneg %p106
      %p687 = scmp.lt.s32.totalorder %s34, 1
      %s688 = scalar_select %p687, %s34, 1
      %s689 = scalar_lea.vmem %s3, %s688
      %p690 = pneg %p135
      %p691 = pneg %p132
      %p692 = scmp.lt.s32.totalorder %s34, 1
      %s693 = scalar_select %p692, %s34, 1
      %s694 = smul.addr %s693, 4
      %s695 = smul.addr %s694, 4
      %s696 = scalar_lea.vmem %s4, %s695
      %p697 = pneg %p161
      %p698 = pneg %p158
      %p699 = scmp.lt.s32.totalorder %s34, 1
      %s700 = scalar_select %p699, %s34, 1
      %s701 = scalar_lea.vmem %s5, %s700
      %p702 = pneg %p187
      %p703 = pneg %p184
      %p704 = scmp.lt.s32.totalorder %s34, 1
      %s705 = scalar_select %p704, %s34, 1
      %s706 = smul.addr %s705, 4
      %s707 = smul.addr %s706, 4
      %s708 = scalar_lea.vmem %s6, %s707
      %p709 = pneg %p213
      %p710 = pneg %p210
      %p711 = scmp.lt.s32.totalorder %s34, 1
      %s712 = scalar_select %p711, %s34, 1
      %s713 = scalar_lea.vmem %s7, %s712
      %p714 = pneg %p239
      %p715 = pneg %p236
      %p716 = scmp.lt.s32.totalorder %s34, 1
      %s717 = scalar_select %p716, %s34, 1
      %s718 = smul.addr %s717, 4
      %s719 = smul.addr %s718, 4
      %s720 = scalar_lea.vmem %s8, %s719
      %p721 = pneg %p265
      %p722 = pneg %p262
      %p723 = scmp.lt.s32.totalorder %s34, 1
      %s724 = scalar_select %p723, %s34, 1
      %s725 = scalar_lea.vmem %s9, %s724
      %p726 = pneg %p291
      %p727 = pneg %p288
      %p728 = scmp.lt.s32.totalorder %s34, 1
      %s729 = scalar_select %p728, %s34, 1
      %s730 = scalar_lea.vmem %s10, %s729
      %p731 = pneg %p317
      %p732 = pneg %p314
      %p733 = scmp.lt.s32.totalorder %s34, 1
      %s734 = scalar_select %p733, %s34, 1
      %s735 = scalar_lea.vmem %s11, %s734
      %p736 = pneg %p343
      %p737 = pneg %p340
      %p738 = scmp.lt.s32.totalorder %s34, 1
      %s739 = scalar_select %p738, %s34, 1
      %s740 = smul.addr %s739, 4
      %s741 = smul.addr %s740, 4
      %s742 = scalar_lea.vmem %s12, %s741
      %p743 = pneg %p369
      %p744 = pneg %p366
      %p745 = scmp.lt.s32.totalorder %s34, 1
      %s746 = scalar_select %p745, %s34, 1
      %s747 = scalar_lea.vmem %s13, %s746
      %p748 = pneg %p395
      %p749 = pneg %p392
      %p750 = scmp.lt.s32.totalorder %s34, 1
      %s751 = scalar_select %p750, %s34, 1
      %s752 = smul.addr %s751, 16
      %s753 = smul.addr %s752, 4
      %s754 = scalar_lea.vmem %s14, %s753
      %p755 = pneg %p421
      %p756 = pneg %p418
      %p757 = scmp.lt.s32.totalorder %s34, 1
      %s758 = scalar_select %p757, %s34, 1
      %s759 = scalar_lea.vmem %s15, %s758
      %p760 = pneg %p447
      %p761 = pneg %p444
      %p762 = scmp.lt.s32.totalorder %s34, 1
      %s763 = scalar_select %p762, %s34, 1
      %s764 = scalar_lea.vmem %s16, %s763
      %p765 = pneg %p473
      %p766 = pneg %p470
      %p767 = scmp.lt.s32.totalorder %s34, 1
      %s768 = scalar_select %p767, %s34, 1
      %s769 = scalar_lea.vmem %s17, %s768
      %p770 = pneg %p499
      %p771 = pneg %p496
      %p772 = pneg %p525
      %p773 = pneg %p522
      %s774 = smul.u32 3, %s33
      %p775 = scmp.lt.s32.totalorder %s774, 5
      %s776 = scalar_select %p775, %s774, 5
      %s777 = smul.addr %s776, 8
      %s778 = scalar_lea.vmem %s18, %s777
      %s779 = smul.u32 3, %s33
      %p780 = scmp.lt.s32.totalorder %s779, 5
      %s781 = scalar_select %p780, %s779, 5
      %s782 = smul.addr %s781, 8
      %s783 = scalar_lea.vmem %s0, %s782
      %s784 = smul.u32 3, %s33
      %p785 = scmp.lt.s32.totalorder %s34, 1
      %s786 = scalar_select %p785, %s34, 1
      %s787 = smul.addr %s786, 4
      %s788 = smul.addr %s787, 4
      %s789 = scalar_lea.vmem %s2, %s788
      %p790 = scmp.lt.s32.totalorder %s34, 1
      %s791 = scalar_select %p790, %s34, 1
      %s792 = scalar_lea.vmem %s3, %s791
      %p793 = scmp.lt.s32.totalorder %s34, 1
      %s794 = scalar_select %p793, %s34, 1
      %s795 = smul.addr %s794, 4
      %s796 = smul.addr %s795, 4
      %s797 = scalar_lea.vmem %s4, %s796
      %p798 = scmp.lt.s32.totalorder %s34, 1
      %s799 = scalar_select %p798, %s34, 1
      %s800 = scalar_lea.vmem %s5, %s799
      %p801 = scmp.lt.s32.totalorder %s34, 1
      %s802 = scalar_select %p801, %s34, 1
      %s803 = smul.addr %s802, 4
      %s804 = smul.addr %s803, 4
      %s805 = scalar_lea.vmem %s6, %s804
      %p806 = scmp.lt.s32.totalorder %s34, 1
      %s807 = scalar_select %p806, %s34, 1
      %s808 = scalar_lea.vmem %s7, %s807
      %p809 = scmp.lt.s32.totalorder %s34, 1
      %s810 = scalar_select %p809, %s34, 1
      %s811 = smul.addr %s810, 4
      %s812 = smul.addr %s811, 4
      %s813 = scalar_lea.vmem %s8, %s812
      %p814 = scmp.lt.s32.totalorder %s34, 1
      %s815 = scalar_select %p814, %s34, 1
      %s816 = scalar_lea.vmem %s9, %s815
      %p817 = scmp.lt.s32.totalorder %s34, 1
      %s818 = scalar_select %p817, %s34, 1
      %s819 = scalar_lea.vmem %s10, %s818
      %p820 = scmp.lt.s32.totalorder %s34, 1
      %s821 = scalar_select %p820, %s34, 1
      %s822 = scalar_lea.vmem %s11, %s821
      %p823 = scmp.lt.s32.totalorder %s34, 1
      %s824 = scalar_select %p823, %s34, 1
      %s825 = smul.addr %s824, 4
      %s826 = smul.addr %s825, 4
      %s827 = scalar_lea.vmem %s12, %s826
      %p828 = scmp.lt.s32.totalorder %s34, 1
      %s829 = scalar_select %p828, %s34, 1
      %s830 = scalar_lea.vmem %s13, %s829
      %p831 = scmp.lt.s32.totalorder %s34, 1
      %s832 = scalar_select %p831, %s34, 1
      %s833 = smul.addr %s832, 16
      %s834 = smul.addr %s833, 4
      %s835 = scalar_lea.vmem %s14, %s834
      %p836 = scmp.lt.s32.totalorder %s34, 1
      %s837 = scalar_select %p836, %s34, 1
      %s838 = scalar_lea.vmem %s15, %s837
      %p839 = scmp.lt.s32.totalorder %s34, 1
      %s840 = scalar_select %p839, %s34, 1
      %s841 = scalar_lea.vmem %s16, %s840
      %p842 = scmp.lt.s32.totalorder %s34, 1
      %s843 = scalar_select %p842, %s34, 1
      %s844 = scalar_lea.vmem %s17, %s843
      %s845 = smul.u32 3, %s33
      %p846 = scmp.lt.s32.totalorder %s845, 5
      %s847 = scalar_select %p846, %s845, 5
      %s848 = smul.addr %s847, 8
      %s849 = scalar_lea.vmem %s18, %s848
      %s850 = smul.u32 3, %s33
      %p852 = scmp.eq.s32.totalorder %s34, 0
      // Predicated region
      $region93: #{decision_transformer_forward.4} parent=91 // pred_check
        %p853 = pneg %p852
      $region94: #{decision_transformer_forward.4} parent=91 // pred_check_branch
        %855 = sbr.rel (%p853) target = $region96
      $region95: #{decision_transformer_forward.4} parent=91 // pred_region
        %v856 = vld [vmem:[%s783] sm:$0xff]
        %v857 = vld [vmem:[%s783 + $0x8] sm:$0xff]
        %v858 = vld [vmem:[%s783 + $0x10] sm:$0xff]
        %vm859 = vcmask 261120
        %860 = vst.msk [vmem:[%s849] sm:$0xff] %vm859, %v856
        %861 = vst.msk [vmem:[%s849 + $0x8] sm:$0xff] %vm859, %v857
        %862 = vst.msk [vmem:[%s849 + $0x10] sm:$0xff] %vm859, %v858
      $region96: #{decision_transformer_forward.4} parent=91 // pred_fallthru
        _
      %v863 = vld [vmem:[%s849] sm:$0xff]
      %v864 = vld [vmem:[%s849 + $0x8] sm:$0xff]
      %v865 = vld [vmem:[%s849 + $0x10] sm:$0xff]
      %v866 = vld [vmem:[%s789] sm:$0xf]
      %v867 = vld [vmem:[%s789 + $0x4] sm:$0xf]
      %v868 = vld [vmem:[%s789 + $0x8] sm:$0xf]
      %v869 = vld [vmem:[%s789 + $0xc] sm:$0xf]
      %v870 = vld [vmem:[%s797] sm:$0xf]
      %v871 = vld [vmem:[%s797 + $0x4] sm:$0xf]
      %v872 = vld [vmem:[%s797 + $0x8] sm:$0xf]
      %v873 = vld [vmem:[%s797 + $0xc] sm:$0xf]
      %v874 = vld [vmem:[%s805] sm:$0xf]
      %v875 = vld [vmem:[%s805 + $0x4] sm:$0xf]
      %v876 = vld [vmem:[%s805 + $0x8] sm:$0xf]
      %v877 = vld [vmem:[%s805 + $0xc] sm:$0xf]
      %v878 = vld [vmem:[%s813] sm:$0xf]
      %v879 = vld [vmem:[%s813 + $0x4] sm:$0xf]
      %v880 = vld [vmem:[%s813 + $0x8] sm:$0xf]
      %v881 = vld [vmem:[%s813 + $0xc] sm:$0xf]
      %v882 = vld [vmem:[%s792] sm:$0x1]
      %v883 = vld [vmem:[%s800] sm:$0x1]
      %v884 = vld [vmem:[%s808] sm:$0x1]
      %v885 = vld [vmem:[%s816] sm:$0x1]
      %v886 = vpack.c.bf16 %v864, %v863
      %v887 = vpack.c.bf16 %v865, %v865
      %v889 = vperm.slane %v882, 0
      %v895 = vunpack.c.l.b16 %v866
      %v896 = vunpack.c.l.b16 %v867
      %v897 = vunpack.c.l.b16 %v868
      %v898 = vunpack.c.l.b16 %v869
      %v899 = vpack.c.b16 %v896, %v895
      %v900 = vpack.c.b16 %v898, %v897
      %vm903 = vcmask 261120
      %v905 = vsel %vm903, %v886, 0
      %v908 = vsel %vm903, %v887, 0
      %910 = vmatpush.bf16.msra.mxu0 0
      %911 = vmatpush.bf16.msra.mxu0 0
      %912 = vmatpush.bf16.msra.mxu0 0
      %913 = vmatpush.bf16.msra.mxu0 0
      %914 = vmatpush.bf16.msra.mxu0 0
      %915 = vmatpush.bf16.msra.mxu0 0
      %916 = vmatpush.bf16.msra.mxu0 %v900
      %917 = vmatpush.bf16.msra.mxu0 %v899
      %918 = vmatmul.bf16.gmra.mxu0 %v905
      %v919 = vpop.f32.mrf.mxu0
      %v920 = vadd.f32 %v889, %v919
      %v921 = vpop.f32.mrf.mxu0
      %v922 = vadd.f32 %v889, %v921
      %923 = vmatmul.bf16.gmra.mxu0 %v908
      %v924 = vpop.f32.mrf.mxu0
      %v925 = vadd.f32 %v889, %v924
      %v926 = vpop.f32.mrf.mxu0
      %927 = vdwg.mxu0
      %v929 = vperm.slane %v883, 0
      %v935 = vunpack.c.l.b16 %v870
      %v936 = vunpack.c.l.b16 %v871
      %v937 = vunpack.c.l.b16 %v872
      %v938 = vunpack.c.l.b16 %v873
      %v939 = vpack.c.b16 %v936, %v935
      %v940 = vpack.c.b16 %v938, %v937
      %943 = vmatpush.bf16.msra.mxu0 0
      %944 = vmatpush.bf16.msra.mxu0 0
      %945 = vmatpush.bf16.msra.mxu0 0
      %946 = vmatpush.bf16.msra.mxu0 0
      %947 = vmatpush.bf16.msra.mxu0 0
      %948 = vmatpush.bf16.msra.mxu0 0
      %949 = vmatpush.bf16.msra.mxu0 %v940
      %950 = vmatpush.bf16.msra.mxu0 %v939
      %951 = vmatmul.bf16.gmra.mxu0 %v905
      %v952 = vpop.f32.mrf.mxu0
      %v953 = vadd.f32 %v929, %v952
      %v954 = vpop.f32.mrf.mxu0
      %v955 = vadd.f32 %v929, %v954
      %956 = vmatmul.bf16.gmra.mxu0 %v908
      %v957 = vpop.f32.mrf.mxu0
      %v958 = vadd.f32 %v929, %v957
      %v959 = vpop.f32.mrf.mxu0
      %960 = vdwg.mxu0
      %v962 = vperm.slane %v884, 0
      %v968 = vunpack.c.l.b16 %v874
      %v969 = vunpack.c.l.b16 %v875
      %v970 = vunpack.c.l.b16 %v876
      %v971 = vunpack.c.l.b16 %v877
      %v972 = vpack.c.b16 %v969, %v968
      %v973 = vpack.c.b16 %v971, %v970
      %976 = vmatpush.bf16.msra.mxu0 0
      %977 = vmatpush.bf16.msra.mxu0 0
      %978 = vmatpush.bf16.msra.mxu0 0
      %979 = vmatpush.bf16.msra.mxu0 0
      %980 = vmatpush.bf16.msra.mxu0 0
      %981 = vmatpush.bf16.msra.mxu0 0
      %982 = vmatpush.bf16.msra.mxu0 %v973
      %983 = vmatpush.bf16.msra.mxu0 %v972
      %984 = vmatmul.bf16.gmra.mxu0 %v905
      %v985 = vpop.f32.mrf.mxu0
      %v986 = vadd.f32 %v962, %v985
      %v987 = vpop.f32.mrf.mxu0
      %v988 = vadd.f32 %v962, %v987
      %989 = vmatmul.bf16.gmra.mxu0 %v908
      %v990 = vpop.f32.mrf.mxu0
      %v991 = vadd.f32 %v962, %v990
      %v992 = vpop.f32.mrf.mxu0
      %993 = vdwg.mxu0
      %v994 = vld [vmem:[%s1] sm:$0xff]
      %v995 = vld [vmem:[%s1 + $0x8] sm:$0xff]
      %v996 = vld [vmem:[%s1 + $0x10] sm:$0xff]
      %v997 = vpack.c.bf16 %v920, %v920
      %v998 = vpack.c.bf16 %v922, %v922
      %v999 = vpack.c.bf16 %v925, %v925
      %v1000 = vpack.c.bf16 %v953, %v953
      %v1001 = vpack.c.bf16 %v955, %v955
      %v1002 = vpack.c.bf16 %v958, %v958
      %v1006 = vunpack.c.l.b16 %v997
      %v1007 = vunpack.c.l.b16 %v998
      %v1008 = vunpack.c.l.b16 %v999
      %v1009 = vpack.c.b16 %v1007, %v1006
      %v1010 = vpack.c.b16 %v1008, %v1008
      %v1014 = vunpack.c.l.b16 %v1000
      %v1015 = vunpack.c.l.b16 %v1001
      %v1016 = vunpack.c.l.b16 %v1002
      %v1017 = vpack.c.b16 %v1015, %v1014
      %v1018 = vpack.c.b16 %v1016, %v1016
      %vm1019 = vcmask 130048
      %v1021 = vsel %vm1019, %v1009, 0
      %v1024 = vsel %vm1019, %v1010, 0
      %v1027 = vsel %vm1019, %v1017, 0
      %v1030 = vsel %vm1019, %v1018, 0
      %1032 = vmatpush.bf16.xpose.msra.mxu0 0
      %1033 = vmatpush.bf16.xpose.msra.mxu0 0
      %1034 = vmatpush.bf16.xpose.msra.mxu0 0
      %1035 = vmatpush.bf16.xpose.msra.mxu0 0
      %1036 = vmatpush.bf16.xpose.msra.mxu0 0
      %1037 = vmatpush.bf16.xpose.msra.mxu0 0
      %1038 = vmatpush.bf16.xpose.msra.mxu0 %v1030
      %1039 = vmatpush.bf16.xpose.msra.mxu0 %v1027
      %1040 = vmatmul.bf16.gmra.mxu0 %v1021
      %v1041 = vpop.f32.mrf.mxu0
      %v1042 = vadd.f32 0.0, %v1041
      %v1043 = vpop.f32.mrf.mxu0
      %v1044 = vadd.f32 0.0, %v1043
      %1045 = vmatmul.bf16.gmra.mxu0 %v1024
      %v1046 = vpop.f32.mrf.mxu0
      %v1047 = vadd.f32 0.0, %v1046
      %v1048 = vpop.f32.mrf.mxu0
      %1049 = vdwg.mxu0
      %v1050 = vmul.f32 %v1042, 0.25
      %v1051 = vmul.f32 %v1044, 0.25
      %v1052 = vmul.f32 %v1047, 0.25
      %v1053 = vadd.f32 %v1050, %v994
      %v1054 = vadd.f32 %v1051, %v995
      %v1055 = vadd.f32 %v1052, %v996
      %vm1056 = vcmask 195584
      %v1057 = vsel %vm1056, %v1053, -inf
      %1058 = vmax.xlane.f32.xlu0 %v1057
      %v1059 = vpop.xlane.xlu0 %1058
      %v1060 = vsel %vm1056, %v1054, -inf
      %1061 = vmax.xlane.f32.xlu0 %v1060
      %v1062 = vpop.xlane.xlu0 %1061
      %v1063 = vsel %vm1056, %v1055, -inf
      %1064 = vmax.xlane.f32.xlu0 %v1063
      %v1065 = vpop.xlane.xlu0 %1064
      %v1066 = vsub.f32 %v1053, %v1059
      %v1067 = vsub.f32 %v1054, %v1062
      %v1068 = vsub.f32 %v1055, %v1065
      %v1069 = vmul.f32 %v1066, 1.442695
      %v1070 = vpow.pop %v1069
      %v1071 = vmul.f32 %v1067, 1.442695
      %v1072 = vpow.pop %v1071
      %v1073 = vmul.f32 %v1068, 1.442695
      %v1074 = vpow.pop %v1073
      %v1075 = vsel %vm1056, %v1070, 0.0
      %1076 = vadd.xlane.f32.xlu0 %v1075
      %v1077 = vpop.xlane.xlu0 %1076
      %v1078 = vsel %vm1056, %v1072, 0.0
      %1079 = vadd.xlane.f32.xlu0 %v1078
      %v1080 = vpop.xlane.xlu0 %1079
      %v1081 = vsel %vm1056, %v1074, 0.0
      %1082 = vadd.xlane.f32.xlu0 %v1081
      %v1083 = vpop.xlane.xlu0 %1082
      %v1084 = vrcp.pop %v1077
      %v1085 = vrcp.pop %v1080
      %v1086 = vrcp.pop %v1083
      %v1087 = vmul.f32 %v1070, %v1084
      %v1088 = vmul.f32 %v1072, %v1085
      %v1089 = vmul.f32 %v1074, %v1086
      %v1090 = vpack.c.bf16 %v1087, %v1087
      %v1091 = vpack.c.bf16 %v1088, %v1088
      %v1092 = vpack.c.bf16 %v1089, %v1089
      %v1093 = vpack.c.bf16 %v986, %v986
      %v1094 = vpack.c.bf16 %v988, %v988
      %v1095 = vpack.c.bf16 %v991, %v991
      %v1099 = vunpack.c.l.b16 %v1090
      %v1100 = vunpack.c.l.b16 %v1091
      %v1101 = vunpack.c.l.b16 %v1092
      %v1102 = vpack.c.b16 %v1100, %v1099
      %v1103 = vpack.c.b16 %v1101, %v1101
      %v1107 = vunpack.c.l.b16 %v1093
      %v1108 = vunpack.c.l.b16 %v1094
      %v1109 = vunpack.c.l.b16 %v1095
      %v1110 = vpack.c.b16 %v1108, %v1107
      %v1111 = vpack.c.b16 %v1109, %v1109
      %v1114 = vsel %vm1056, %v1102, 0
      %v1117 = vsel %vm1056, %v1103, 0
      %vm1119 = vcmask 1043456
      %v1121 = vsel %vm1119, %v1111, 0
      %1123 = vmatpush.bf16.msra.mxu0 0
      %1124 = vmatpush.bf16.msra.mxu0 0
      %1125 = vmatpush.bf16.msra.mxu0 0
      %1126 = vmatpush.bf16.msra.mxu0 0
      %1127 = vmatpush.bf16.msra.mxu0 0
      %1128 = vmatpush.bf16.msra.mxu0 0
      %1129 = vmatpush.bf16.msra.mxu0 %v1121
      %1130 = vmatpush.bf16.msra.mxu0 %v1110
      %1131 = vmatmul.bf16.gmra.mxu0 %v1114
      %v1132 = vpop.f32.mrf.mxu0
      %v1133 = vadd.f32 0.0, %v1132
      %v1134 = vpop.f32.mrf.mxu0
      %v1135 = vadd.f32 0.0, %v1134
      %1136 = vmatmul.bf16.gmra.mxu0 %v1117
      %v1137 = vpop.f32.mrf.mxu0
      %v1138 = vadd.f32 0.0, %v1137
      %v1139 = vpop.f32.mrf.mxu0
      %1140 = vdwg.mxu0
      %1141 = vrot.lane.b32.xlu0 %v1009, 112
      %v1142 = vpop.permute.xlu0 %1141
      %1143 = vrot.lane.b32.xlu0 %v1010, 112
      %v1144 = vpop.permute.xlu0 %1143
      %1145 = vrot.lane.b32.xlu0 %v1017, 112
      %v1146 = vpop.permute.xlu0 %1145
      %1147 = vrot.lane.b32.xlu0 %v1018, 112
      %v1148 = vpop.permute.xlu0 %1147
      %v1150 = vsel %vm1019, %v1142, 0
      %v1153 = vsel %vm1019, %v1144, 0
      %v1156 = vsel %vm1019, %v1146, 0
      %v1159 = vsel %vm1019, %v1148, 0
      %1161 = vmatpush.bf16.xpose.msra.mxu0 0
      %1162 = vmatpush.bf16.xpose.msra.mxu0 0
      %1163 = vmatpush.bf16.xpose.msra.mxu0 0
      %1164 = vmatpush.bf16.xpose.msra.mxu0 0
      %1165 = vmatpush.bf16.xpose.msra.mxu0 0
      %1166 = vmatpush.bf16.xpose.msra.mxu0 0
      %1167 = vmatpush.bf16.xpose.msra.mxu0 %v1159
      %1168 = vmatpush.bf16.xpose.msra.mxu0 %v1156
      %1169 = vmatmul.bf16.gmra.mxu0 %v1150
      %v1170 = vpop.f32.mrf.mxu0
      %v1171 = vadd.f32 0.0, %v1170
      %v1172 = vpop.f32.mrf.mxu0
      %v1173 = vadd.f32 0.0, %v1172
      %1174 = vmatmul.bf16.gmra.mxu0 %v1153
      %v1175 = vpop.f32.mrf.mxu0
      %v1176 = vadd.f32 0.0, %v1175
      %v1177 = vpop.f32.mrf.mxu0
      %1178 = vdwg.mxu0
      %v1179 = vmul.f32 %v1171, 0.25
      %v1180 = vmul.f32 %v1173, 0.25
      %v1181 = vmul.f32 %v1176, 0.25
      %v1182 = vadd.f32 %v1179, %v994
      %v1183 = vadd.f32 %v1180, %v995
      %v1184 = vadd.f32 %v1181, %v996
      %v1185 = vsel %vm1056, %v1182, -inf
      %1186 = vmax.xlane.f32.xlu0 %v1185
      %v1187 = vpop.xlane.xlu0 %1186
      %v1188 = vsel %vm1056, %v1183, -inf
      %1189 = vmax.xlane.f32.xlu0 %v1188
      %v1190 = vpop.xlane.xlu0 %1189
      %v1191 = vsel %vm1056, %v1184, -inf
      %1192 = vmax.xlane.f32.xlu0 %v1191
      %v1193 = vpop.xlane.xlu0 %1192
      %v1194 = vsub.f32 %v1182, %v1187
      %v1195 = vsub.f32 %v1183, %v1190
      %v1196 = vsub.f32 %v1184, %v1193
      %v1197 = vmul.f32 %v1194, 1.442695
      %v1198 = vpow.pop %v1197
      %v1199 = vmul.f32 %v1195, 1.442695
      %v1200 = vpow.pop %v1199
      %v1201 = vmul.f32 %v1196, 1.442695
      %v1202 = vpow.pop %v1201
      %v1203 = vsel %vm1056, %v1198, 0.0
      %1204 = vadd.xlane.f32.xlu0 %v1203
      %v1205 = vpop.xlane.xlu0 %1204
      %v1206 = vsel %vm1056, %v1200, 0.0
      %1207 = vadd.xlane.f32.xlu0 %v1206
      %v1208 = vpop.xlane.xlu0 %1207
      %v1209 = vsel %vm1056, %v1202, 0.0
      %1210 = vadd.xlane.f32.xlu0 %v1209
      %v1211 = vpop.xlane.xlu0 %1210
      %v1212 = vrcp.pop %v1205
      %v1213 = vrcp.pop %v1208
      %v1214 = vrcp.pop %v1211
      %v1215 = vmul.f32 %v1198, %v1212
      %v1216 = vmul.f32 %v1200, %v1213
      %v1217 = vmul.f32 %v1202, %v1214
      %v1218 = vpack.c.bf16 %v1215, %v1215
      %v1219 = vpack.c.bf16 %v1216, %v1216
      %v1220 = vpack.c.bf16 %v1217, %v1217
      %v1224 = vunpack.c.l.b16 %v1218
      %v1225 = vunpack.c.l.b16 %v1219
      %v1226 = vunpack.c.l.b16 %v1220
      %v1227 = vpack.c.b16 %v1225, %v1224
      %v1228 = vpack.c.b16 %v1226, %v1226
      %1229 = vrot.lane.b32.xlu0 %v1110, 112
      %v1230 = vpop.permute.xlu0 %1229
      %1231 = vrot.lane.b32.xlu0 %v1111, 112
      %v1232 = vpop.permute.xlu0 %1231
      %v1235 = vsel %vm1056, %v1227, 0
      %v1238 = vsel %vm1056, %v1228, 0
      %v1241 = vsel %vm1119, %v1232, 0
      %1243 = vmatpush.bf16.msra.mxu0 0
      %1244 = vmatpush.bf16.msra.mxu0 0
      %1245 = vmatpush.bf16.msra.mxu0 0
      %1246 = vmatpush.bf16.msra.mxu0 0
      %1247 = vmatpush.bf16.msra.mxu0 0
      %1248 = vmatpush.bf16.msra.mxu0 0
      %1249 = vmatpush.bf16.msra.mxu0 %v1241
      %1250 = vmatpush.bf16.msra.mxu0 %v1230
      %1251 = vmatmul.bf16.gmra.mxu0 %v1235
      %v1252 = vpop.f32.mrf.mxu0
      %v1253 = vadd.f32 0.0, %v1252
      %v1254 = vpop.f32.mrf.mxu0
      %v1255 = vadd.f32 0.0, %v1254
      %1256 = vmatmul.bf16.gmra.mxu0 %v1238
      %v1257 = vpop.f32.mrf.mxu0
      %v1258 = vadd.f32 0.0, %v1257
      %v1259 = vpop.f32.mrf.mxu0
      %1260 = vdwg.mxu0
      %1264 = vrot.lane.b32.xlu0 %v1253, 16
      %v1265 = vpop.permute.xlu0 %1264
      %1266 = vrot.lane.b32.xlu0 %v1255, 16
      %v1267 = vpop.permute.xlu0 %1266
      %1268 = vrot.lane.b32.xlu0 %v1258, 16
      %v1269 = vpop.permute.xlu0 %1268
      %v1273 = vsel %vm1019, %v1133, %v1265
      %v1274 = vsel %vm1019, %v1135, %v1267
      %v1275 = vsel %vm1019, %v1138, %v1269
      %v1276 = vpack.c.bf16 %v1274, %v1273
      %v1277 = vpack.c.bf16 %v1275, %v1275
      %v1279 = vperm.slane %v885, 0
      %v1285 = vunpack.c.l.b16 %v878
      %v1286 = vunpack.c.l.b16 %v879
      %v1287 = vunpack.c.l.b16 %v880
      %v1288 = vunpack.c.l.b16 %v881
      %v1289 = vpack.c.b16 %v1286, %v1285
      %v1290 = vpack.c.b16 %v1288, %v1287
      %v1294 = vsel %vm903, %v1276, 0
      %v1297 = vsel %vm903, %v1277, 0
      %1299 = vmatpush.bf16.msra.mxu0 0
      %1300 = vmatpush.bf16.msra.mxu0 0
      %1301 = vmatpush.bf16.msra.mxu0 0
      %1302 = vmatpush.bf16.msra.mxu0 0
      %1303 = vmatpush.bf16.msra.mxu0 0
      %1304 = vmatpush.bf16.msra.mxu0 0
      %1305 = vmatpush.bf16.msra.mxu0 %v1290
      %1306 = vmatpush.bf16.msra.mxu0 %v1289
      %1307 = vmatmul.bf16.gmra.mxu0 %v1294
      %v1308 = vpop.f32.mrf.mxu0
      %v1309 = vadd.f32 %v1279, %v1308
      %v1310 = vpop.f32.mrf.mxu0
      %v1311 = vadd.f32 %v1279, %v1310
      %1312 = vmatmul.bf16.gmra.mxu0 %v1297
      %v1313 = vpop.f32.mrf.mxu0
      %v1314 = vadd.f32 %v1279, %v1313
      %v1315 = vpop.f32.mrf.mxu0
      %1316 = vdwg.mxu0
      %v1317 = vadd.f32 %v863, %v1309
      %v1318 = vadd.f32 %v864, %v1311
      %v1319 = vadd.f32 %v865, %v1314
      %v1320 = vld [vmem:[%s819] sm:$0x1]
      %v1321 = vld [vmem:[%s822] sm:$0x1]
      %v1322 = vsel %vm903, %v1317, 0.0
      %1323 = vadd.xlane.f32.xlu0 %v1322
      %v1324 = vpop.xlane.xlu0 %1323
      %v1325 = vsel %vm903, %v1318, 0.0
      %1326 = vadd.xlane.f32.xlu0 %v1325
      %v1327 = vpop.xlane.xlu0 %1326
      %v1328 = vsel %vm903, %v1319, 0.0
      %1329 = vadd.xlane.f32.xlu0 %v1328
      %v1330 = vpop.xlane.xlu0 %1329
      %v1331 = vrcp.pop 32.0
      %v1332 = vmul.f32 32.0, %v1331
      %v1333 = vsub.f32 1.0, %v1332
      %v1334 = vmul.f32 %v1331, %v1333
      %v1335 = vadd.f32 %v1331, %v1334
      %vm1336 = vweird.f32 %v1331
      %v1337 = vsel %vm1336, %v1331, %v1335
      %v1338 = vmul.f32 %v1324, %v1337
      %v1339 = vmul.f32 %v1327, %v1337
      %v1340 = vmul.f32 %v1330, %v1337
      %v1341 = vsub.f32 %v1317, %v1338
      %v1342 = vsub.f32 %v1318, %v1339
      %v1343 = vsub.f32 %v1319, %v1340
      %v1344 = vmul.f32 %v1341, %v1341
      %v1345 = vmul.f32 %v1342, %v1342
      %v1346 = vmul.f32 %v1343, %v1343
      %v1347 = vsel %vm903, %v1344, 0.0
      %1348 = vadd.xlane.f32.xlu0 %v1347
      %v1349 = vpop.xlane.xlu0 %1348
      %v1350 = vsel %vm903, %v1345, 0.0
      %1351 = vadd.xlane.f32.xlu0 %v1350
      %v1352 = vpop.xlane.xlu0 %1351
      %v1353 = vsel %vm903, %v1346, 0.0
      %1354 = vadd.xlane.f32.xlu0 %v1353
      %v1355 = vpop.xlane.xlu0 %1354
      %v1356 = vmul.f32 %v1349, %v1337
      %v1357 = vmul.f32 %v1352, %v1337
      %v1358 = vmul.f32 %v1355, %v1337
      %v1359 = vadd.f32 %v1356, 1e-05
      %v1360 = vadd.f32 %v1357, 1e-05
      %v1361 = vadd.f32 %v1358, 1e-05
      %v1362 = vrsqrt.pop %v1359
      %v1363 = vmul.f32 %v1362, %v1359
      %v1364 = vmul.f32 %v1363, %v1362
      %v1365 = vmul.f32 0.5, %v1364
      %v1366 = vsub.f32 1.5, %v1365
      %v1367 = vmul.f32 %v1362, %v1366
      %vm1368 = vweird.f32 %v1359
      %vm1369 = vweird.f32 %v1362
      %vm1370 = vmor %vm1368, %vm1369
      %v1371 = vsel %vm1370, %v1362, %v1367
      %v1372 = vrsqrt.pop %v1360
      %v1373 = vmul.f32 %v1372, %v1360
      %v1374 = vmul.f32 %v1373, %v1372
      %v1375 = vmul.f32 0.5, %v1374
      %v1376 = vsub.f32 1.5, %v1375
      %v1377 = vmul.f32 %v1372, %v1376
      %vm1378 = vweird.f32 %v1360
      %vm1379 = vweird.f32 %v1372
      %vm1380 = vmor %vm1378, %vm1379
      %v1381 = vsel %vm1380, %v1372, %v1377
      %v1382 = vrsqrt.pop %v1361
      %v1383 = vmul.f32 %v1382, %v1361
      %v1384 = vmul.f32 %v1383, %v1382
      %v1385 = vmul.f32 0.5, %v1384
      %v1386 = vsub.f32 1.5, %v1385
      %v1387 = vmul.f32 %v1382, %v1386
      %vm1388 = vweird.f32 %v1361
      %vm1389 = vweird.f32 %v1382
      %vm1390 = vmor %vm1388, %vm1389
      %v1391 = vsel %vm1390, %v1382, %v1387
      %v1392 = vmul.f32 %v1341, %v1371
      %v1393 = vmul.f32 %v1342, %v1381
      %v1394 = vmul.f32 %v1343, %v1391
      %v1396 = vperm.slane %v1320, 0
      %v1398 = vmul.f32 %v1392, %v1396
      %v1399 = vmul.f32 %v1393, %v1396
      %v1400 = vmul.f32 %v1394, %v1396
      %v1402 = vperm.slane %v1321, 0
      %v1404 = vadd.f32 %v1398, %v1402
      %v1405 = vadd.f32 %v1399, %v1402
      %v1406 = vadd.f32 %v1400, %v1402
      %v1407 = vld [vmem:[%s827] sm:$0xf]
      %v1408 = vld [vmem:[%s827 + $0x4] sm:$0xf]
      %v1409 = vld [vmem:[%s827 + $0x8] sm:$0xf]
      %v1410 = vld [vmem:[%s827 + $0xc] sm:$0xf]
      %v1411 = vpack.c.bf16 %v1405, %v1404
      %v1412 = vpack.c.bf16 %v1406, %v1406
      %v1413 = vld [vmem:[%s830] sm:$0x1]
      %v1415 = vperm.slane %v1413, 0
      %v1421 = vunpack.c.l.b16 %v1407
      %v1422 = vunpack.c.l.b16 %v1408
      %v1423 = vunpack.c.l.b16 %v1409
      %v1424 = vunpack.c.l.b16 %v1410
      %v1425 = vpack.c.b16 %v1422, %v1421
      %v1426 = vpack.c.b16 %v1424, %v1423
      %v1430 = vsel %vm903, %v1411, 0
      %v1433 = vsel %vm903, %v1412, 0
      %1435 = vmatpush.bf16.msra.mxu0 0
      %1436 = vmatpush.bf16.msra.mxu0 0
      %1437 = vmatpush.bf16.msra.mxu0 0
      %1438 = vmatpush.bf16.msra.mxu0 0
      %1439 = vmatpush.bf16.msra.mxu0 0
      %1440 = vmatpush.bf16.msra.mxu0 0
      %1441 = vmatpush.bf16.msra.mxu0 %v1426
      %1442 = vmatpush.bf16.msra.mxu0 %v1425
      %1443 = vmatmul.bf16.gmra.mxu0 %v1430
      %v1444 = vpop.f32.mrf.mxu0
      %v1445 = vadd.f32 %v1415, %v1444
      %v1446 = vpop.f32.mrf.mxu0
      %v1447 = vadd.f32 %v1415, %v1446
      %1448 = vmatmul.bf16.gmra.mxu0 %v1433
      %v1449 = vpop.f32.mrf.mxu0
      %v1450 = vadd.f32 %v1415, %v1449
      %v1451 = vpop.f32.mrf.mxu0
      %1452 = vdwg.mxu0
      %v1453 = vmul.f32 %v1445, 0.5
      %v1454 = vmul.f32 %v1447, 0.5
      %v1455 = vmul.f32 %v1450, 0.5
      %v1456 = vmul.f32 %v1445, 0.044715
      %v1457 = vmul.f32 %v1447, 0.044715
      %v1458 = vmul.f32 %v1450, 0.044715
      %v1459 = vmul.f32 %v1456, %v1445
      %v1460 = vmul.f32 %v1457, %v1447
      %v1461 = vmul.f32 %v1458, %v1450
      %v1462 = vmul.f32 %v1459, %v1445
      %v1463 = vmul.f32 %v1460, %v1447
      %v1464 = vmul.f32 %v1461, %v1450
      %v1465 = vadd.f32 %v1445, %v1462
      %v1466 = vadd.f32 %v1447, %v1463
      %v1467 = vadd.f32 %v1450, %v1464
      %v1468 = vmul.f32 %v1465, 0.7978846
      %v1469 = vmul.f32 %v1466, 0.7978846
      %v1470 = vmul.f32 %v1467, 0.7978846
      %v1471 = vtanh.pop %v1468
      %v1472 = vtanh.pop %v1469
      %v1473 = vtanh.pop %v1470
      %v1474 = vadd.f32 %v1471, 1.0
      %v1475 = vadd.f32 %v1472, 1.0
      %v1476 = vadd.f32 %v1473, 1.0
      %v1477 = vmul.f32 %v1453, %v1474
      %v1478 = vmul.f32 %v1454, %v1475
      %v1479 = vmul.f32 %v1455, %v1476
      %v1480 = vld [vmem:[%s835] sm:$0xf]
      %v1481 = vld [vmem:[%s835 + $0x4] sm:$0xf]
      %v1482 = vld [vmem:[%s835 + $0x8] sm:$0xf]
      %v1483 = vld [vmem:[%s835 + $0xc] sm:$0xf]
      %v1484 = vld [vmem:[%s835 + $0x10] sm:$0xf]
      %v1485 = vld [vmem:[%s835 + $0x14] sm:$0xf]
      %v1486 = vld [vmem:[%s835 + $0x18] sm:$0xf]
      %v1487 = vld [vmem:[%s835 + $0x1c] sm:$0xf]
      %v1488 = vld [vmem:[%s835 + $0x20] sm:$0xf]
      %v1489 = vld [vmem:[%s835 + $0x24] sm:$0xf]
      %v1490 = vld [vmem:[%s835 + $0x28] sm:$0xf]
      %v1491 = vld [vmem:[%s835 + $0x2c] sm:$0xf]
      %v1492 = vld [vmem:[%s835 + $0x30] sm:$0xf]
      %v1493 = vld [vmem:[%s835 + $0x34] sm:$0xf]
      %v1494 = vld [vmem:[%s835 + $0x38] sm:$0xf]
      %v1495 = vld [vmem:[%s835 + $0x3c] sm:$0xf]
      %v1496 = vpack.c.bf16 %v1478, %v1477
      %v1497 = vpack.c.bf16 %v1479, %v1479
      %v1498 = vld [vmem:[%s838] sm:$0x1]
      %v1500 = vperm.slane %v1498, 0
      %v1518 = vunpack.c.l.b16 %v1480
      %v1519 = vunpack.c.l.b16 %v1481
      %v1520 = vunpack.c.l.b16 %v1482
      %v1521 = vunpack.c.l.b16 %v1483
      %v1522 = vunpack.c.l.b16 %v1484
      %v1523 = vunpack.c.l.b16 %v1485
      %v1524 = vunpack.c.l.b16 %v1486
      %v1525 = vunpack.c.l.b16 %v1487
      %v1526 = vunpack.c.l.b16 %v1488
      %v1527 = vunpack.c.l.b16 %v1489
      %v1528 = vunpack.c.l.b16 %v1490
      %v1529 = vunpack.c.l.b16 %v1491
      %v1530 = vunpack.c.l.b16 %v1492
      %v1531 = vunpack.c.l.b16 %v1493
      %v1532 = vunpack.c.l.b16 %v1494
      %v1533 = vunpack.c.l.b16 %v1495
      %v1534 = vpack.c.b16 %v1519, %v1518
      %v1535 = vpack.c.b16 %v1521, %v1520
      %v1536 = vpack.c.b16 %v1523, %v1522
      %v1537 = vpack.c.b16 %v1525, %v1524
      %v1538 = vpack.c.b16 %v1527, %v1526
      %v1539 = vpack.c.b16 %v1529, %v1528
      %v1540 = vpack.c.b16 %v1531, %v1530
      %v1541 = vpack.c.b16 %v1533, %v1532
      %1550 = vmatpush.bf16.msra.mxu0 %v1541
      %1551 = vmatpush.bf16.msra.mxu0 %v1540
      %1552 = vmatpush.bf16.msra.mxu0 %v1539
      %1553 = vmatpush.bf16.msra.mxu0 %v1538
      %1554 = vmatpush.bf16.msra.mxu0 %v1537
      %1555 = vmatpush.bf16.msra.mxu0 %v1536
      %1556 = vmatpush.bf16.msra.mxu0 %v1535
      %1557 = vmatpush.bf16.msra.mxu0 %v1534
      %1558 = vmatmul.bf16.gmra.mxu0 %v1496
      %v1559 = vpop.f32.mrf.mxu0
      %v1560 = vadd.f32 %v1500, %v1559
      %v1561 = vpop.f32.mrf.mxu0
      %v1562 = vadd.f32 %v1500, %v1561
      %1563 = vmatmul.bf16.gmra.mxu0 %v1497
      %v1564 = vpop.f32.mrf.mxu0
      %v1565 = vadd.f32 %v1500, %v1564
      %v1566 = vpop.f32.mrf.mxu0
      %1567 = vdwg.mxu0
      %v1568 = vadd.f32 %v1404, %v1560
      %v1569 = vadd.f32 %v1405, %v1562
      %v1570 = vadd.f32 %v1406, %v1565
      %v1571 = vld [vmem:[%s841] sm:$0x1]
      %v1572 = vld [vmem:[%s844] sm:$0x1]
      %v1573 = vsel %vm903, %v1568, 0.0
      %1574 = vadd.xlane.f32.xlu0 %v1573
      %v1575 = vpop.xlane.xlu0 %1574
      %v1576 = vsel %vm903, %v1569, 0.0
      %1577 = vadd.xlane.f32.xlu0 %v1576
      %v1578 = vpop.xlane.xlu0 %1577
      %v1579 = vsel %vm903, %v1570, 0.0
      %1580 = vadd.xlane.f32.xlu0 %v1579
      %v1581 = vpop.xlane.xlu0 %1580
      %v1582 = vmul.f32 %v1575, %v1337
      %v1583 = vmul.f32 %v1578, %v1337
      %v1584 = vmul.f32 %v1581, %v1337
      %v1585 = vsub.f32 %v1568, %v1582
      %v1586 = vsub.f32 %v1569, %v1583
      %v1587 = vsub.f32 %v1570, %v1584
      %v1588 = vmul.f32 %v1585, %v1585
      %v1589 = vmul.f32 %v1586, %v1586
      %v1590 = vmul.f32 %v1587, %v1587
      %v1591 = vsel %vm903, %v1588, 0.0
      %1592 = vadd.xlane.f32.xlu0 %v1591
      %v1593 = vpop.xlane.xlu0 %1592
      %v1594 = vsel %vm903, %v1589, 0.0
      %1595 = vadd.xlane.f32.xlu0 %v1594
      %v1596 = vpop.xlane.xlu0 %1595
      %v1597 = vsel %vm903, %v1590, 0.0
      %1598 = vadd.xlane.f32.xlu0 %v1597
      %v1599 = vpop.xlane.xlu0 %1598
      %v1600 = vmul.f32 %v1593, %v1337
      %v1601 = vmul.f32 %v1596, %v1337
      %v1602 = vmul.f32 %v1599, %v1337
      %v1603 = vadd.f32 %v1600, 1e-05
      %v1604 = vadd.f32 %v1601, 1e-05
      %v1605 = vadd.f32 %v1602, 1e-05
      %v1606 = vrsqrt.pop %v1603
      %v1607 = vmul.f32 %v1606, %v1603
      %v1608 = vmul.f32 %v1607, %v1606
      %v1609 = vmul.f32 0.5, %v1608
      %v1610 = vsub.f32 1.5, %v1609
      %v1611 = vmul.f32 %v1606, %v1610
      %vm1612 = vweird.f32 %v1603
      %vm1613 = vweird.f32 %v1606
      %vm1614 = vmor %vm1612, %vm1613
      %v1615 = vsel %vm1614, %v1606, %v1611
      %v1616 = vrsqrt.pop %v1604
      %v1617 = vmul.f32 %v1616, %v1604
      %v1618 = vmul.f32 %v1617, %v1616
      %v1619 = vmul.f32 0.5, %v1618
      %v1620 = vsub.f32 1.5, %v1619
      %v1621 = vmul.f32 %v1616, %v1620
      %vm1622 = vweird.f32 %v1604
      %vm1623 = vweird.f32 %v1616
      %vm1624 = vmor %vm1622, %vm1623
      %v1625 = vsel %vm1624, %v1616, %v1621
      %v1626 = vrsqrt.pop %v1605
      %v1627 = vmul.f32 %v1626, %v1605
      %v1628 = vmul.f32 %v1627, %v1626
      %v1629 = vmul.f32 0.5, %v1628
      %v1630 = vsub.f32 1.5, %v1629
      %v1631 = vmul.f32 %v1626, %v1630
      %vm1632 = vweird.f32 %v1605
      %vm1633 = vweird.f32 %v1626
      %vm1634 = vmor %vm1632, %vm1633
      %v1635 = vsel %vm1634, %v1626, %v1631
      %v1636 = vmul.f32 %v1585, %v1615
      %v1637 = vmul.f32 %v1586, %v1625
      %v1638 = vmul.f32 %v1587, %v1635
      %v1640 = vperm.slane %v1571, 0
      %v1642 = vmul.f32 %v1636, %v1640
      %v1643 = vmul.f32 %v1637, %v1640
      %v1644 = vmul.f32 %v1638, %v1640
      %v1646 = vperm.slane %v1572, 0
      %v1648 = vadd.f32 %v1642, %v1646
      %v1649 = vadd.f32 %v1643, %v1646
      %v1650 = vadd.f32 %v1644, %v1646
      %1651 = vst.msk [vmem:[%s849] sm:$0xff] %vm903, %v1648
      %1652 = vst.msk [vmem:[%s849 + $0x8] sm:$0xff] %vm903, %v1649
      %1653 = vst.msk [vmem:[%s849 + $0x10] sm:$0xff] %vm903, %v1650
      %s1654 = smul.u32 3, %s33
      %p1655 = scmp.lt.s32.totalorder %s1654, 5
      %s1656 = scalar_select %p1655, %s1654, 5
      %s1657 = smul.addr %s1656, 8
      %s1658 = scalar_lea.vmem %s18, %s1657
      // Predicated region
      $region97: #{decision_transformer_forward.4} parent=91 // pred_check
        %p1659 = pneg %p522
      $region98: #{decision_transformer_forward.4} parent=91 // pred_check_branch
        %1661 = sbr.rel (%p1659) target = $region100
      $region99: #{decision_transformer_forward.4} parent=91 // pred_region
        %s1662 = smul.u32 3, %s33
      $region100: #{decision_transformer_forward.4} parent=91 // pred_fallthru
        _
    $region92: #{decision_transformer_forward.4} parent=5 // pred_fallthru
      _
    %p1663 = scmp.le.s32.totalorder 2, %s24
    // Predicated region
    $region101: #{decision_transformer_forward.4} parent=5 // pred_check
      %p1664 = pneg %p1663
    $region102: #{decision_transformer_forward.4} parent=5 // pred_check_branch
      %1666 = sbr.rel (%p1664) target = $region104
    $region103: #{decision_transformer_forward.4} parent=5 // pred_region
      %s1667 = ssub.s32 %s24, 2
      // Predicated region
      $region105: #{decision_transformer_forward.4} parent=103 // pred_check
        %p1668 = pneg %p528
      $region106: #{decision_transformer_forward.4} parent=103 // pred_check_branch
        %1670 = sbr.rel (%p1668) target = $region108
      $region107: #{decision_transformer_forward.4} parent=103 // pred_region
        %s1671 = smul.u32 3, %s35
        %p1672 = scmp.lt.s32.totalorder %s1671, 5
        %s1673 = scalar_select %p1672, %s1671, 5
        %s1674 = smul.addr %s1673, 8
        %s1675 = scalar_lea.vmem %s18, %s1674
      $region108: #{decision_transformer_forward.4} parent=103 // pred_fallthru
        _
    $region104: #{decision_transformer_forward.4} parent=5 // pred_fallthru
      _
  $region6: #{decision_transformer_forward.4} parent=0 // loop_footer
    %s28 = sadd.s32 1, %s24
  $region7: #{decision_transformer_forward.4} parent=0 // loop_footer_branch
    %23 = sbr.rel target = $region3
  $region8: #{decision_transformer_forward.4} parent=0 // loop_exit
    _

</llo_original>
